<compile_context>
chip_gen: v7x
topology: tpu7x:2x2x1
jax: 0.10.0
libtpu: 0.0.40
codegen_flags: <defaults>
</compile_context>

<pallas_src>
import functools

import jax
import jax.numpy as jnp
import numpy as np
from jax import lax
from jax.experimental import pallas as pl
from jax.experimental.pallas import tpu as pltpu

KERNEL_SIZES = (1, 7, 21, 35)   # conv1, conv3, conv5, conv7 of the PyTorch module
PADDINGS = (0, 3, 10, 17)
MAX_PAD = max(PADDINGS)         # 17
KMAX = max(KERNEL_SIZES)        # 35


def _round_up(x, m):
    return ((x + m - 1) // m) * m


def _inception_kernel(*refs, cin, c4, lh, pool, kmax, kpad, bb):
    """refs = (phase_0, ..., phase_{pool-1}, w2d, bias, out, x_scr).

    phase_r: (BB, Cin, Lph)    r-th polyphase stream of the zero-padded input (NCL)
    w2d:     (4*Cout, KPAD)    merged, zero-padded weights of all 4 branches
    bias:    (4*Cout, 1)       per-output-channel bias (branch-major order)
    out:     (BB, 4*Cout, Lh)  pooled + ReLU'd NCL output for this batch block
    x_scr:   (KPAD, BB*Lh)     im2col scratch (VMEM)
    """
    ph_refs = refs[:pool]
    w_ref, b_ref, o_ref, x_scr = refs[pool], refs[pool + 1], refs[pool + 2], refs[pool + 3]

    w = w_ref[...]                                   # (4*Cout, KPAD), compute dtype
    used = kmax * cin
    if kpad > used:                                  # keep K-pad rows zero (never written below)
        x_scr[used:, :] = jnp.zeros((kpad - used, bb * lh), x_scr.dtype)

    pooled = None
    for r in range(pool):                            # one big MXU matmul per pooling phase
        # im2col: row t*Cin + c, column b*Lh + i  <-  x_pad[b, c, pool*i + r + t]
        for t in range(kmax):                        # static unroll; shifted copies done ONCE
            ph = (r + t) % pool                      # which polyphase stream this tap reads
            d = (r + t) // pool                      # shift within that stream
            for b in range(bb):
                x_scr[t * cin:(t + 1) * cin, b * lh:(b + 1) * lh] = ph_refs[ph][b, :, d:d + lh]
        acc = jnp.dot(w, x_scr[...], preferred_element_type=jnp.float32)   # (4*Cout, BB*Lh)
        pooled = acc if pooled is None else jnp.maximum(pooled, acc)

    # MaxPool1d(pool) == elementwise max over phases; bias is per-channel so it commutes.
    pooled = jnp.maximum(pooled + b_ref[...], 0.0)   # + ReLU
    for b in range(bb):                              # lane-aligned (b*Lh multiple of 128) splits
        o_ref[b] = pooled[:, b * lh:(b + 1) * lh].astype(o_ref.dtype)


def prepare_params(params, compute_dtype=jnp.bfloat16):
    """Merge the 4 branch weights into one dense, K-padded 2D matrix.  Call ONCE (hoisted)."""
    Cout, Cin, _ = params["w35"].shape
    C4 = 4 * Cout
    kpad = _round_up(KMAX * Cin, 128)
    rows = []
    for ksz, pad_br in zip(KERNEL_SIZES, PADDINGS):
        w = jnp.transpose(params[f"w{ksz}"], (0, 2, 1))            # (Cout, ksz, Cin)
        lo = MAX_PAD - pad_br                                      # branch tap offset in merged K
        w = jnp.pad(w, ((0, 0), (lo, KMAX - ksz - lo), (0, 0)))    # (Cout, KMAX, Cin)
        rows.append(w.reshape(Cout, KMAX * Cin))
    w2d = jnp.concatenate(rows, axis=0)                            # (4*Cout, KMAX*Cin)
    w2d = jnp.pad(w2d, ((0, 0), (0, kpad - KMAX * Cin))).astype(compute_dtype)
    b2d = params["b"].reshape(C4, 1).astype(jnp.float32)
    return {"w2d": w2d, "b2d": b2d}


@functools.partial(jax.jit, static_argnames=("pool", "block_b", "compute_dtype"))
def inception_forward(x_ncl, w2d, b2d, *, pool=2, block_b=2, compute_dtype=jnp.bfloat16):
    """x_ncl: (B, Cin, L) -> (B, 4*Cout, L // pool) in NCL (pooled + ReLU'd)."""
    B, Cin, L = x_ncl.shape
    C4, kpad = w2d.shape
    assert kpad >= KMAX * Cin, "params were prepared for a different Cin"
    # TODO(synk): support L % pool != 0 (PyTorch MaxPool1d drops the conv tail).
    assert L % pool == 0, "kernel assumes L divisible by the pooling factor"
    Lh = L // pool                       # ideally a multiple of 128 -> lane-dense stores
    bb = block_b if (B % block_b == 0) else 1   # keep grid extent clean (even for v7x 2 TCs)

    # Pad once with the largest branch padding, then split into `pool` polyphase streams.
    # Extra right padding only equalizes stream lengths; those elements are never read.
    maxd = (2 * MAX_PAD + pool - 1) // pool
    Lph = Lh + maxd
    extra = pool * Lph - (L + 2 * MAX_PAD)
    x_pad = jnp.pad(x_ncl, ((0, 0), (0, 0), (MAX_PAD, MAX_PAD + extra))).astype(compute_dtype)
    phases = [x_pad[:, :, p::pool] for p in range(pool)]   # fused under jit with pad + cast

    kernel = functools.partial(_inception_kernel, cin=Cin, c4=C4, lh=Lh,
                               pool=pool, kmax=KMAX, kpad=kpad, bb=bb)
    return pl.pallas_call(
        kernel,
        out_shape=jax.ShapeDtypeStruct((B, C4, Lh), x_ncl.dtype),
        grid_spec=pltpu.PrefetchScalarGridSpec(
            num_scalar_prefetch=0,
            grid=(B // bb,),
            in_specs=[
                *[pl.BlockSpec((bb, Cin, Lph), lambda g: (g, 0, 0)) for _ in range(pool)],
                pl.BlockSpec((C4, kpad), lambda g: (0, 0)),
                pl.BlockSpec((C4, 1), lambda g: (0, 0)),
            ],
            out_specs=pl.BlockSpec((bb, C4, Lh), lambda g: (g, 0, 0)),
            scratch_shapes=[pltpu.VMEM((kpad, bb * Lh), compute_dtype)],
        ),
        compiler_params=pltpu.CompilerParams(
            dimension_semantics=("parallel",),
            vmem_limit_bytes=32 * 1024 * 1024),
    )(*phases, w2d, b2d)


def reference_forward(x_ncl, params, pool=2):
    """Pure-JAX reference matching the PyTorch module (f32, HIGHEST precision)."""
    outs = []
    for bi, (ksz, pad) in enumerate(zip(KERNEL_SIZES, PADDINGS)):
        w = params[f"w{ksz}"]
        y = lax.conv_general_dilated(
            x_ncl, w, window_strides=(1,), padding=[(pad, pad)],
            dimension_numbers=("NCH", "OIH", "NCH"),
            precision=lax.Precision.HIGHEST)
        outs.append(y + params["b"][bi][None, :, None])
    full = jnp.concatenate(outs, axis=1)             # (B, 4*Cout, L)
    B, C4, L = full.shape
    Lh = L // pool
    pooled = jnp.max(full[:, :, :Lh * pool].reshape(B, C4, Lh, pool), axis=-1)
    return jnp.maximum(pooled, 0.0)


def init_params(key, in_ch, out_ch):
    """Deterministic PyTorch-style (uniform +/- 1/sqrt(fan_in)) init."""
    params = {}
    biases = []
    for ksz in KERNEL_SIZES:
        key, kw, kb = jax.random.split(key, 3)
        bound = 1.0 / np.sqrt(in_ch * ksz)
        params[f"w{ksz}"] = jax.random.uniform(
            kw, (out_ch, in_ch, ksz), jnp.float32, -bound, bound)
        biases.append(jax.random.uniform(kb, (out_ch,), jnp.float32, -bound, bound))
    params["b"] = jnp.stack(biases)  # (4, Cout), one row per branch (conv1, conv3, conv5, conv7)
    return params


if __name__ == "__main__":
    # Small shapes; B=8 / BB=2 -> grid of 4 (even, both v7x TCs fed), L=256 -> Lh=128 lane-dense.
    B, Cin, Cout, L = 8, 4, 8, 256
    key = jax.random.PRNGKey(0)
    key, kx = jax.random.split(key)
    x = jax.random.normal(kx, (B, Cin, L), jnp.float32)
    params = init_params(key, Cin, Cout)

    ref = reference_forward(x, params)

    # f32 matmul path: tight check against the XLA reference.
    prep_f32 = prepare_params(params, compute_dtype=jnp.float32)
    out_f32 = jax.block_until_ready(
        inception_forward(x, prep_f32["w2d"], prep_f32["b2d"], compute_dtype=jnp.float32))
    assert out_f32.shape == (B, 4 * Cout, L // 2), out_f32.shape
    np.testing.assert_allclose(np.asarray(out_f32), np.asarray(ref), atol=2e-3, rtol=2e-3)

    # Default bf16 matmul path (f32 accumulation): looser tolerance for bf16 inputs/weights.
    prep_bf16 = prepare_params(params)
    out_bf16 = jax.block_until_ready(
        inception_forward(x, prep_bf16["w2d"], prep_bf16["b2d"]))
    assert out_bf16.shape == (B, 4 * Cout, L // 2), out_bf16.shape
    np.testing.assert_allclose(np.asarray(out_bf16), np.asarray(ref), atol=3e-2, rtol=3e-2)

    print("KERNEL_OK")
</pallas_src>

<mosaic_0001>
module attributes {stable_mosaic.version = 11 : i64} {
  func.func @_inception_kernel(%arg0: i32, %arg1: memref<2x4x145xf32, #tpu.memory_space<vmem>>, %arg2: memref<2x4x145xf32, #tpu.memory_space<vmem>>, %arg3: memref<32x256xf32, #tpu.memory_space<vmem>>, %arg4: memref<32x1xf32, #tpu.memory_space<vmem>>, %arg5: memref<2x32x128xf32, #tpu.memory_space<vmem>>, %arg6: memref<256x256xf32, #tpu.memory_space<vmem>>) attributes {dimension_semantics = [#tpu.dimension_semantics<parallel>], iteration_bounds = array<i64: 4>, scalar_prefetch = 0 : i64, scratch_operands = 1 : i64, tpu.core_type = #tpu.core_type<tc>, window_params = [{transform_indices = @transform_0, window_bounds = array<i64: 2, 4, 145>}, {transform_indices = @transform_1, window_bounds = array<i64: 2, 4, 145>}, {pipeline_mode = #tpu.pipeline_mode<synchronous>, transform_indices = @transform_2, window_bounds = array<i64: 32, 256>}, {pipeline_mode = #tpu.pipeline_mode<synchronous>, transform_indices = @transform_3, window_bounds = array<i64: 32, 1>}, {transform_indices = @transform_4, window_bounds = array<i64: 2, 32, 128>}]} {
    %c0 = arith.constant 0 : index
    %c0_0 = arith.constant 0 : index
    %0 = vector.load %arg3[%c0, %c0_0] : memref<32x256xf32, #tpu.memory_space<vmem>>, vector<32x256xf32>
    %cst = arith.constant 0.000000e+00 : f32
    %1 = vector.broadcast %cst : f32 to vector<116x256xf32>
    %c140 = arith.constant 140 : index
    %c0_1 = arith.constant 0 : index
    %2 = vector.load %arg6[%c140, %c0_1] : memref<256x256xf32, #tpu.memory_space<vmem>>, vector<116x256xf32>
    tpu.vector_store %arg6[%c140, %c0_1], %1 {strides = array<i32>} : memref<256x256xf32, #tpu.memory_space<vmem>>, vector<116x256xf32>,
    %c0_2 = arith.constant 0 : index
    %c0_3 = arith.constant 0 : index
    %c0_4 = arith.constant 0 : index
    %3 = vector.load %arg1[%c0_2, %c0_3, %c0_4] : memref<2x4x145xf32, #tpu.memory_space<vmem>>, vector<1x4x128xf32>
    %4 = vector.shape_cast %3 : vector<1x4x128xf32> to vector<4x128xf32>
    %c0_5 = arith.constant 0 : index
    %c0_6 = arith.constant 0 : index
    %5 = vector.load %arg6[%c0_5, %c0_6] : memref<256x256xf32, #tpu.memory_space<vmem>>, vector<4x128xf32>
    tpu.vector_store %arg6[%c0_5, %c0_6], %4 {strides = array<i32>} : memref<256x256xf32, #tpu.memory_space<vmem>>, vector<4x128xf32>,
    %c1 = arith.constant 1 : index
    %c0_7 = arith.constant 0 : index
    %c0_8 = arith.constant 0 : index
    %6 = vector.load %arg1[%c1, %c0_7, %c0_8] : memref<2x4x145xf32, #tpu.memory_space<vmem>>, vector<1x4x128xf32>
    %7 = vector.shape_cast %6 : vector<1x4x128xf32> to vector<4x128xf32>
    %c0_9 = arith.constant 0 : index
    %c128 = arith.constant 128 : index
    %8 = vector.load %arg6[%c0_9, %c128] : memref<256x256xf32, #tpu.memory_space<vmem>>, vector<4x128xf32>
    tpu.vector_store %arg6[%c0_9, %c128], %7 {strides = array<i32>} : memref<256x256xf32, #tpu.memory_space<vmem>>, vector<4x128xf32>,
    %c0_10 = arith.constant 0 : index
    %c0_11 = arith.constant 0 : index
    %c0_12 = arith.constant 0 : index
    %9 = vector.load %arg2[%c0_10, %c0_11, %c0_12] : memref<2x4x145xf32, #tpu.memory_space<vmem>>, vector<1x4x128xf32>
    %10 = vector.shape_cast %9 : vector<1x4x128xf32> to vector<4x128xf32>
    %c4 = arith.constant 4 : index
    %c0_13 = arith.constant 0 : index
    %11 = vector.load %arg6[%c4, %c0_13] : memref<256x256xf32, #tpu.memory_space<vmem>>, vector<4x128xf32>
    tpu.vector_store %arg6[%c4, %c0_13], %10 {strides = array<i32>} : memref<256x256xf32, #tpu.memory_space<vmem>>, vector<4x128xf32>,
    %c1_14 = arith.constant 1 : index
    %c0_15 = arith.constant 0 : index
    %c0_16 = arith.constant 0 : index
    %12 = vector.load %arg2[%c1_14, %c0_15, %c0_16] : memref<2x4x145xf32, #tpu.memory_space<vmem>>, vector<1x4x128xf32>
    %13 = vector.shape_cast %12 : vector<1x4x128xf32> to vector<4x128xf32>
    %c4_17 = arith.constant 4 : index
    %c128_18 = arith.constant 128 : index
    %14 = vector.load %arg6[%c4_17, %c128_18] : memref<256x256xf32, #tpu.memory_space<vmem>>, vector<4x128xf32>
    tpu.vector_store %arg6[%c4_17, %c128_18], %13 {strides = array<i32>} : memref<256x256xf32, #tpu.memory_space<vmem>>, vector<4x128xf32>,
    %c0_19 = arith.constant 0 : index
    %c0_20 = arith.constant 0 : index
    %c1_21 = arith.constant 1 : index
    %15 = vector.load %arg1[%c0_19, %c0_20, %c1_21] : memref<2x4x145xf32, #tpu.memory_space<vmem>>, vector<1x4x128xf32>
    %16 = vector.shape_cast %15 : vector<1x4x128xf32> to vector<4x128xf32>
    %c8 = arith.constant 8 : index
    %c0_22 = arith.constant 0 : index
    %17 = vector.load %arg6[%c8, %c0_22] : memref<256x256xf32, #tpu.memory_space<vmem>>, vector<4x128xf32>
    tpu.vector_store %arg6[%c8, %c0_22], %16 {strides = array<i32>} : memref<256x256xf32, #tpu.memory_space<vmem>>, vector<4x128xf32>,
    %c1_23 = arith.constant 1 : index
    %c0_24 = arith.constant 0 : index
    %c1_25 = arith.constant 1 : index
    %18 = vector.load %arg1[%c1_23, %c0_24, %c1_25] : memref<2x4x145xf32, #tpu.memory_space<vmem>>, vector<1x4x128xf32>
    %19 = vector.shape_cast %18 : vector<1x4x128xf32> to vector<4x128xf32>
    %c8_26 = arith.constant 8 : index
    %c128_27 = arith.constant 128 : index
    %20 = vector.load %arg6[%c8_26, %c128_27] : memref<256x256xf32, #tpu.memory_space<vmem>>, vector<4x128xf32>
    tpu.vector_store %arg6[%c8_26, %c128_27], %19 {strides = array<i32>} : memref<256x256xf32, #tpu.memory_space<vmem>>, vector<4x128xf32>,
    %c0_28 = arith.constant 0 : index
    %c0_29 = arith.constant 0 : index
    %c1_30 = arith.constant 1 : index
    %21 = vector.load %arg2[%c0_28, %c0_29, %c1_30] : memref<2x4x145xf32, #tpu.memory_space<vmem>>, vector<1x4x128xf32>
    %22 = vector.shape_cast %21 : vector<1x4x128xf32> to vector<4x128xf32>
    %c12 = arith.constant 12 : index
    %c0_31 = arith.constant 0 : index
    %23 = vector.load %arg6[%c12, %c0_31] : memref<256x256xf32, #tpu.memory_space<vmem>>, vector<4x128xf32>
    tpu.vector_store %arg6[%c12, %c0_31], %22 {strides = array<i32>} : memref<256x256xf32, #tpu.memory_space<vmem>>, vector<4x128xf32>,
    %c1_32 = arith.constant 1 : index
    %c0_33 = arith.constant 0 : index
    %c1_34 = arith.constant 1 : index
    %24 = vector.load %arg2[%c1_32, %c0_33, %c1_34] : memref<2x4x145xf32, #tpu.memory_space<vmem>>, vector<1x4x128xf32>
    %25 = vector.shape_cast %24 : vector<1x4x128xf32> to vector<4x128xf32>
    %c12_35 = arith.constant 12 : index
    %c128_36 = arith.constant 128 : index
    %26 = vector.load %arg6[%c12_35, %c128_36] : memref<256x256xf32, #tpu.memory_space<vmem>>, vector<4x128xf32>
    tpu.vector_store %arg6[%c12_35, %c128_36], %25 {strides = array<i32>} : memref<256x256xf32, #tpu.memory_space<vmem>>, vector<4x128xf32>,
    %c0_37 = arith.constant 0 : index
    %c0_38 = arith.constant 0 : index
    %c2 = arith.constant 2 : index
    %27 = vector.load %arg1[%c0_37, %c0_38, %c2] : memref<2x4x145xf32, #tpu.memory_space<vmem>>, vector<1x4x128xf32>
    %28 = vector.shape_cast %27 : vector<1x4x128xf32> to vector<4x128xf32>
    %c16 = arith.constant 16 : index
    %c0_39 = arith.constant 0 : index
    %29 = vector.load %arg6[%c16, %c0_39] : memref<256x256xf32, #tpu.memory_space<vmem>>, vector<4x128xf32>
    tpu.vector_store %arg6[%c16, %c0_39], %28 {strides = array<i32>} : memref<256x256xf32, #tpu.memory_space<vmem>>, vector<4x128xf32>,
    %c1_40 = arith.constant 1 : index
    %c0_41 = arith.constant 0 : index
    %c2_42 = arith.constant 2 : index
    %30 = vector.load %arg1[%c1_40, %c0_41, %c2_42] : memref<2x4x145xf32, #tpu.memory_space<vmem>>, vector<1x4x128xf32>
    %31 = vector.shape_cast %30 : vector<1x4x128xf32> to vector<4x128xf32>
    %c16_43 = arith.constant 16 : index
    %c128_44 = arith.constant 128 : index
    %32 = vector.load %arg6[%c16_43, %c128_44] : memref<256x256xf32, #tpu.memory_space<vmem>>, vector<4x128xf32>
    tpu.vector_store %arg6[%c16_43, %c128_44], %31 {strides = array<i32>} : memref<256x256xf32, #tpu.memory_space<vmem>>, vector<4x128xf32>,
    %c0_45 = arith.constant 0 : index
    %c0_46 = arith.constant 0 : index
    %c2_47 = arith.constant 2 : index
    %33 = vector.load %arg2[%c0_45, %c0_46, %c2_47] : memref<2x4x145xf32, #tpu.memory_space<vmem>>, vector<1x4x128xf32>
    %34 = vector.shape_cast %33 : vector<1x4x128xf32> to vector<4x128xf32>
    %c20 = arith.constant 20 : index
    %c0_48 = arith.constant 0 : index
    %35 = vector.load %arg6[%c20, %c0_48] : memref<256x256xf32, #tpu.memory_space<vmem>>, vector<4x128xf32>
    tpu.vector_store %arg6[%c20, %c0_48], %34 {strides = array<i32>} : memref<256x256xf32, #tpu.memory_space<vmem>>, vector<4x128xf32>,
    %c1_49 = arith.constant 1 : index
    %c0_50 = arith.constant 0 : index
    %c2_51 = arith.constant 2 : index
    %36 = vector.load %arg2[%c1_49, %c0_50, %c2_51] : memref<2x4x145xf32, #tpu.memory_space<vmem>>, vector<1x4x128xf32>
    %37 = vector.shape_cast %36 : vector<1x4x128xf32> to vector<4x128xf32>
    %c20_52 = arith.constant 20 : index
    %c128_53 = arith.constant 128 : index
    %38 = vector.load %arg6[%c20_52, %c128_53] : memref<256x256xf32, #tpu.memory_space<vmem>>, vector<4x128xf32>
    tpu.vector_store %arg6[%c20_52, %c128_53], %37 {strides = array<i32>} : memref<256x256xf32, #tpu.memory_space<vmem>>, vector<4x128xf32>,
    %c0_54 = arith.constant 0 : index
    %c0_55 = arith.constant 0 : index
    %c3 = arith.constant 3 : index
    %39 = vector.load %arg1[%c0_54, %c0_55, %c3] : memref<2x4x145xf32, #tpu.memory_space<vmem>>, vector<1x4x128xf32>
    %40 = vector.shape_cast %39 : vector<1x4x128xf32> to vector<4x128xf32>
    %c24 = arith.constant 24 : index
    %c0_56 = arith.constant 0 : index
    %41 = vector.load %arg6[%c24, %c0_56] : memref<256x256xf32, #tpu.memory_space<vmem>>, vector<4x128xf32>
    tpu.vector_store %arg6[%c24, %c0_56], %40 {strides = array<i32>} : memref<256x256xf32, #tpu.memory_space<vmem>>, vector<4x128xf32>,
    %c1_57 = arith.constant 1 : index
    %c0_58 = arith.constant 0 : index
    %c3_59 = arith.constant 3 : index
    %42 = vector.load %arg1[%c1_57, %c0_58, %c3_59] : memref<2x4x145xf32, #tpu.memory_space<vmem>>, vector<1x4x128xf32>
    %43 = vector.shape_cast %42 : vector<1x4x128xf32> to vector<4x128xf32>
    %c24_60 = arith.constant 24 : index
    %c128_61 = arith.constant 128 : index
    %44 = vector.load %arg6[%c24_60, %c128_61] : memref<256x256xf32, #tpu.memory_space<vmem>>, vector<4x128xf32>
    tpu.vector_store %arg6[%c24_60, %c128_61], %43 {strides = array<i32>} : memref<256x256xf32, #tpu.memory_space<vmem>>, vector<4x128xf32>,
    %c0_62 = arith.constant 0 : index
    %c0_63 = arith.constant 0 : index
    %c3_64 = arith.constant 3 : index
    %45 = vector.load %arg2[%c0_62, %c0_63, %c3_64] : memref<2x4x145xf32, #tpu.memory_space<vmem>>, vector<1x4x128xf32>
    %46 = vector.shape_cast %45 : vector<1x4x128xf32> to vector<4x128xf32>
    %c28 = arith.constant 28 : index
    %c0_65 = arith.constant 0 : index
    %47 = vector.load %arg6[%c28, %c0_65] : memref<256x256xf32, #tpu.memory_space<vmem>>, vector<4x128xf32>
    tpu.vector_store %arg6[%c28, %c0_65], %46 {strides = array<i32>} : memref<256x256xf32, #tpu.memory_space<vmem>>, vector<4x128xf32>,
    %c1_66 = arith.constant 1 : index
    %c0_67 = arith.constant 0 : index
    %c3_68 = arith.constant 3 : index
    %48 = vector.load %arg2[%c1_66, %c0_67, %c3_68] : memref<2x4x145xf32, #tpu.memory_space<vmem>>, vector<1x4x128xf32>
    %49 = vector.shape_cast %48 : vector<1x4x128xf32> to vector<4x128xf32>
    %c28_69 = arith.constant 28 : index
    %c128_70 = arith.constant 128 : index
    %50 = vector.load %arg6[%c28_69, %c128_70] : memref<256x256xf32, #tpu.memory_space<vmem>>, vector<4x128xf32>
    tpu.vector_store %arg6[%c28_69, %c128_70], %49 {strides = array<i32>} : memref<256x256xf32, #tpu.memory_space<vmem>>, vector<4x128xf32>,
    %c0_71 = arith.constant 0 : index
    %c0_72 = arith.constant 0 : index
    %c4_73 = arith.constant 4 : index
    %51 = vector.load %arg1[%c0_71, %c0_72, %c4_73] : memref<2x4x145xf32, #tpu.memory_space<vmem>>, vector<1x4x128xf32>
    %52 = vector.shape_cast %51 : vector<1x4x128xf32> to vector<4x128xf32>
    %c32 = arith.constant 32 : index
    %c0_74 = arith.constant 0 : index
    %53 = vector.load %arg6[%c32, %c0_74] : memref<256x256xf32, #tpu.memory_space<vmem>>, vector<4x128xf32>
    tpu.vector_store %arg6[%c32, %c0_74], %52 {strides = array<i32>} : memref<256x256xf32, #tpu.memory_space<vmem>>, vector<4x128xf32>,
    %c1_75 = arith.constant 1 : index
    %c0_76 = arith.constant 0 : index
    %c4_77 = arith.constant 4 : index
    %54 = vector.load %arg1[%c1_75, %c0_76, %c4_77] : memref<2x4x145xf32, #tpu.memory_space<vmem>>, vector<1x4x128xf32>
    %55 = vector.shape_cast %54 : vector<1x4x128xf32> to vector<4x128xf32>
    %c32_78 = arith.constant 32 : index
    %c128_79 = arith.constant 128 : index
    %56 = vector.load %arg6[%c32_78, %c128_79] : memref<256x256xf32, #tpu.memory_space<vmem>>, vector<4x128xf32>
    tpu.vector_store %arg6[%c32_78, %c128_79], %55 {strides = array<i32>} : memref<256x256xf32, #tpu.memory_space<vmem>>, vector<4x128xf32>,
    %c0_80 = arith.constant 0 : index
    %c0_81 = arith.constant 0 : index
    %c4_82 = arith.constant 4 : index
    %57 = vector.load %arg2[%c0_80, %c0_81, %c4_82] : memref<2x4x145xf32, #tpu.memory_space<vmem>>, vector<1x4x128xf32>
    %58 = vector.shape_cast %57 : vector<1x4x128xf32> to vector<4x128xf32>
    %c36 = arith.constant 36 : index
    %c0_83 = arith.constant 0 : index
    %59 = vector.load %arg6[%c36, %c0_83] : memref<256x256xf32, #tpu.memory_space<vmem>>, vector<4x128xf32>
    tpu.vector_store %arg6[%c36, %c0_83], %58 {strides = array<i32>} : memref<256x256xf32, #tpu.memory_space<vmem>>, vector<4x128xf32>,
    %c1_84 = arith.constant 1 : index
    %c0_85 = arith.constant 0 : index
    %c4_86 = arith.constant 4 : index
    %60 = vector.load %arg2[%c1_84, %c0_85, %c4_86] : memref<2x4x145xf32, #tpu.memory_space<vmem>>, vector<1x4x128xf32>
    %61 = vector.shape_cast %60 : vector<1x4x128xf32> to vector<4x128xf32>
    %c36_87 = arith.constant 36 : index
    %c128_88 = arith.constant 128 : index
    %62 = vector.load %arg6[%c36_87, %c128_88] : memref<256x256xf32, #tpu.memory_space<vmem>>, vector<4x128xf32>
    tpu.vector_store %arg6[%c36_87, %c128_88], %61 {strides = array<i32>} : memref<256x256xf32, #tpu.memory_space<vmem>>, vector<4x128xf32>,
    %c0_89 = arith.constant 0 : index
    %c0_90 = arith.constant 0 : index
    %c5 = arith.constant 5 : index
    %63 = vector.load %arg1[%c0_89, %c0_90, %c5] : memref<2x4x145xf32, #tpu.memory_space<vmem>>, vector<1x4x128xf32>
    %64 = vector.shape_cast %63 : vector<1x4x128xf32> to vector<4x128xf32>
    %c40 = arith.constant 40 : index
    %c0_91 = arith.constant 0 : index
    %65 = vector.load %arg6[%c40, %c0_91] : memref<256x256xf32, #tpu.memory_space<vmem>>, vector<4x128xf32>
    tpu.vector_store %arg6[%c40, %c0_91], %64 {strides = array<i32>} : memref<256x256xf32, #tpu.memory_space<vmem>>, vector<4x128xf32>,
    %c1_92 = arith.constant 1 : index
    %c0_93 = arith.constant 0 : index
    %c5_94 = arith.constant 5 : index
    %66 = vector.load %arg1[%c1_92, %c0_93, %c5_94] : memref<2x4x145xf32, #tpu.memory_space<vmem>>, vector<1x4x128xf32>
    %67 = vector.shape_cast %66 : vector<1x4x128xf32> to vector<4x128xf32>
    %c40_95 = arith.constant 40 : index
    %c128_96 = arith.constant 128 : index
    %68 = vector.load %arg6[%c40_95, %c128_96] : memref<256x256xf32, #tpu.memory_space<vmem>>, vector<4x128xf32>
    tpu.vector_store %arg6[%c40_95, %c128_96], %67 {strides = array<i32>} : memref<256x256xf32, #tpu.memory_space<vmem>>, vector<4x128xf32>,
    %c0_97 = arith.constant 0 : index
    %c0_98 = arith.constant 0 : index
    %c5_99 = arith.constant 5 : index
    %69 = vector.load %arg2[%c0_97, %c0_98, %c5_99] : memref<2x4x145xf32, #tpu.memory_space<vmem>>, vector<1x4x128xf32>
    %70 = vector.shape_cast %69 : vector<1x4x128xf32> to vector<4x128xf32>
    %c44 = arith.constant 44 : index
    %c0_100 = arith.constant 0 : index
    %71 = vector.load %arg6[%c44, %c0_100] : memref<256x256xf32, #tpu.memory_space<vmem>>, vector<4x128xf32>
    tpu.vector_store %arg6[%c44, %c0_100], %70 {strides = array<i32>} : memref<256x256xf32, #tpu.memory_space<vmem>>, vector<4x128xf32>,
    %c1_101 = arith.constant 1 : index
    %c0_102 = arith.constant 0 : index
    %c5_103 = arith.constant 5 : index
    %72 = vector.load %arg2[%c1_101, %c0_102, %c5_103] : memref<2x4x145xf32, #tpu.memory_space<vmem>>, vector<1x4x128xf32>
    %73 = vector.shape_cast %72 : vector<1x4x128xf32> to vector<4x128xf32>
    %c44_104 = arith.constant 44 : index
    %c128_105 = arith.constant 128 : index
    %74 = vector.load %arg6[%c44_104, %c128_105] : memref<256x256xf32, #tpu.memory_space<vmem>>, vector<4x128xf32>
    tpu.vector_store %arg6[%c44_104, %c128_105], %73 {strides = array<i32>} : memref<256x256xf32, #tpu.memory_space<vmem>>, vector<4x128xf32>,
    %c0_106 = arith.constant 0 : index
    %c0_107 = arith.constant 0 : index
    %c6 = arith.constant 6 : index
    %75 = vector.load %arg1[%c0_106, %c0_107, %c6] : memref<2x4x145xf32, #tpu.memory_space<vmem>>, vector<1x4x128xf32>
    %76 = vector.shape_cast %75 : vector<1x4x128xf32> to vector<4x128xf32>
    %c48 = arith.constant 48 : index
    %c0_108 = arith.constant 0 : index
    %77 = vector.load %arg6[%c48, %c0_108] : memref<256x256xf32, #tpu.memory_space<vmem>>, vector<4x128xf32>
    tpu.vector_store %arg6[%c48, %c0_108], %76 {strides = array<i32>} : memref<256x256xf32, #tpu.memory_space<vmem>>, vector<4x128xf32>,
    %c1_109 = arith.constant 1 : index
    %c0_110 = arith.constant 0 : index
    %c6_111 = arith.constant 6 : index
    %78 = vector.load %arg1[%c1_109, %c0_110, %c6_111] : memref<2x4x145xf32, #tpu.memory_space<vmem>>, vector<1x4x128xf32>
    %79 = vector.shape_cast %78 : vector<1x4x128xf32> to vector<4x128xf32>
    %c48_112 = arith.constant 48 : index
    %c128_113 = arith.constant 128 : index
    %80 = vector.load %arg6[%c48_112, %c128_113] : memref<256x256xf32, #tpu.memory_space<vmem>>, vector<4x128xf32>
    tpu.vector_store %arg6[%c48_112, %c128_113], %79 {strides = array<i32>} : memref<256x256xf32, #tpu.memory_space<vmem>>, vector<4x128xf32>,
    %c0_114 = arith.constant 0 : index
    %c0_115 = arith.constant 0 : index
    %c6_116 = arith.constant 6 : index
    %81 = vector.load %arg2[%c0_114, %c0_115, %c6_116] : memref<2x4x145xf32, #tpu.memory_space<vmem>>, vector<1x4x128xf32>
    %82 = vector.shape_cast %81 : vector<1x4x128xf32> to vector<4x128xf32>
    %c52 = arith.constant 52 : index
    %c0_117 = arith.constant 0 : index
    %83 = vector.load %arg6[%c52, %c0_117] : memref<256x256xf32, #tpu.memory_space<vmem>>, vector<4x128xf32>
    tpu.vector_store %arg6[%c52, %c0_117], %82 {strides = array<i32>} : memref<256x256xf32, #tpu.memory_space<vmem>>, vector<4x128xf32>,
    %c1_118 = arith.constant 1 : index
    %c0_119 = arith.constant 0 : index
    %c6_120 = arith.constant 6 : index
    %84 = vector.load %arg2[%c1_118, %c0_119, %c6_120] : memref<2x4x145xf32, #tpu.memory_space<vmem>>, vector<1x4x128xf32>
    %85 = vector.shape_cast %84 : vector<1x4x128xf32> to vector<4x128xf32>
    %c52_121 = arith.constant 52 : index
    %c128_122 = arith.constant 128 : index
    %86 = vector.load %arg6[%c52_121, %c128_122] : memref<256x256xf32, #tpu.memory_space<vmem>>, vector<4x128xf32>
    tpu.vector_store %arg6[%c52_121, %c128_122], %85 {strides = array<i32>} : memref<256x256xf32, #tpu.memory_space<vmem>>, vector<4x128xf32>,
    %c0_123 = arith.constant 0 : index
    %c0_124 = arith.constant 0 : index
    %c7 = arith.constant 7 : index
    %87 = vector.load %arg1[%c0_123, %c0_124, %c7] : memref<2x4x145xf32, #tpu.memory_space<vmem>>, vector<1x4x128xf32>
    %88 = vector.shape_cast %87 : vector<1x4x128xf32> to vector<4x128xf32>
    %c56 = arith.constant 56 : index
    %c0_125 = arith.constant 0 : index
    %89 = vector.load %arg6[%c56, %c0_125] : memref<256x256xf32, #tpu.memory_space<vmem>>, vector<4x128xf32>
    tpu.vector_store %arg6[%c56, %c0_125], %88 {strides = array<i32>} : memref<256x256xf32, #tpu.memory_space<vmem>>, vector<4x128xf32>,
    %c1_126 = arith.constant 1 : index
    %c0_127 = arith.constant 0 : index
    %c7_128 = arith.constant 7 : index
    %90 = vector.load %arg1[%c1_126, %c0_127, %c7_128] : memref<2x4x145xf32, #tpu.memory_space<vmem>>, vector<1x4x128xf32>
    %91 = vector.shape_cast %90 : vector<1x4x128xf32> to vector<4x128xf32>
    %c56_129 = arith.constant 56 : index
    %c128_130 = arith.constant 128 : index
    %92 = vector.load %arg6[%c56_129, %c128_130] : memref<256x256xf32, #tpu.memory_space<vmem>>, vector<4x128xf32>
    tpu.vector_store %arg6[%c56_129, %c128_130], %91 {strides = array<i32>} : memref<256x256xf32, #tpu.memory_space<vmem>>, vector<4x128xf32>,
    %c0_131 = arith.constant 0 : index
    %c0_132 = arith.constant 0 : index
    %c7_133 = arith.constant 7 : index
    %93 = vector.load %arg2[%c0_131, %c0_132, %c7_133] : memref<2x4x145xf32, #tpu.memory_space<vmem>>, vector<1x4x128xf32>
    %94 = vector.shape_cast %93 : vector<1x4x128xf32> to vector<4x128xf32>
    %c60 = arith.constant 60 : index
    %c0_134 = arith.constant 0 : index
    %95 = vector.load %arg6[%c60, %c0_134] : memref<256x256xf32, #tpu.memory_space<vmem>>, vector<4x128xf32>
    tpu.vector_store %arg6[%c60, %c0_134], %94 {strides = array<i32>} : memref<256x256xf32, #tpu.memory_space<vmem>>, vector<4x128xf32>,
    %c1_135 = arith.constant 1 : index
    %c0_136 = arith.constant 0 : index
    %c7_137 = arith.constant 7 : index
    %96 = vector.load %arg2[%c1_135, %c0_136, %c7_137] : memref<2x4x145xf32, #tpu.memory_space<vmem>>, vector<1x4x128xf32>
    %97 = vector.shape_cast %96 : vector<1x4x128xf32> to vector<4x128xf32>
    %c60_138 = arith.constant 60 : index
    %c128_139 = arith.constant 128 : index
    %98 = vector.load %arg6[%c60_138, %c128_139] : memref<256x256xf32, #tpu.memory_space<vmem>>, vector<4x128xf32>
    tpu.vector_store %arg6[%c60_138, %c128_139], %97 {strides = array<i32>} : memref<256x256xf32, #tpu.memory_space<vmem>>, vector<4x128xf32>,
    %c0_140 = arith.constant 0 : index
    %c0_141 = arith.constant 0 : index
    %c8_142 = arith.constant 8 : index
    %99 = vector.load %arg1[%c0_140, %c0_141, %c8_142] : memref<2x4x145xf32, #tpu.memory_space<vmem>>, vector<1x4x128xf32>
    %100 = vector.shape_cast %99 : vector<1x4x128xf32> to vector<4x128xf32>
    %c64 = arith.constant 64 : index
    %c0_143 = arith.constant 0 : index
    %101 = vector.load %arg6[%c64, %c0_143] : memref<256x256xf32, #tpu.memory_space<vmem>>, vector<4x128xf32>
    tpu.vector_store %arg6[%c64, %c0_143], %100 {strides = array<i32>} : memref<256x256xf32, #tpu.memory_space<vmem>>, vector<4x128xf32>,
    %c1_144 = arith.constant 1 : index
    %c0_145 = arith.constant 0 : index
    %c8_146 = arith.constant 8 : index
    %102 = vector.load %arg1[%c1_144, %c0_145, %c8_146] : memref<2x4x145xf32, #tpu.memory_space<vmem>>, vector<1x4x128xf32>
    %103 = vector.shape_cast %102 : vector<1x4x128xf32> to vector<4x128xf32>
    %c64_147 = arith.constant 64 : index
    %c128_148 = arith.constant 128 : index
    %104 = vector.load %arg6[%c64_147, %c128_148] : memref<256x256xf32, #tpu.memory_space<vmem>>, vector<4x128xf32>
    tpu.vector_store %arg6[%c64_147, %c128_148], %103 {strides = array<i32>} : memref<256x256xf32, #tpu.memory_space<vmem>>, vector<4x128xf32>,
    %c0_149 = arith.constant 0 : index
    %c0_150 = arith.constant 0 : index
    %c8_151 = arith.constant 8 : index
    %105 = vector.load %arg2[%c0_149, %c0_150, %c8_151] : memref<2x4x145xf32, #tpu.memory_space<vmem>>, vector<1x4x128xf32>
    %106 = vector.shape_cast %105 : vector<1x4x128xf32> to vector<4x128xf32>
    %c68 = arith.constant 68 : index
    %c0_152 = arith.constant 0 : index
    %107 = vector.load %arg6[%c68, %c0_152] : memref<256x256xf32, #tpu.memory_space<vmem>>, vector<4x128xf32>
    tpu.vector_store %arg6[%c68, %c0_152], %106 {strides = array<i32>} : memref<256x256xf32, #tpu.memory_space<vmem>>, vector<4x128xf32>,
    %c1_153 = arith.constant 1 : index
    %c0_154 = arith.constant 0 : index
    %c8_155 = arith.constant 8 : index
    %108 = vector.load %arg2[%c1_153, %c0_154, %c8_155] : memref<2x4x145xf32, #tpu.memory_space<vmem>>, vector<1x4x128xf32>
    %109 = vector.shape_cast %108 : vector<1x4x128xf32> to vector<4x128xf32>
    %c68_156 = arith.constant 68 : index
    %c128_157 = arith.constant 128 : index
    %110 = vector.load %arg6[%c68_156, %c128_157] : memref<256x256xf32, #tpu.memory_space<vmem>>, vector<4x128xf32>
    tpu.vector_store %arg6[%c68_156, %c128_157], %109 {strides = array<i32>} : memref<256x256xf32, #tpu.memory_space<vmem>>, vector<4x128xf32>,
    %c0_158 = arith.constant 0 : index
    %c0_159 = arith.constant 0 : index
    %c9 = arith.constant 9 : index
    %111 = vector.load %arg1[%c0_158, %c0_159, %c9] : memref<2x4x145xf32, #tpu.memory_space<vmem>>, vector<1x4x128xf32>
    %112 = vector.shape_cast %111 : vector<1x4x128xf32> to vector<4x128xf32>
    %c72 = arith.constant 72 : index
    %c0_160 = arith.constant 0 : index
    %113 = vector.load %arg6[%c72, %c0_160] : memref<256x256xf32, #tpu.memory_space<vmem>>, vector<4x128xf32>
    tpu.vector_store %arg6[%c72, %c0_160], %112 {strides = array<i32>} : memref<256x256xf32, #tpu.memory_space<vmem>>, vector<4x128xf32>,
    %c1_161 = arith.constant 1 : index
    %c0_162 = arith.constant 0 : index
    %c9_163 = arith.constant 9 : index
    %114 = vector.load %arg1[%c1_161, %c0_162, %c9_163] : memref<2x4x145xf32, #tpu.memory_space<vmem>>, vector<1x4x128xf32>
    %115 = vector.shape_cast %114 : vector<1x4x128xf32> to vector<4x128xf32>
    %c72_164 = arith.constant 72 : index
    %c128_165 = arith.constant 128 : index
    %116 = vector.load %arg6[%c72_164, %c128_165] : memref<256x256xf32, #tpu.memory_space<vmem>>, vector<4x128xf32>
    tpu.vector_store %arg6[%c72_164, %c128_165], %115 {strides = array<i32>} : memref<256x256xf32, #tpu.memory_space<vmem>>, vector<4x128xf32>,
    %c0_166 = arith.constant 0 : index
    %c0_167 = arith.constant 0 : index
    %c9_168 = arith.constant 9 : index
    %117 = vector.load %arg2[%c0_166, %c0_167, %c9_168] : memref<2x4x145xf32, #tpu.memory_space<vmem>>, vector<1x4x128xf32>
    %118 = vector.shape_cast %117 : vector<1x4x128xf32> to vector<4x128xf32>
    %c76 = arith.constant 76 : index
    %c0_169 = arith.constant 0 : index
    %119 = vector.load %arg6[%c76, %c0_169] : memref<256x256xf32, #tpu.memory_space<vmem>>, vector<4x128xf32>
    tpu.vector_store %arg6[%c76, %c0_169], %118 {strides = array<i32>} : memref<256x256xf32, #tpu.memory_space<vmem>>, vector<4x128xf32>,
    %c1_170 = arith.constant 1 : index
    %c0_171 = arith.constant 0 : index
    %c9_172 = arith.constant 9 : index
    %120 = vector.load %arg2[%c1_170, %c0_171, %c9_172] : memref<2x4x145xf32, #tpu.memory_space<vmem>>, vector<1x4x128xf32>
    %121 = vector.shape_cast %120 : vector<1x4x128xf32> to vector<4x128xf32>
    %c76_173 = arith.constant 76 : index
    %c128_174 = arith.constant 128 : index
    %122 = vector.load %arg6[%c76_173, %c128_174] : memref<256x256xf32, #tpu.memory_space<vmem>>, vector<4x128xf32>
    tpu.vector_store %arg6[%c76_173, %c128_174], %121 {strides = array<i32>} : memref<256x256xf32, #tpu.memory_space<vmem>>, vector<4x128xf32>,
    %c0_175 = arith.constant 0 : index
    %c0_176 = arith.constant 0 : index
    %c10 = arith.constant 10 : index
    %123 = vector.load %arg1[%c0_175, %c0_176, %c10] : memref<2x4x145xf32, #tpu.memory_space<vmem>>, vector<1x4x128xf32>
    %124 = vector.shape_cast %123 : vector<1x4x128xf32> to vector<4x128xf32>
    %c80 = arith.constant 80 : index
    %c0_177 = arith.constant 0 : index
    %125 = vector.load %arg6[%c80, %c0_177] : memref<256x256xf32, #tpu.memory_space<vmem>>, vector<4x128xf32>
    tpu.vector_store %arg6[%c80, %c0_177], %124 {strides = array<i32>} : memref<256x256xf32, #tpu.memory_space<vmem>>, vector<4x128xf32>,
    %c1_178 = arith.constant 1 : index
    %c0_179 = arith.constant 0 : index
    %c10_180 = arith.constant 10 : index
    %126 = vector.load %arg1[%c1_178, %c0_179, %c10_180] : memref<2x4x145xf32, #tpu.memory_space<vmem>>, vector<1x4x128xf32>
    %127 = vector.shape_cast %126 : vector<1x4x128xf32> to vector<4x128xf32>
    %c80_181 = arith.constant 80 : index
    %c128_182 = arith.constant 128 : index
    %128 = vector.load %arg6[%c80_181, %c128_182] : memref<256x256xf32, #tpu.memory_space<vmem>>, vector<4x128xf32>
    tpu.vector_store %arg6[%c80_181, %c128_182], %127 {strides = array<i32>} : memref<256x256xf32, #tpu.memory_space<vmem>>, vector<4x128xf32>,
    %c0_183 = arith.constant 0 : index
    %c0_184 = arith.constant 0 : index
    %c10_185 = arith.constant 10 : index
    %129 = vector.load %arg2[%c0_183, %c0_184, %c10_185] : memref<2x4x145xf32, #tpu.memory_space<vmem>>, vector<1x4x128xf32>
    %130 = vector.shape_cast %129 : vector<1x4x128xf32> to vector<4x128xf32>
    %c84 = arith.constant 84 : index
    %c0_186 = arith.constant 0 : index
    %131 = vector.load %arg6[%c84, %c0_186] : memref<256x256xf32, #tpu.memory_space<vmem>>, vector<4x128xf32>
    tpu.vector_store %arg6[%c84, %c0_186], %130 {strides = array<i32>} : memref<256x256xf32, #tpu.memory_space<vmem>>, vector<4x128xf32>,
    %c1_187 = arith.constant 1 : index
    %c0_188 = arith.constant 0 : index
    %c10_189 = arith.constant 10 : index
    %132 = vector.load %arg2[%c1_187, %c0_188, %c10_189] : memref<2x4x145xf32, #tpu.memory_space<vmem>>, vector<1x4x128xf32>
    %133 = vector.shape_cast %132 : vector<1x4x128xf32> to vector<4x128xf32>
    %c84_190 = arith.constant 84 : index
    %c128_191 = arith.constant 128 : index
    %134 = vector.load %arg6[%c84_190, %c128_191] : memref<256x256xf32, #tpu.memory_space<vmem>>, vector<4x128xf32>
    tpu.vector_store %arg6[%c84_190, %c128_191], %133 {strides = array<i32>} : memref<256x256xf32, #tpu.memory_space<vmem>>, vector<4x128xf32>,
    %c0_192 = arith.constant 0 : index
    %c0_193 = arith.constant 0 : index
    %c11 = arith.constant 11 : index
    %135 = vector.load %arg1[%c0_192, %c0_193, %c11] : memref<2x4x145xf32, #tpu.memory_space<vmem>>, vector<1x4x128xf32>
    %136 = vector.shape_cast %135 : vector<1x4x128xf32> to vector<4x128xf32>
    %c88 = arith.constant 88 : index
    %c0_194 = arith.constant 0 : index
    %137 = vector.load %arg6[%c88, %c0_194] : memref<256x256xf32, #tpu.memory_space<vmem>>, vector<4x128xf32>
    tpu.vector_store %arg6[%c88, %c0_194], %136 {strides = array<i32>} : memref<256x256xf32, #tpu.memory_space<vmem>>, vector<4x128xf32>,
    %c1_195 = arith.constant 1 : index
    %c0_196 = arith.constant 0 : index
    %c11_197 = arith.constant 11 : index
    %138 = vector.load %arg1[%c1_195, %c0_196, %c11_197] : memref<2x4x145xf32, #tpu.memory_space<vmem>>, vector<1x4x128xf32>
    %139 = vector.shape_cast %138 : vector<1x4x128xf32> to vector<4x128xf32>
    %c88_198 = arith.constant 88 : index
    %c128_199 = arith.constant 128 : index
    %140 = vector.load %arg6[%c88_198, %c128_199] : memref<256x256xf32, #tpu.memory_space<vmem>>, vector<4x128xf32>
    tpu.vector_store %arg6[%c88_198, %c128_199], %139 {strides = array<i32>} : memref<256x256xf32, #tpu.memory_space<vmem>>, vector<4x128xf32>,
    %c0_200 = arith.constant 0 : index
    %c0_201 = arith.constant 0 : index
    %c11_202 = arith.constant 11 : index
    %141 = vector.load %arg2[%c0_200, %c0_201, %c11_202] : memref<2x4x145xf32, #tpu.memory_space<vmem>>, vector<1x4x128xf32>
    %142 = vector.shape_cast %141 : vector<1x4x128xf32> to vector<4x128xf32>
    %c92 = arith.constant 92 : index
    %c0_203 = arith.constant 0 : index
    %143 = vector.load %arg6[%c92, %c0_203] : memref<256x256xf32, #tpu.memory_space<vmem>>, vector<4x128xf32>
    tpu.vector_store %arg6[%c92, %c0_203], %142 {strides = array<i32>} : memref<256x256xf32, #tpu.memory_space<vmem>>, vector<4x128xf32>,
    %c1_204 = arith.constant 1 : index
    %c0_205 = arith.constant 0 : index
    %c11_206 = arith.constant 11 : index
    %144 = vector.load %arg2[%c1_204, %c0_205, %c11_206] : memref<2x4x145xf32, #tpu.memory_space<vmem>>, vector<1x4x128xf32>
    %145 = vector.shape_cast %144 : vector<1x4x128xf32> to vector<4x128xf32>
    %c92_207 = arith.constant 92 : index
    %c128_208 = arith.constant 128 : index
    %146 = vector.load %arg6[%c92_207, %c128_208] : memref<256x256xf32, #tpu.memory_space<vmem>>, vector<4x128xf32>
    tpu.vector_store %arg6[%c92_207, %c128_208], %145 {strides = array<i32>} : memref<256x256xf32, #tpu.memory_space<vmem>>, vector<4x128xf32>,
    %c0_209 = arith.constant 0 : index
    %c0_210 = arith.constant 0 : index
    %c12_211 = arith.constant 12 : index
    %147 = vector.load %arg1[%c0_209, %c0_210, %c12_211] : memref<2x4x145xf32, #tpu.memory_space<vmem>>, vector<1x4x128xf32>
    %148 = vector.shape_cast %147 : vector<1x4x128xf32> to vector<4x128xf32>
    %c96 = arith.constant 96 : index
    %c0_212 = arith.constant 0 : index
    %149 = vector.load %arg6[%c96, %c0_212] : memref<256x256xf32, #tpu.memory_space<vmem>>, vector<4x128xf32>
    tpu.vector_store %arg6[%c96, %c0_212], %148 {strides = array<i32>} : memref<256x256xf32, #tpu.memory_space<vmem>>, vector<4x128xf32>,
    %c1_213 = arith.constant 1 : index
    %c0_214 = arith.constant 0 : index
    %c12_215 = arith.constant 12 : index
    %150 = vector.load %arg1[%c1_213, %c0_214, %c12_215] : memref<2x4x145xf32, #tpu.memory_space<vmem>>, vector<1x4x128xf32>
    %151 = vector.shape_cast %150 : vector<1x4x128xf32> to vector<4x128xf32>
    %c96_216 = arith.constant 96 : index
    %c128_217 = arith.constant 128 : index
    %152 = vector.load %arg6[%c96_216, %c128_217] : memref<256x256xf32, #tpu.memory_space<vmem>>, vector<4x128xf32>
    tpu.vector_store %arg6[%c96_216, %c128_217], %151 {strides = array<i32>} : memref<256x256xf32, #tpu.memory_space<vmem>>, vector<4x128xf32>,
    %c0_218 = arith.constant 0 : index
    %c0_219 = arith.constant 0 : index
    %c12_220 = arith.constant 12 : index
    %153 = vector.load %arg2[%c0_218, %c0_219, %c12_220] : memref<2x4x145xf32, #tpu.memory_space<vmem>>, vector<1x4x128xf32>
    %154 = vector.shape_cast %153 : vector<1x4x128xf32> to vector<4x128xf32>
    %c100 = arith.constant 100 : index
    %c0_221 = arith.constant 0 : index
    %155 = vector.load %arg6[%c100, %c0_221] : memref<256x256xf32, #tpu.memory_space<vmem>>, vector<4x128xf32>
    tpu.vector_store %arg6[%c100, %c0_221], %154 {strides = array<i32>} : memref<256x256xf32, #tpu.memory_space<vmem>>, vector<4x128xf32>,
    %c1_222 = arith.constant 1 : index
    %c0_223 = arith.constant 0 : index
    %c12_224 = arith.constant 12 : index
    %156 = vector.load %arg2[%c1_222, %c0_223, %c12_224] : memref<2x4x145xf32, #tpu.memory_space<vmem>>, vector<1x4x128xf32>
    %157 = vector.shape_cast %156 : vector<1x4x128xf32> to vector<4x128xf32>
    %c100_225 = arith.constant 100 : index
    %c128_226 = arith.constant 128 : index
    %158 = vector.load %arg6[%c100_225, %c128_226] : memref<256x256xf32, #tpu.memory_space<vmem>>, vector<4x128xf32>
    tpu.vector_store %arg6[%c100_225, %c128_226], %157 {strides = array<i32>} : memref<256x256xf32, #tpu.memory_space<vmem>>, vector<4x128xf32>,
    %c0_227 = arith.constant 0 : index
    %c0_228 = arith.constant 0 : index
    %c13 = arith.constant 13 : index
    %159 = vector.load %arg1[%c0_227, %c0_228, %c13] : memref<2x4x145xf32, #tpu.memory_space<vmem>>, vector<1x4x128xf32>
    %160 = vector.shape_cast %159 : vector<1x4x128xf32> to vector<4x128xf32>
    %c104 = arith.constant 104 : index
    %c0_229 = arith.constant 0 : index
    %161 = vector.load %arg6[%c104, %c0_229] : memref<256x256xf32, #tpu.memory_space<vmem>>, vector<4x128xf32>
    tpu.vector_store %arg6[%c104, %c0_229], %160 {strides = array<i32>} : memref<256x256xf32, #tpu.memory_space<vmem>>, vector<4x128xf32>,
    %c1_230 = arith.constant 1 : index
    %c0_231 = arith.constant 0 : index
    %c13_232 = arith.constant 13 : index
    %162 = vector.load %arg1[%c1_230, %c0_231, %c13_232] : memref<2x4x145xf32, #tpu.memory_space<vmem>>, vector<1x4x128xf32>
    %163 = vector.shape_cast %162 : vector<1x4x128xf32> to vector<4x128xf32>
    %c104_233 = arith.constant 104 : index
    %c128_234 = arith.constant 128 : index
    %164 = vector.load %arg6[%c104_233, %c128_234] : memref<256x256xf32, #tpu.memory_space<vmem>>, vector<4x128xf32>
    tpu.vector_store %arg6[%c104_233, %c128_234], %163 {strides = array<i32>} : memref<256x256xf32, #tpu.memory_space<vmem>>, vector<4x128xf32>,
    %c0_235 = arith.constant 0 : index
    %c0_236 = arith.constant 0 : index
    %c13_237 = arith.constant 13 : index
    %165 = vector.load %arg2[%c0_235, %c0_236, %c13_237] : memref<2x4x145xf32, #tpu.memory_space<vmem>>, vector<1x4x128xf32>
    %166 = vector.shape_cast %165 : vector<1x4x128xf32> to vector<4x128xf32>
    %c108 = arith.constant 108 : index
    %c0_238 = arith.constant 0 : index
    %167 = vector.load %arg6[%c108, %c0_238] : memref<256x256xf32, #tpu.memory_space<vmem>>, vector<4x128xf32>
    tpu.vector_store %arg6[%c108, %c0_238], %166 {strides = array<i32>} : memref<256x256xf32, #tpu.memory_space<vmem>>, vector<4x128xf32>,
    %c1_239 = arith.constant 1 : index
    %c0_240 = arith.constant 0 : index
    %c13_241 = arith.constant 13 : index
    %168 = vector.load %arg2[%c1_239, %c0_240, %c13_241] : memref<2x4x145xf32, #tpu.memory_space<vmem>>, vector<1x4x128xf32>
    %169 = vector.shape_cast %168 : vector<1x4x128xf32> to vector<4x128xf32>
    %c108_242 = arith.constant 108 : index
    %c128_243 = arith.constant 128 : index
    %170 = vector.load %arg6[%c108_242, %c128_243] : memref<256x256xf32, #tpu.memory_space<vmem>>, vector<4x128xf32>
    tpu.vector_store %arg6[%c108_242, %c128_243], %169 {strides = array<i32>} : memref<256x256xf32, #tpu.memory_space<vmem>>, vector<4x128xf32>,
    %c0_244 = arith.constant 0 : index
    %c0_245 = arith.constant 0 : index
    %c14 = arith.constant 14 : index
    %171 = vector.load %arg1[%c0_244, %c0_245, %c14] : memref<2x4x145xf32, #tpu.memory_space<vmem>>, vector<1x4x128xf32>
    %172 = vector.shape_cast %171 : vector<1x4x128xf32> to vector<4x128xf32>
    %c112 = arith.constant 112 : index
    %c0_246 = arith.constant 0 : index
    %173 = vector.load %arg6[%c112, %c0_246] : memref<256x256xf32, #tpu.memory_space<vmem>>, vector<4x128xf32>
    tpu.vector_store %arg6[%c112, %c0_246], %172 {strides = array<i32>} : memref<256x256xf32, #tpu.memory_space<vmem>>, vector<4x128xf32>,
    %c1_247 = arith.constant 1 : index
    %c0_248 = arith.constant 0 : index
    %c14_249 = arith.constant 14 : index
    %174 = vector.load %arg1[%c1_247, %c0_248, %c14_249] : memref<2x4x145xf32, #tpu.memory_space<vmem>>, vector<1x4x128xf32>
    %175 = vector.shape_cast %174 : vector<1x4x128xf32> to vector<4x128xf32>
    %c112_250 = arith.constant 112 : index
    %c128_251 = arith.constant 128 : index
    %176 = vector.load %arg6[%c112_250, %c128_251] : memref<256x256xf32, #tpu.memory_space<vmem>>, vector<4x128xf32>
    tpu.vector_store %arg6[%c112_250, %c128_251], %175 {strides = array<i32>} : memref<256x256xf32, #tpu.memory_space<vmem>>, vector<4x128xf32>,
    %c0_252 = arith.constant 0 : index
    %c0_253 = arith.constant 0 : index
    %c14_254 = arith.constant 14 : index
    %177 = vector.load %arg2[%c0_252, %c0_253, %c14_254] : memref<2x4x145xf32, #tpu.memory_space<vmem>>, vector<1x4x128xf32>
    %178 = vector.shape_cast %177 : vector<1x4x128xf32> to vector<4x128xf32>
    %c116 = arith.constant 116 : index
    %c0_255 = arith.constant 0 : index
    %179 = vector.load %arg6[%c116, %c0_255] : memref<256x256xf32, #tpu.memory_space<vmem>>, vector<4x128xf32>
    tpu.vector_store %arg6[%c116, %c0_255], %178 {strides = array<i32>} : memref<256x256xf32, #tpu.memory_space<vmem>>, vector<4x128xf32>,
    %c1_256 = arith.constant 1 : index
    %c0_257 = arith.constant 0 : index
    %c14_258 = arith.constant 14 : index
    %180 = vector.load %arg2[%c1_256, %c0_257, %c14_258] : memref<2x4x145xf32, #tpu.memory_space<vmem>>, vector<1x4x128xf32>
    %181 = vector.shape_cast %180 : vector<1x4x128xf32> to vector<4x128xf32>
    %c116_259 = arith.constant 116 : index
    %c128_260 = arith.constant 128 : index
    %182 = vector.load %arg6[%c116_259, %c128_260] : memref<256x256xf32, #tpu.memory_space<vmem>>, vector<4x128xf32>
    tpu.vector_store %arg6[%c116_259, %c128_260], %181 {strides = array<i32>} : memref<256x256xf32, #tpu.memory_space<vmem>>, vector<4x128xf32>,
    %c0_261 = arith.constant 0 : index
    %c0_262 = arith.constant 0 : index
    %c15 = arith.constant 15 : index
    %183 = vector.load %arg1[%c0_261, %c0_262, %c15] : memref<2x4x145xf32, #tpu.memory_space<vmem>>, vector<1x4x128xf32>
    %184 = vector.shape_cast %183 : vector<1x4x128xf32> to vector<4x128xf32>
    %c120 = arith.constant 120 : index
    %c0_263 = arith.constant 0 : index
    %185 = vector.load %arg6[%c120, %c0_263] : memref<256x256xf32, #tpu.memory_space<vmem>>, vector<4x128xf32>
    tpu.vector_store %arg6[%c120, %c0_263], %184 {strides = array<i32>} : memref<256x256xf32, #tpu.memory_space<vmem>>, vector<4x128xf32>,
    %c1_264 = arith.constant 1 : index
    %c0_265 = arith.constant 0 : index
    %c15_266 = arith.constant 15 : index
    %186 = vector.load %arg1[%c1_264, %c0_265, %c15_266] : memref<2x4x145xf32, #tpu.memory_space<vmem>>, vector<1x4x128xf32>
    %187 = vector.shape_cast %186 : vector<1x4x128xf32> to vector<4x128xf32>
    %c120_267 = arith.constant 120 : index
    %c128_268 = arith.constant 128 : index
    %188 = vector.load %arg6[%c120_267, %c128_268] : memref<256x256xf32, #tpu.memory_space<vmem>>, vector<4x128xf32>
    tpu.vector_store %arg6[%c120_267, %c128_268], %187 {strides = array<i32>} : memref<256x256xf32, #tpu.memory_space<vmem>>, vector<4x128xf32>,
    %c0_269 = arith.constant 0 : index
    %c0_270 = arith.constant 0 : index
    %c15_271 = arith.constant 15 : index
    %189 = vector.load %arg2[%c0_269, %c0_270, %c15_271] : memref<2x4x145xf32, #tpu.memory_space<vmem>>, vector<1x4x128xf32>
    %190 = vector.shape_cast %189 : vector<1x4x128xf32> to vector<4x128xf32>
    %c124 = arith.constant 124 : index
    %c0_272 = arith.constant 0 : index
    %191 = vector.load %arg6[%c124, %c0_272] : memref<256x256xf32, #tpu.memory_space<vmem>>, vector<4x128xf32>
    tpu.vector_store %arg6[%c124, %c0_272], %190 {strides = array<i32>} : memref<256x256xf32, #tpu.memory_space<vmem>>, vector<4x128xf32>,
    %c1_273 = arith.constant 1 : index
    %c0_274 = arith.constant 0 : index
    %c15_275 = arith.constant 15 : index
    %192 = vector.load %arg2[%c1_273, %c0_274, %c15_275] : memref<2x4x145xf32, #tpu.memory_space<vmem>>, vector<1x4x128xf32>
    %193 = vector.shape_cast %192 : vector<1x4x128xf32> to vector<4x128xf32>
    %c124_276 = arith.constant 124 : index
    %c128_277 = arith.constant 128 : index
    %194 = vector.load %arg6[%c124_276, %c128_277] : memref<256x256xf32, #tpu.memory_space<vmem>>, vector<4x128xf32>
    tpu.vector_store %arg6[%c124_276, %c128_277], %193 {strides = array<i32>} : memref<256x256xf32, #tpu.memory_space<vmem>>, vector<4x128xf32>,
    %c0_278 = arith.constant 0 : index
    %c0_279 = arith.constant 0 : index
    %c16_280 = arith.constant 16 : index
    %195 = vector.load %arg1[%c0_278, %c0_279, %c16_280] : memref<2x4x145xf32, #tpu.memory_space<vmem>>, vector<1x4x128xf32>
    %196 = vector.shape_cast %195 : vector<1x4x128xf32> to vector<4x128xf32>
    %c128_281 = arith.constant 128 : index
    %c0_282 = arith.constant 0 : index
    %197 = vector.load %arg6[%c128_281, %c0_282] : memref<256x256xf32, #tpu.memory_space<vmem>>, vector<4x128xf32>
    tpu.vector_store %arg6[%c128_281, %c0_282], %196 {strides = array<i32>} : memref<256x256xf32, #tpu.memory_space<vmem>>, vector<4x128xf32>,
    %c1_283 = arith.constant 1 : index
    %c0_284 = arith.constant 0 : index
    %c16_285 = arith.constant 16 : index
    %198 = vector.load %arg1[%c1_283, %c0_284, %c16_285] : memref<2x4x145xf32, #tpu.memory_space<vmem>>, vector<1x4x128xf32>
    %199 = vector.shape_cast %198 : vector<1x4x128xf32> to vector<4x128xf32>
    %c128_286 = arith.constant 128 : index
    %c128_287 = arith.constant 128 : index
    %200 = vector.load %arg6[%c128_286, %c128_287] : memref<256x256xf32, #tpu.memory_space<vmem>>, vector<4x128xf32>
    tpu.vector_store %arg6[%c128_286, %c128_287], %199 {strides = array<i32>} : memref<256x256xf32, #tpu.memory_space<vmem>>, vector<4x128xf32>,
    %c0_288 = arith.constant 0 : index
    %c0_289 = arith.constant 0 : index
    %c16_290 = arith.constant 16 : index
    %201 = vector.load %arg2[%c0_288, %c0_289, %c16_290] : memref<2x4x145xf32, #tpu.memory_space<vmem>>, vector<1x4x128xf32>
    %202 = vector.shape_cast %201 : vector<1x4x128xf32> to vector<4x128xf32>
    %c132 = arith.constant 132 : index
    %c0_291 = arith.constant 0 : index
    %203 = vector.load %arg6[%c132, %c0_291] : memref<256x256xf32, #tpu.memory_space<vmem>>, vector<4x128xf32>
    tpu.vector_store %arg6[%c132, %c0_291], %202 {strides = array<i32>} : memref<256x256xf32, #tpu.memory_space<vmem>>, vector<4x128xf32>,
    %c1_292 = arith.constant 1 : index
    %c0_293 = arith.constant 0 : index
    %c16_294 = arith.constant 16 : index
    %204 = vector.load %arg2[%c1_292, %c0_293, %c16_294] : memref<2x4x145xf32, #tpu.memory_space<vmem>>, vector<1x4x128xf32>
    %205 = vector.shape_cast %204 : vector<1x4x128xf32> to vector<4x128xf32>
    %c132_295 = arith.constant 132 : index
    %c128_296 = arith.constant 128 : index
    %206 = vector.load %arg6[%c132_295, %c128_296] : memref<256x256xf32, #tpu.memory_space<vmem>>, vector<4x128xf32>
    tpu.vector_store %arg6[%c132_295, %c128_296], %205 {strides = array<i32>} : memref<256x256xf32, #tpu.memory_space<vmem>>, vector<4x128xf32>,
    %c0_297 = arith.constant 0 : index
    %c0_298 = arith.constant 0 : index
    %c17 = arith.constant 17 : index
    %207 = vector.load %arg1[%c0_297, %c0_298, %c17] : memref<2x4x145xf32, #tpu.memory_space<vmem>>, vector<1x4x128xf32>
    %208 = vector.shape_cast %207 : vector<1x4x128xf32> to vector<4x128xf32>
    %c136 = arith.constant 136 : index
    %c0_299 = arith.constant 0 : index
    %209 = vector.load %arg6[%c136, %c0_299] : memref<256x256xf32, #tpu.memory_space<vmem>>, vector<4x128xf32>
    tpu.vector_store %arg6[%c136, %c0_299], %208 {strides = array<i32>} : memref<256x256xf32, #tpu.memory_space<vmem>>, vector<4x128xf32>,
    %c1_300 = arith.constant 1 : index
    %c0_301 = arith.constant 0 : index
    %c17_302 = arith.constant 17 : index
    %210 = vector.load %arg1[%c1_300, %c0_301, %c17_302] : memref<2x4x145xf32, #tpu.memory_space<vmem>>, vector<1x4x128xf32>
    %211 = vector.shape_cast %210 : vector<1x4x128xf32> to vector<4x128xf32>
    %c136_303 = arith.constant 136 : index
    %c128_304 = arith.constant 128 : index
    %212 = vector.load %arg6[%c136_303, %c128_304] : memref<256x256xf32, #tpu.memory_space<vmem>>, vector<4x128xf32>
    tpu.vector_store %arg6[%c136_303, %c128_304], %211 {strides = array<i32>} : memref<256x256xf32, #tpu.memory_space<vmem>>, vector<4x128xf32>,
    %c0_305 = arith.constant 0 : index
    %c0_306 = arith.constant 0 : index
    %213 = vector.load %arg6[%c0_305, %c0_306] : memref<256x256xf32, #tpu.memory_space<vmem>>, vector<256x256xf32>
    %cst_307 = arith.constant dense<0.000000e+00> : vector<32x256xf32>
    %214 = tpu.matmul %0, %213, %cst_307 {dimension_numbers = #tpu.dot_dimension_numbers<[1], [0], [0], [1], [0, 0, 1, 1], [], []>} : vector<32x256xf32>, vector<256x256xf32>, vector<32x256xf32> -> vector<32x256xf32>
    %c0_308 = arith.constant 0 : index
    %c0_309 = arith.constant 0 : index
    %c0_310 = arith.constant 0 : index
    %215 = vector.load %arg2[%c0_308, %c0_309, %c0_310] : memref<2x4x145xf32, #tpu.memory_space<vmem>>, vector<1x4x128xf32>
    %216 = vector.shape_cast %215 : vector<1x4x128xf32> to vector<4x128xf32>
    %c0_311 = arith.constant 0 : index
    %c0_312 = arith.constant 0 : index
    %217 = vector.load %arg6[%c0_311, %c0_312] : memref<256x256xf32, #tpu.memory_space<vmem>>, vector<4x128xf32>
    tpu.vector_store %arg6[%c0_311, %c0_312], %216 {strides = array<i32>} : memref<256x256xf32, #tpu.memory_space<vmem>>, vector<4x128xf32>,
    %c1_313 = arith.constant 1 : index
    %c0_314 = arith.constant 0 : index
    %c0_315 = arith.constant 0 : index
    %218 = vector.load %arg2[%c1_313, %c0_314, %c0_315] : memref<2x4x145xf32, #tpu.memory_space<vmem>>, vector<1x4x128xf32>
    %219 = vector.shape_cast %218 : vector<1x4x128xf32> to vector<4x128xf32>
    %c0_316 = arith.constant 0 : index
    %c128_317 = arith.constant 128 : index
    %220 = vector.load %arg6[%c0_316, %c128_317] : memref<256x256xf32, #tpu.memory_space<vmem>>, vector<4x128xf32>
    tpu.vector_store %arg6[%c0_316, %c128_317], %219 {strides = array<i32>} : memref<256x256xf32, #tpu.memory_space<vmem>>, vector<4x128xf32>,
    %c0_318 = arith.constant 0 : index
    %c0_319 = arith.constant 0 : index
    %c1_320 = arith.constant 1 : index
    %221 = vector.load %arg1[%c0_318, %c0_319, %c1_320] : memref<2x4x145xf32, #tpu.memory_space<vmem>>, vector<1x4x128xf32>
    %222 = vector.shape_cast %221 : vector<1x4x128xf32> to vector<4x128xf32>
    %c4_321 = arith.constant 4 : index
    %c0_322 = arith.constant 0 : index
    %223 = vector.load %arg6[%c4_321, %c0_322] : memref<256x256xf32, #tpu.memory_space<vmem>>, vector<4x128xf32>
    tpu.vector_store %arg6[%c4_321, %c0_322], %222 {strides = array<i32>} : memref<256x256xf32, #tpu.memory_space<vmem>>, vector<4x128xf32>,
    %c1_323 = arith.constant 1 : index
    %c0_324 = arith.constant 0 : index
    %c1_325 = arith.constant 1 : index
    %224 = vector.load %arg1[%c1_323, %c0_324, %c1_325] : memref<2x4x145xf32, #tpu.memory_space<vmem>>, vector<1x4x128xf32>
    %225 = vector.shape_cast %224 : vector<1x4x128xf32> to vector<4x128xf32>
    %c4_326 = arith.constant 4 : index
    %c128_327 = arith.constant 128 : index
    %226 = vector.load %arg6[%c4_326, %c128_327] : memref<256x256xf32, #tpu.memory_space<vmem>>, vector<4x128xf32>
    tpu.vector_store %arg6[%c4_326, %c128_327], %225 {strides = array<i32>} : memref<256x256xf32, #tpu.memory_space<vmem>>, vector<4x128xf32>,
    %c0_328 = arith.constant 0 : index
    %c0_329 = arith.constant 0 : index
    %c1_330 = arith.constant 1 : index
    %227 = vector.load %arg2[%c0_328, %c0_329, %c1_330] : memref<2x4x145xf32, #tpu.memory_space<vmem>>, vector<1x4x128xf32>
    %228 = vector.shape_cast %227 : vector<1x4x128xf32> to vector<4x128xf32>
    %c8_331 = arith.constant 8 : index
    %c0_332 = arith.constant 0 : index
    %229 = vector.load %arg6[%c8_331, %c0_332] : memref<256x256xf32, #tpu.memory_space<vmem>>, vector<4x128xf32>
    tpu.vector_store %arg6[%c8_331, %c0_332], %228 {strides = array<i32>} : memref<256x256xf32, #tpu.memory_space<vmem>>, vector<4x128xf32>,
    %c1_333 = arith.constant 1 : index
    %c0_334 = arith.constant 0 : index
    %c1_335 = arith.constant 1 : index
    %230 = vector.load %arg2[%c1_333, %c0_334, %c1_335] : memref<2x4x145xf32, #tpu.memory_space<vmem>>, vector<1x4x128xf32>
    %231 = vector.shape_cast %230 : vector<1x4x128xf32> to vector<4x128xf32>
    %c8_336 = arith.constant 8 : index
    %c128_337 = arith.constant 128 : index
    %232 = vector.load %arg6[%c8_336, %c128_337] : memref<256x256xf32, #tpu.memory_space<vmem>>, vector<4x128xf32>
    tpu.vector_store %arg6[%c8_336, %c128_337], %231 {strides = array<i32>} : memref<256x256xf32, #tpu.memory_space<vmem>>, vector<4x128xf32>,
    %c0_338 = arith.constant 0 : index
    %c0_339 = arith.constant 0 : index
    %c2_340 = arith.constant 2 : index
    %233 = vector.load %arg1[%c0_338, %c0_339, %c2_340] : memref<2x4x145xf32, #tpu.memory_space<vmem>>, vector<1x4x128xf32>
    %234 = vector.shape_cast %233 : vector<1x4x128xf32> to vector<4x128xf32>
    %c12_341 = arith.constant 12 : index
    %c0_342 = arith.constant 0 : index
    %235 = vector.load %arg6[%c12_341, %c0_342] : memref<256x256xf32, #tpu.memory_space<vmem>>, vector<4x128xf32>
    tpu.vector_store %arg6[%c12_341, %c0_342], %234 {strides = array<i32>} : memref<256x256xf32, #tpu.memory_space<vmem>>, vector<4x128xf32>,
    %c1_343 = arith.constant 1 : index
    %c0_344 = arith.constant 0 : index
    %c2_345 = arith.constant 2 : index
    %236 = vector.load %arg1[%c1_343, %c0_344, %c2_345] : memref<2x4x145xf32, #tpu.memory_space<vmem>>, vector<1x4x128xf32>
    %237 = vector.shape_cast %236 : vector<1x4x128xf32> to vector<4x128xf32>
    %c12_346 = arith.constant 12 : index
    %c128_347 = arith.constant 128 : index
    %238 = vector.load %arg6[%c12_346, %c128_347] : memref<256x256xf32, #tpu.memory_space<vmem>>, vector<4x128xf32>
    tpu.vector_store %arg6[%c12_346, %c128_347], %237 {strides = array<i32>} : memref<256x256xf32, #tpu.memory_space<vmem>>, vector<4x128xf32>,
    %c0_348 = arith.constant 0 : index
    %c0_349 = arith.constant 0 : index
    %c2_350 = arith.constant 2 : index
    %239 = vector.load %arg2[%c0_348, %c0_349, %c2_350] : memref<2x4x145xf32, #tpu.memory_space<vmem>>, vector<1x4x128xf32>
    %240 = vector.shape_cast %239 : vector<1x4x128xf32> to vector<4x128xf32>
    %c16_351 = arith.constant 16 : index
    %c0_352 = arith.constant 0 : index
    %241 = vector.load %arg6[%c16_351, %c0_352] : memref<256x256xf32, #tpu.memory_space<vmem>>, vector<4x128xf32>
    tpu.vector_store %arg6[%c16_351, %c0_352], %240 {strides = array<i32>} : memref<256x256xf32, #tpu.memory_space<vmem>>, vector<4x128xf32>,
    %c1_353 = arith.constant 1 : index
    %c0_354 = arith.constant 0 : index
    %c2_355 = arith.constant 2 : index
    %242 = vector.load %arg2[%c1_353, %c0_354, %c2_355] : memref<2x4x145xf32, #tpu.memory_space<vmem>>, vector<1x4x128xf32>
    %243 = vector.shape_cast %242 : vector<1x4x128xf32> to vector<4x128xf32>
    %c16_356 = arith.constant 16 : index
    %c128_357 = arith.constant 128 : index
    %244 = vector.load %arg6[%c16_356, %c128_357] : memref<256x256xf32, #tpu.memory_space<vmem>>, vector<4x128xf32>
    tpu.vector_store %arg6[%c16_356, %c128_357], %243 {strides = array<i32>} : memref<256x256xf32, #tpu.memory_space<vmem>>, vector<4x128xf32>,
    %c0_358 = arith.constant 0 : index
    %c0_359 = arith.constant 0 : index
    %c3_360 = arith.constant 3 : index
    %245 = vector.load %arg1[%c0_358, %c0_359, %c3_360] : memref<2x4x145xf32, #tpu.memory_space<vmem>>, vector<1x4x128xf32>
    %246 = vector.shape_cast %245 : vector<1x4x128xf32> to vector<4x128xf32>
    %c20_361 = arith.constant 20 : index
    %c0_362 = arith.constant 0 : index
    %247 = vector.load %arg6[%c20_361, %c0_362] : memref<256x256xf32, #tpu.memory_space<vmem>>, vector<4x128xf32>
    tpu.vector_store %arg6[%c20_361, %c0_362], %246 {strides = array<i32>} : memref<256x256xf32, #tpu.memory_space<vmem>>, vector<4x128xf32>,
    %c1_363 = arith.constant 1 : index
    %c0_364 = arith.constant 0 : index
    %c3_365 = arith.constant 3 : index
    %248 = vector.load %arg1[%c1_363, %c0_364, %c3_365] : memref<2x4x145xf32, #tpu.memory_space<vmem>>, vector<1x4x128xf32>
    %249 = vector.shape_cast %248 : vector<1x4x128xf32> to vector<4x128xf32>
    %c20_366 = arith.constant 20 : index
    %c128_367 = arith.constant 128 : index
    %250 = vector.load %arg6[%c20_366, %c128_367] : memref<256x256xf32, #tpu.memory_space<vmem>>, vector<4x128xf32>
    tpu.vector_store %arg6[%c20_366, %c128_367], %249 {strides = array<i32>} : memref<256x256xf32, #tpu.memory_space<vmem>>, vector<4x128xf32>,
    %c0_368 = arith.constant 0 : index
    %c0_369 = arith.constant 0 : index
    %c3_370 = arith.constant 3 : index
    %251 = vector.load %arg2[%c0_368, %c0_369, %c3_370] : memref<2x4x145xf32, #tpu.memory_space<vmem>>, vector<1x4x128xf32>
    %252 = vector.shape_cast %251 : vector<1x4x128xf32> to vector<4x128xf32>
    %c24_371 = arith.constant 24 : index
    %c0_372 = arith.constant 0 : index
    %253 = vector.load %arg6[%c24_371, %c0_372] : memref<256x256xf32, #tpu.memory_space<vmem>>, vector<4x128xf32>
    tpu.vector_store %arg6[%c24_371, %c0_372], %252 {strides = array<i32>} : memref<256x256xf32, #tpu.memory_space<vmem>>, vector<4x128xf32>,
    %c1_373 = arith.constant 1 : index
    %c0_374 = arith.constant 0 : index
    %c3_375 = arith.constant 3 : index
    %254 = vector.load %arg2[%c1_373, %c0_374, %c3_375] : memref<2x4x145xf32, #tpu.memory_space<vmem>>, vector<1x4x128xf32>
    %255 = vector.shape_cast %254 : vector<1x4x128xf32> to vector<4x128xf32>
    %c24_376 = arith.constant 24 : index
    %c128_377 = arith.constant 128 : index
    %256 = vector.load %arg6[%c24_376, %c128_377] : memref<256x256xf32, #tpu.memory_space<vmem>>, vector<4x128xf32>
    tpu.vector_store %arg6[%c24_376, %c128_377], %255 {strides = array<i32>} : memref<256x256xf32, #tpu.memory_space<vmem>>, vector<4x128xf32>,
    %c0_378 = arith.constant 0 : index
    %c0_379 = arith.constant 0 : index
    %c4_380 = arith.constant 4 : index
    %257 = vector.load %arg1[%c0_378, %c0_379, %c4_380] : memref<2x4x145xf32, #tpu.memory_space<vmem>>, vector<1x4x128xf32>
    %258 = vector.shape_cast %257 : vector<1x4x128xf32> to vector<4x128xf32>
    %c28_381 = arith.constant 28 : index
    %c0_382 = arith.constant 0 : index
    %259 = vector.load %arg6[%c28_381, %c0_382] : memref<256x256xf32, #tpu.memory_space<vmem>>, vector<4x128xf32>
    tpu.vector_store %arg6[%c28_381, %c0_382], %258 {strides = array<i32>} : memref<256x256xf32, #tpu.memory_space<vmem>>, vector<4x128xf32>,
    %c1_383 = arith.constant 1 : index
    %c0_384 = arith.constant 0 : index
    %c4_385 = arith.constant 4 : index
    %260 = vector.load %arg1[%c1_383, %c0_384, %c4_385] : memref<2x4x145xf32, #tpu.memory_space<vmem>>, vector<1x4x128xf32>
    %261 = vector.shape_cast %260 : vector<1x4x128xf32> to vector<4x128xf32>
    %c28_386 = arith.constant 28 : index
    %c128_387 = arith.constant 128 : index
    %262 = vector.load %arg6[%c28_386, %c128_387] : memref<256x256xf32, #tpu.memory_space<vmem>>, vector<4x128xf32>
    tpu.vector_store %arg6[%c28_386, %c128_387], %261 {strides = array<i32>} : memref<256x256xf32, #tpu.memory_space<vmem>>, vector<4x128xf32>,
    %c0_388 = arith.constant 0 : index
    %c0_389 = arith.constant 0 : index
    %c4_390 = arith.constant 4 : index
    %263 = vector.load %arg2[%c0_388, %c0_389, %c4_390] : memref<2x4x145xf32, #tpu.memory_space<vmem>>, vector<1x4x128xf32>
    %264 = vector.shape_cast %263 : vector<1x4x128xf32> to vector<4x128xf32>
    %c32_391 = arith.constant 32 : index
    %c0_392 = arith.constant 0 : index
    %265 = vector.load %arg6[%c32_391, %c0_392] : memref<256x256xf32, #tpu.memory_space<vmem>>, vector<4x128xf32>
    tpu.vector_store %arg6[%c32_391, %c0_392], %264 {strides = array<i32>} : memref<256x256xf32, #tpu.memory_space<vmem>>, vector<4x128xf32>,
    %c1_393 = arith.constant 1 : index
    %c0_394 = arith.constant 0 : index
    %c4_395 = arith.constant 4 : index
    %266 = vector.load %arg2[%c1_393, %c0_394, %c4_395] : memref<2x4x145xf32, #tpu.memory_space<vmem>>, vector<1x4x128xf32>
    %267 = vector.shape_cast %266 : vector<1x4x128xf32> to vector<4x128xf32>
    %c32_396 = arith.constant 32 : index
    %c128_397 = arith.constant 128 : index
    %268 = vector.load %arg6[%c32_396, %c128_397] : memref<256x256xf32, #tpu.memory_space<vmem>>, vector<4x128xf32>
    tpu.vector_store %arg6[%c32_396, %c128_397], %267 {strides = array<i32>} : memref<256x256xf32, #tpu.memory_space<vmem>>, vector<4x128xf32>,
    %c0_398 = arith.constant 0 : index
    %c0_399 = arith.constant 0 : index
    %c5_400 = arith.constant 5 : index
    %269 = vector.load %arg1[%c0_398, %c0_399, %c5_400] : memref<2x4x145xf32, #tpu.memory_space<vmem>>, vector<1x4x128xf32>
    %270 = vector.shape_cast %269 : vector<1x4x128xf32> to vector<4x128xf32>
    %c36_401 = arith.constant 36 : index
    %c0_402 = arith.constant 0 : index
    %271 = vector.load %arg6[%c36_401, %c0_402] : memref<256x256xf32, #tpu.memory_space<vmem>>, vector<4x128xf32>
    tpu.vector_store %arg6[%c36_401, %c0_402], %270 {strides = array<i32>} : memref<256x256xf32, #tpu.memory_space<vmem>>, vector<4x128xf32>,
    %c1_403 = arith.constant 1 : index
    %c0_404 = arith.constant 0 : index
    %c5_405 = arith.constant 5 : index
    %272 = vector.load %arg1[%c1_403, %c0_404, %c5_405] : memref<2x4x145xf32, #tpu.memory_space<vmem>>, vector<1x4x128xf32>
    %273 = vector.shape_cast %272 : vector<1x4x128xf32> to vector<4x128xf32>
    %c36_406 = arith.constant 36 : index
    %c128_407 = arith.constant 128 : index
    %274 = vector.load %arg6[%c36_406, %c128_407] : memref<256x256xf32, #tpu.memory_space<vmem>>, vector<4x128xf32>
    tpu.vector_store %arg6[%c36_406, %c128_407], %273 {strides = array<i32>} : memref<256x256xf32, #tpu.memory_space<vmem>>, vector<4x128xf32>,
    %c0_408 = arith.constant 0 : index
    %c0_409 = arith.constant 0 : index
    %c5_410 = arith.constant 5 : index
    %275 = vector.load %arg2[%c0_408, %c0_409, %c5_410] : memref<2x4x145xf32, #tpu.memory_space<vmem>>, vector<1x4x128xf32>
    %276 = vector.shape_cast %275 : vector<1x4x128xf32> to vector<4x128xf32>
    %c40_411 = arith.constant 40 : index
    %c0_412 = arith.constant 0 : index
    %277 = vector.load %arg6[%c40_411, %c0_412] : memref<256x256xf32, #tpu.memory_space<vmem>>, vector<4x128xf32>
    tpu.vector_store %arg6[%c40_411, %c0_412], %276 {strides = array<i32>} : memref<256x256xf32, #tpu.memory_space<vmem>>, vector<4x128xf32>,
    %c1_413 = arith.constant 1 : index
    %c0_414 = arith.constant 0 : index
    %c5_415 = arith.constant 5 : index
    %278 = vector.load %arg2[%c1_413, %c0_414, %c5_415] : memref<2x4x145xf32, #tpu.memory_space<vmem>>, vector<1x4x128xf32>
    %279 = vector.shape_cast %278 : vector<1x4x128xf32> to vector<4x128xf32>
    %c40_416 = arith.constant 40 : index
    %c128_417 = arith.constant 128 : index
    %280 = vector.load %arg6[%c40_416, %c128_417] : memref<256x256xf32, #tpu.memory_space<vmem>>, vector<4x128xf32>
    tpu.vector_store %arg6[%c40_416, %c128_417], %279 {strides = array<i32>} : memref<256x256xf32, #tpu.memory_space<vmem>>, vector<4x128xf32>,
    %c0_418 = arith.constant 0 : index
    %c0_419 = arith.constant 0 : index
    %c6_420 = arith.constant 6 : index
    %281 = vector.load %arg1[%c0_418, %c0_419, %c6_420] : memref<2x4x145xf32, #tpu.memory_space<vmem>>, vector<1x4x128xf32>
    %282 = vector.shape_cast %281 : vector<1x4x128xf32> to vector<4x128xf32>
    %c44_421 = arith.constant 44 : index
    %c0_422 = arith.constant 0 : index
    %283 = vector.load %arg6[%c44_421, %c0_422] : memref<256x256xf32, #tpu.memory_space<vmem>>, vector<4x128xf32>
    tpu.vector_store %arg6[%c44_421, %c0_422], %282 {strides = array<i32>} : memref<256x256xf32, #tpu.memory_space<vmem>>, vector<4x128xf32>,
    %c1_423 = arith.constant 1 : index
    %c0_424 = arith.constant 0 : index
    %c6_425 = arith.constant 6 : index
    %284 = vector.load %arg1[%c1_423, %c0_424, %c6_425] : memref<2x4x145xf32, #tpu.memory_space<vmem>>, vector<1x4x128xf32>
    %285 = vector.shape_cast %284 : vector<1x4x128xf32> to vector<4x128xf32>
    %c44_426 = arith.constant 44 : index
    %c128_427 = arith.constant 128 : index
    %286 = vector.load %arg6[%c44_426, %c128_427] : memref<256x256xf32, #tpu.memory_space<vmem>>, vector<4x128xf32>
    tpu.vector_store %arg6[%c44_426, %c128_427], %285 {strides = array<i32>} : memref<256x256xf32, #tpu.memory_space<vmem>>, vector<4x128xf32>,
    %c0_428 = arith.constant 0 : index
    %c0_429 = arith.constant 0 : index
    %c6_430 = arith.constant 6 : index
    %287 = vector.load %arg2[%c0_428, %c0_429, %c6_430] : memref<2x4x145xf32, #tpu.memory_space<vmem>>, vector<1x4x128xf32>
    %288 = vector.shape_cast %287 : vector<1x4x128xf32> to vector<4x128xf32>
    %c48_431 = arith.constant 48 : index
    %c0_432 = arith.constant 0 : index
    %289 = vector.load %arg6[%c48_431, %c0_432] : memref<256x256xf32, #tpu.memory_space<vmem>>, vector<4x128xf32>
    tpu.vector_store %arg6[%c48_431, %c0_432], %288 {strides = array<i32>} : memref<256x256xf32, #tpu.memory_space<vmem>>, vector<4x128xf32>,
    %c1_433 = arith.constant 1 : index
    %c0_434 = arith.constant 0 : index
    %c6_435 = arith.constant 6 : index
    %290 = vector.load %arg2[%c1_433, %c0_434, %c6_435] : memref<2x4x145xf32, #tpu.memory_space<vmem>>, vector<1x4x128xf32>
    %291 = vector.shape_cast %290 : vector<1x4x128xf32> to vector<4x128xf32>
    %c48_436 = arith.constant 48 : index
    %c128_437 = arith.constant 128 : index
    %292 = vector.load %arg6[%c48_436, %c128_437] : memref<256x256xf32, #tpu.memory_space<vmem>>, vector<4x128xf32>
    tpu.vector_store %arg6[%c48_436, %c128_437], %291 {strides = array<i32>} : memref<256x256xf32, #tpu.memory_space<vmem>>, vector<4x128xf32>,
    %c0_438 = arith.constant 0 : index
    %c0_439 = arith.constant 0 : index
    %c7_440 = arith.constant 7 : index
    %293 = vector.load %arg1[%c0_438, %c0_439, %c7_440] : memref<2x4x145xf32, #tpu.memory_space<vmem>>, vector<1x4x128xf32>
    %294 = vector.shape_cast %293 : vector<1x4x128xf32> to vector<4x128xf32>
    %c52_441 = arith.constant 52 : index
    %c0_442 = arith.constant 0 : index
    %295 = vector.load %arg6[%c52_441, %c0_442] : memref<256x256xf32, #tpu.memory_space<vmem>>, vector<4x128xf32>
    tpu.vector_store %arg6[%c52_441, %c0_442], %294 {strides = array<i32>} : memref<256x256xf32, #tpu.memory_space<vmem>>, vector<4x128xf32>,
    %c1_443 = arith.constant 1 : index
    %c0_444 = arith.constant 0 : index
    %c7_445 = arith.constant 7 : index
    %296 = vector.load %arg1[%c1_443, %c0_444, %c7_445] : memref<2x4x145xf32, #tpu.memory_space<vmem>>, vector<1x4x128xf32>
    %297 = vector.shape_cast %296 : vector<1x4x128xf32> to vector<4x128xf32>
    %c52_446 = arith.constant 52 : index
    %c128_447 = arith.constant 128 : index
    %298 = vector.load %arg6[%c52_446, %c128_447] : memref<256x256xf32, #tpu.memory_space<vmem>>, vector<4x128xf32>
    tpu.vector_store %arg6[%c52_446, %c128_447], %297 {strides = array<i32>} : memref<256x256xf32, #tpu.memory_space<vmem>>, vector<4x128xf32>,
    %c0_448 = arith.constant 0 : index
    %c0_449 = arith.constant 0 : index
    %c7_450 = arith.constant 7 : index
    %299 = vector.load %arg2[%c0_448, %c0_449, %c7_450] : memref<2x4x145xf32, #tpu.memory_space<vmem>>, vector<1x4x128xf32>
    %300 = vector.shape_cast %299 : vector<1x4x128xf32> to vector<4x128xf32>
    %c56_451 = arith.constant 56 : index
    %c0_452 = arith.constant 0 : index
    %301 = vector.load %arg6[%c56_451, %c0_452] : memref<256x256xf32, #tpu.memory_space<vmem>>, vector<4x128xf32>
    tpu.vector_store %arg6[%c56_451, %c0_452], %300 {strides = array<i32>} : memref<256x256xf32, #tpu.memory_space<vmem>>, vector<4x128xf32>,
    %c1_453 = arith.constant 1 : index
    %c0_454 = arith.constant 0 : index
    %c7_455 = arith.constant 7 : index
    %302 = vector.load %arg2[%c1_453, %c0_454, %c7_455] : memref<2x4x145xf32, #tpu.memory_space<vmem>>, vector<1x4x128xf32>
    %303 = vector.shape_cast %302 : vector<1x4x128xf32> to vector<4x128xf32>
    %c56_456 = arith.constant 56 : index
    %c128_457 = arith.constant 128 : index
    %304 = vector.load %arg6[%c56_456, %c128_457] : memref<256x256xf32, #tpu.memory_space<vmem>>, vector<4x128xf32>
    tpu.vector_store %arg6[%c56_456, %c128_457], %303 {strides = array<i32>} : memref<256x256xf32, #tpu.memory_space<vmem>>, vector<4x128xf32>,
    %c0_458 = arith.constant 0 : index
    %c0_459 = arith.constant 0 : index
    %c8_460 = arith.constant 8 : index
    %305 = vector.load %arg1[%c0_458, %c0_459, %c8_460] : memref<2x4x145xf32, #tpu.memory_space<vmem>>, vector<1x4x128xf32>
    %306 = vector.shape_cast %305 : vector<1x4x128xf32> to vector<4x128xf32>
    %c60_461 = arith.constant 60 : index
    %c0_462 = arith.constant 0 : index
    %307 = vector.load %arg6[%c60_461, %c0_462] : memref<256x256xf32, #tpu.memory_space<vmem>>, vector<4x128xf32>
    tpu.vector_store %arg6[%c60_461, %c0_462], %306 {strides = array<i32>} : memref<256x256xf32, #tpu.memory_space<vmem>>, vector<4x128xf32>,
    %c1_463 = arith.constant 1 : index
    %c0_464 = arith.constant 0 : index
    %c8_465 = arith.constant 8 : index
    %308 = vector.load %arg1[%c1_463, %c0_464, %c8_465] : memref<2x4x145xf32, #tpu.memory_space<vmem>>, vector<1x4x128xf32>
    %309 = vector.shape_cast %308 : vector<1x4x128xf32> to vector<4x128xf32>
    %c60_466 = arith.constant 60 : index
    %c128_467 = arith.constant 128 : index
    %310 = vector.load %arg6[%c60_466, %c128_467] : memref<256x256xf32, #tpu.memory_space<vmem>>, vector<4x128xf32>
    tpu.vector_store %arg6[%c60_466, %c128_467], %309 {strides = array<i32>} : memref<256x256xf32, #tpu.memory_space<vmem>>, vector<4x128xf32>,
    %c0_468 = arith.constant 0 : index
    %c0_469 = arith.constant 0 : index
    %c8_470 = arith.constant 8 : index
    %311 = vector.load %arg2[%c0_468, %c0_469, %c8_470] : memref<2x4x145xf32, #tpu.memory_space<vmem>>, vector<1x4x128xf32>
    %312 = vector.shape_cast %311 : vector<1x4x128xf32> to vector<4x128xf32>
    %c64_471 = arith.constant 64 : index
    %c0_472 = arith.constant 0 : index
    %313 = vector.load %arg6[%c64_471, %c0_472] : memref<256x256xf32, #tpu.memory_space<vmem>>, vector<4x128xf32>
    tpu.vector_store %arg6[%c64_471, %c0_472], %312 {strides = array<i32>} : memref<256x256xf32, #tpu.memory_space<vmem>>, vector<4x128xf32>,
    %c1_473 = arith.constant 1 : index
    %c0_474 = arith.constant 0 : index
    %c8_475 = arith.constant 8 : index
    %314 = vector.load %arg2[%c1_473, %c0_474, %c8_475] : memref<2x4x145xf32, #tpu.memory_space<vmem>>, vector<1x4x128xf32>
    %315 = vector.shape_cast %314 : vector<1x4x128xf32> to vector<4x128xf32>
    %c64_476 = arith.constant 64 : index
    %c128_477 = arith.constant 128 : index
    %316 = vector.load %arg6[%c64_476, %c128_477] : memref<256x256xf32, #tpu.memory_space<vmem>>, vector<4x128xf32>
    tpu.vector_store %arg6[%c64_476, %c128_477], %315 {strides = array<i32>} : memref<256x256xf32, #tpu.memory_space<vmem>>, vector<4x128xf32>,
    %c0_478 = arith.constant 0 : index
    %c0_479 = arith.constant 0 : index
    %c9_480 = arith.constant 9 : index
    %317 = vector.load %arg1[%c0_478, %c0_479, %c9_480] : memref<2x4x145xf32, #tpu.memory_space<vmem>>, vector<1x4x128xf32>
    %318 = vector.shape_cast %317 : vector<1x4x128xf32> to vector<4x128xf32>
    %c68_481 = arith.constant 68 : index
    %c0_482 = arith.constant 0 : index
    %319 = vector.load %arg6[%c68_481, %c0_482] : memref<256x256xf32, #tpu.memory_space<vmem>>, vector<4x128xf32>
    tpu.vector_store %arg6[%c68_481, %c0_482], %318 {strides = array<i32>} : memref<256x256xf32, #tpu.memory_space<vmem>>, vector<4x128xf32>,
    %c1_483 = arith.constant 1 : index
    %c0_484 = arith.constant 0 : index
    %c9_485 = arith.constant 9 : index
    %320 = vector.load %arg1[%c1_483, %c0_484, %c9_485] : memref<2x4x145xf32, #tpu.memory_space<vmem>>, vector<1x4x128xf32>
    %321 = vector.shape_cast %320 : vector<1x4x128xf32> to vector<4x128xf32>
    %c68_486 = arith.constant 68 : index
    %c128_487 = arith.constant 128 : index
    %322 = vector.load %arg6[%c68_486, %c128_487] : memref<256x256xf32, #tpu.memory_space<vmem>>, vector<4x128xf32>
    tpu.vector_store %arg6[%c68_486, %c128_487], %321 {strides = array<i32>} : memref<256x256xf32, #tpu.memory_space<vmem>>, vector<4x128xf32>,
    %c0_488 = arith.constant 0 : index
    %c0_489 = arith.constant 0 : index
    %c9_490 = arith.constant 9 : index
    %323 = vector.load %arg2[%c0_488, %c0_489, %c9_490] : memref<2x4x145xf32, #tpu.memory_space<vmem>>, vector<1x4x128xf32>
    %324 = vector.shape_cast %323 : vector<1x4x128xf32> to vector<4x128xf32>
    %c72_491 = arith.constant 72 : index
    %c0_492 = arith.constant 0 : index
    %325 = vector.load %arg6[%c72_491, %c0_492] : memref<256x256xf32, #tpu.memory_space<vmem>>, vector<4x128xf32>
    tpu.vector_store %arg6[%c72_491, %c0_492], %324 {strides = array<i32>} : memref<256x256xf32, #tpu.memory_space<vmem>>, vector<4x128xf32>,
    %c1_493 = arith.constant 1 : index
    %c0_494 = arith.constant 0 : index
    %c9_495 = arith.constant 9 : index
    %326 = vector.load %arg2[%c1_493, %c0_494, %c9_495] : memref<2x4x145xf32, #tpu.memory_space<vmem>>, vector<1x4x128xf32>
    %327 = vector.shape_cast %326 : vector<1x4x128xf32> to vector<4x128xf32>
    %c72_496 = arith.constant 72 : index
    %c128_497 = arith.constant 128 : index
    %328 = vector.load %arg6[%c72_496, %c128_497] : memref<256x256xf32, #tpu.memory_space<vmem>>, vector<4x128xf32>
    tpu.vector_store %arg6[%c72_496, %c128_497], %327 {strides = array<i32>} : memref<256x256xf32, #tpu.memory_space<vmem>>, vector<4x128xf32>,
    %c0_498 = arith.constant 0 : index
    %c0_499 = arith.constant 0 : index
    %c10_500 = arith.constant 10 : index
    %329 = vector.load %arg1[%c0_498, %c0_499, %c10_500] : memref<2x4x145xf32, #tpu.memory_space<vmem>>, vector<1x4x128xf32>
    %330 = vector.shape_cast %329 : vector<1x4x128xf32> to vector<4x128xf32>
    %c76_501 = arith.constant 76 : index
    %c0_502 = arith.constant 0 : index
    %331 = vector.load %arg6[%c76_501, %c0_502] : memref<256x256xf32, #tpu.memory_space<vmem>>, vector<4x128xf32>
    tpu.vector_store %arg6[%c76_501, %c0_502], %330 {strides = array<i32>} : memref<256x256xf32, #tpu.memory_space<vmem>>, vector<4x128xf32>,
    %c1_503 = arith.constant 1 : index
    %c0_504 = arith.constant 0 : index
    %c10_505 = arith.constant 10 : index
    %332 = vector.load %arg1[%c1_503, %c0_504, %c10_505] : memref<2x4x145xf32, #tpu.memory_space<vmem>>, vector<1x4x128xf32>
    %333 = vector.shape_cast %332 : vector<1x4x128xf32> to vector<4x128xf32>
    %c76_506 = arith.constant 76 : index
    %c128_507 = arith.constant 128 : index
    %334 = vector.load %arg6[%c76_506, %c128_507] : memref<256x256xf32, #tpu.memory_space<vmem>>, vector<4x128xf32>
    tpu.vector_store %arg6[%c76_506, %c128_507], %333 {strides = array<i32>} : memref<256x256xf32, #tpu.memory_space<vmem>>, vector<4x128xf32>,
    %c0_508 = arith.constant 0 : index
    %c0_509 = arith.constant 0 : index
    %c10_510 = arith.constant 10 : index
    %335 = vector.load %arg2[%c0_508, %c0_509, %c10_510] : memref<2x4x145xf32, #tpu.memory_space<vmem>>, vector<1x4x128xf32>
    %336 = vector.shape_cast %335 : vector<1x4x128xf32> to vector<4x128xf32>
    %c80_511 = arith.constant 80 : index
    %c0_512 = arith.constant 0 : index
    %337 = vector.load %arg6[%c80_511, %c0_512] : memref<256x256xf32, #tpu.memory_space<vmem>>, vector<4x128xf32>
    tpu.vector_store %arg6[%c80_511, %c0_512], %336 {strides = array<i32>} : memref<256x256xf32, #tpu.memory_space<vmem>>, vector<4x128xf32>,
    %c1_513 = arith.constant 1 : index
    %c0_514 = arith.constant 0 : index
    %c10_515 = arith.constant 10 : index
    %338 = vector.load %arg2[%c1_513, %c0_514, %c10_515] : memref<2x4x145xf32, #tpu.memory_space<vmem>>, vector<1x4x128xf32>
    %339 = vector.shape_cast %338 : vector<1x4x128xf32> to vector<4x128xf32>
    %c80_516 = arith.constant 80 : index
    %c128_517 = arith.constant 128 : index
    %340 = vector.load %arg6[%c80_516, %c128_517] : memref<256x256xf32, #tpu.memory_space<vmem>>, vector<4x128xf32>
    tpu.vector_store %arg6[%c80_516, %c128_517], %339 {strides = array<i32>} : memref<256x256xf32, #tpu.memory_space<vmem>>, vector<4x128xf32>,
    %c0_518 = arith.constant 0 : index
    %c0_519 = arith.constant 0 : index
    %c11_520 = arith.constant 11 : index
    %341 = vector.load %arg1[%c0_518, %c0_519, %c11_520] : memref<2x4x145xf32, #tpu.memory_space<vmem>>, vector<1x4x128xf32>
    %342 = vector.shape_cast %341 : vector<1x4x128xf32> to vector<4x128xf32>
    %c84_521 = arith.constant 84 : index
    %c0_522 = arith.constant 0 : index
    %343 = vector.load %arg6[%c84_521, %c0_522] : memref<256x256xf32, #tpu.memory_space<vmem>>, vector<4x128xf32>
    tpu.vector_store %arg6[%c84_521, %c0_522], %342 {strides = array<i32>} : memref<256x256xf32, #tpu.memory_space<vmem>>, vector<4x128xf32>,
    %c1_523 = arith.constant 1 : index
    %c0_524 = arith.constant 0 : index
    %c11_525 = arith.constant 11 : index
    %344 = vector.load %arg1[%c1_523, %c0_524, %c11_525] : memref<2x4x145xf32, #tpu.memory_space<vmem>>, vector<1x4x128xf32>
    %345 = vector.shape_cast %344 : vector<1x4x128xf32> to vector<4x128xf32>
    %c84_526 = arith.constant 84 : index
    %c128_527 = arith.constant 128 : index
    %346 = vector.load %arg6[%c84_526, %c128_527] : memref<256x256xf32, #tpu.memory_space<vmem>>, vector<4x128xf32>
    tpu.vector_store %arg6[%c84_526, %c128_527], %345 {strides = array<i32>} : memref<256x256xf32, #tpu.memory_space<vmem>>, vector<4x128xf32>,
    %c0_528 = arith.constant 0 : index
    %c0_529 = arith.constant 0 : index
    %c11_530 = arith.constant 11 : index
    %347 = vector.load %arg2[%c0_528, %c0_529, %c11_530] : memref<2x4x145xf32, #tpu.memory_space<vmem>>, vector<1x4x128xf32>
    %348 = vector.shape_cast %347 : vector<1x4x128xf32> to vector<4x128xf32>
    %c88_531 = arith.constant 88 : index
    %c0_532 = arith.constant 0 : index
    %349 = vector.load %arg6[%c88_531, %c0_532] : memref<256x256xf32, #tpu.memory_space<vmem>>, vector<4x128xf32>
    tpu.vector_store %arg6[%c88_531, %c0_532], %348 {strides = array<i32>} : memref<256x256xf32, #tpu.memory_space<vmem>>, vector<4x128xf32>,
    %c1_533 = arith.constant 1 : index
    %c0_534 = arith.constant 0 : index
    %c11_535 = arith.constant 11 : index
    %350 = vector.load %arg2[%c1_533, %c0_534, %c11_535] : memref<2x4x145xf32, #tpu.memory_space<vmem>>, vector<1x4x128xf32>
    %351 = vector.shape_cast %350 : vector<1x4x128xf32> to vector<4x128xf32>
    %c88_536 = arith.constant 88 : index
    %c128_537 = arith.constant 128 : index
    %352 = vector.load %arg6[%c88_536, %c128_537] : memref<256x256xf32, #tpu.memory_space<vmem>>, vector<4x128xf32>
    tpu.vector_store %arg6[%c88_536, %c128_537], %351 {strides = array<i32>} : memref<256x256xf32, #tpu.memory_space<vmem>>, vector<4x128xf32>,
    %c0_538 = arith.constant 0 : index
    %c0_539 = arith.constant 0 : index
    %c12_540 = arith.constant 12 : index
    %353 = vector.load %arg1[%c0_538, %c0_539, %c12_540] : memref<2x4x145xf32, #tpu.memory_space<vmem>>, vector<1x4x128xf32>
    %354 = vector.shape_cast %353 : vector<1x4x128xf32> to vector<4x128xf32>
    %c92_541 = arith.constant 92 : index
    %c0_542 = arith.constant 0 : index
    %355 = vector.load %arg6[%c92_541, %c0_542] : memref<256x256xf32, #tpu.memory_space<vmem>>, vector<4x128xf32>
    tpu.vector_store %arg6[%c92_541, %c0_542], %354 {strides = array<i32>} : memref<256x256xf32, #tpu.memory_space<vmem>>, vector<4x128xf32>,
    %c1_543 = arith.constant 1 : index
    %c0_544 = arith.constant 0 : index
    %c12_545 = arith.constant 12 : index
    %356 = vector.load %arg1[%c1_543, %c0_544, %c12_545] : memref<2x4x145xf32, #tpu.memory_space<vmem>>, vector<1x4x128xf32>
    %357 = vector.shape_cast %356 : vector<1x4x128xf32> to vector<4x128xf32>
    %c92_546 = arith.constant 92 : index
    %c128_547 = arith.constant 128 : index
    %358 = vector.load %arg6[%c92_546, %c128_547] : memref<256x256xf32, #tpu.memory_space<vmem>>, vector<4x128xf32>
    tpu.vector_store %arg6[%c92_546, %c128_547], %357 {strides = array<i32>} : memref<256x256xf32, #tpu.memory_space<vmem>>, vector<4x128xf32>,
    %c0_548 = arith.constant 0 : index
    %c0_549 = arith.constant 0 : index
    %c12_550 = arith.constant 12 : index
    %359 = vector.load %arg2[%c0_548, %c0_549, %c12_550] : memref<2x4x145xf32, #tpu.memory_space<vmem>>, vector<1x4x128xf32>
    %360 = vector.shape_cast %359 : vector<1x4x128xf32> to vector<4x128xf32>
    %c96_551 = arith.constant 96 : index
    %c0_552 = arith.constant 0 : index
    %361 = vector.load %arg6[%c96_551, %c0_552] : memref<256x256xf32, #tpu.memory_space<vmem>>, vector<4x128xf32>
    tpu.vector_store %arg6[%c96_551, %c0_552], %360 {strides = array<i32>} : memref<256x256xf32, #tpu.memory_space<vmem>>, vector<4x128xf32>,
    %c1_553 = arith.constant 1 : index
    %c0_554 = arith.constant 0 : index
    %c12_555 = arith.constant 12 : index
    %362 = vector.load %arg2[%c1_553, %c0_554, %c12_555] : memref<2x4x145xf32, #tpu.memory_space<vmem>>, vector<1x4x128xf32>
    %363 = vector.shape_cast %362 : vector<1x4x128xf32> to vector<4x128xf32>
    %c96_556 = arith.constant 96 : index
    %c128_557 = arith.constant 128 : index
    %364 = vector.load %arg6[%c96_556, %c128_557] : memref<256x256xf32, #tpu.memory_space<vmem>>, vector<4x128xf32>
    tpu.vector_store %arg6[%c96_556, %c128_557], %363 {strides = array<i32>} : memref<256x256xf32, #tpu.memory_space<vmem>>, vector<4x128xf32>,
    %c0_558 = arith.constant 0 : index
    %c0_559 = arith.constant 0 : index
    %c13_560 = arith.constant 13 : index
    %365 = vector.load %arg1[%c0_558, %c0_559, %c13_560] : memref<2x4x145xf32, #tpu.memory_space<vmem>>, vector<1x4x128xf32>
    %366 = vector.shape_cast %365 : vector<1x4x128xf32> to vector<4x128xf32>
    %c100_561 = arith.constant 100 : index
    %c0_562 = arith.constant 0 : index
    %367 = vector.load %arg6[%c100_561, %c0_562] : memref<256x256xf32, #tpu.memory_space<vmem>>, vector<4x128xf32>
    tpu.vector_store %arg6[%c100_561, %c0_562], %366 {strides = array<i32>} : memref<256x256xf32, #tpu.memory_space<vmem>>, vector<4x128xf32>,
    %c1_563 = arith.constant 1 : index
    %c0_564 = arith.constant 0 : index
    %c13_565 = arith.constant 13 : index
    %368 = vector.load %arg1[%c1_563, %c0_564, %c13_565] : memref<2x4x145xf32, #tpu.memory_space<vmem>>, vector<1x4x128xf32>
    %369 = vector.shape_cast %368 : vector<1x4x128xf32> to vector<4x128xf32>
    %c100_566 = arith.constant 100 : index
    %c128_567 = arith.constant 128 : index
    %370 = vector.load %arg6[%c100_566, %c128_567] : memref<256x256xf32, #tpu.memory_space<vmem>>, vector<4x128xf32>
    tpu.vector_store %arg6[%c100_566, %c128_567], %369 {strides = array<i32>} : memref<256x256xf32, #tpu.memory_space<vmem>>, vector<4x128xf32>,
    %c0_568 = arith.constant 0 : index
    %c0_569 = arith.constant 0 : index
    %c13_570 = arith.constant 13 : index
    %371 = vector.load %arg2[%c0_568, %c0_569, %c13_570] : memref<2x4x145xf32, #tpu.memory_space<vmem>>, vector<1x4x128xf32>
    %372 = vector.shape_cast %371 : vector<1x4x128xf32> to vector<4x128xf32>
    %c104_571 = arith.constant 104 : index
    %c0_572 = arith.constant 0 : index
    %373 = vector.load %arg6[%c104_571, %c0_572] : memref<256x256xf32, #tpu.memory_space<vmem>>, vector<4x128xf32>
    tpu.vector_store %arg6[%c104_571, %c0_572], %372 {strides = array<i32>} : memref<256x256xf32, #tpu.memory_space<vmem>>, vector<4x128xf32>,
    %c1_573 = arith.constant 1 : index
    %c0_574 = arith.constant 0 : index
    %c13_575 = arith.constant 13 : index
    %374 = vector.load %arg2[%c1_573, %c0_574, %c13_575] : memref<2x4x145xf32, #tpu.memory_space<vmem>>, vector<1x4x128xf32>
    %375 = vector.shape_cast %374 : vector<1x4x128xf32> to vector<4x128xf32>
    %c104_576 = arith.constant 104 : index
    %c128_577 = arith.constant 128 : index
    %376 = vector.load %arg6[%c104_576, %c128_577] : memref<256x256xf32, #tpu.memory_space<vmem>>, vector<4x128xf32>
    tpu.vector_store %arg6[%c104_576, %c128_577], %375 {strides = array<i32>} : memref<256x256xf32, #tpu.memory_space<vmem>>, vector<4x128xf32>,
    %c0_578 = arith.constant 0 : index
    %c0_579 = arith.constant 0 : index
    %c14_580 = arith.constant 14 : index
    %377 = vector.load %arg1[%c0_578, %c0_579, %c14_580] : memref<2x4x145xf32, #tpu.memory_space<vmem>>, vector<1x4x128xf32>
    %378 = vector.shape_cast %377 : vector<1x4x128xf32> to vector<4x128xf32>
    %c108_581 = arith.constant 108 : index
    %c0_582 = arith.constant 0 : index
    %379 = vector.load %arg6[%c108_581, %c0_582] : memref<256x256xf32, #tpu.memory_space<vmem>>, vector<4x128xf32>
    tpu.vector_store %arg6[%c108_581, %c0_582], %378 {strides = array<i32>} : memref<256x256xf32, #tpu.memory_space<vmem>>, vector<4x128xf32>,
    %c1_583 = arith.constant 1 : index
    %c0_584 = arith.constant 0 : index
    %c14_585 = arith.constant 14 : index
    %380 = vector.load %arg1[%c1_583, %c0_584, %c14_585] : memref<2x4x145xf32, #tpu.memory_space<vmem>>, vector<1x4x128xf32>
    %381 = vector.shape_cast %380 : vector<1x4x128xf32> to vector<4x128xf32>
    %c108_586 = arith.constant 108 : index
    %c128_587 = arith.constant 128 : index
    %382 = vector.load %arg6[%c108_586, %c128_587] : memref<256x256xf32, #tpu.memory_space<vmem>>, vector<4x128xf32>
    tpu.vector_store %arg6[%c108_586, %c128_587], %381 {strides = array<i32>} : memref<256x256xf32, #tpu.memory_space<vmem>>, vector<4x128xf32>,
    %c0_588 = arith.constant 0 : index
    %c0_589 = arith.constant 0 : index
    %c14_590 = arith.constant 14 : index
    %383 = vector.load %arg2[%c0_588, %c0_589, %c14_590] : memref<2x4x145xf32, #tpu.memory_space<vmem>>, vector<1x4x128xf32>
    %384 = vector.shape_cast %383 : vector<1x4x128xf32> to vector<4x128xf32>
    %c112_591 = arith.constant 112 : index
    %c0_592 = arith.constant 0 : index
    %385 = vector.load %arg6[%c112_591, %c0_592] : memref<256x256xf32, #tpu.memory_space<vmem>>, vector<4x128xf32>
    tpu.vector_store %arg6[%c112_591, %c0_592], %384 {strides = array<i32>} : memref<256x256xf32, #tpu.memory_space<vmem>>, vector<4x128xf32>,
    %c1_593 = arith.constant 1 : index
    %c0_594 = arith.constant 0 : index
    %c14_595 = arith.constant 14 : index
    %386 = vector.load %arg2[%c1_593, %c0_594, %c14_595] : memref<2x4x145xf32, #tpu.memory_space<vmem>>, vector<1x4x128xf32>
    %387 = vector.shape_cast %386 : vector<1x4x128xf32> to vector<4x128xf32>
    %c112_596 = arith.constant 112 : index
    %c128_597 = arith.constant 128 : index
    %388 = vector.load %arg6[%c112_596, %c128_597] : memref<256x256xf32, #tpu.memory_space<vmem>>, vector<4x128xf32>
    tpu.vector_store %arg6[%c112_596, %c128_597], %387 {strides = array<i32>} : memref<256x256xf32, #tpu.memory_space<vmem>>, vector<4x128xf32>,
    %c0_598 = arith.constant 0 : index
    %c0_599 = arith.constant 0 : index
    %c15_600 = arith.constant 15 : index
    %389 = vector.load %arg1[%c0_598, %c0_599, %c15_600] : memref<2x4x145xf32, #tpu.memory_space<vmem>>, vector<1x4x128xf32>
    %390 = vector.shape_cast %389 : vector<1x4x128xf32> to vector<4x128xf32>
    %c116_601 = arith.constant 116 : index
    %c0_602 = arith.constant 0 : index
    %391 = vector.load %arg6[%c116_601, %c0_602] : memref<256x256xf32, #tpu.memory_space<vmem>>, vector<4x128xf32>
    tpu.vector_store %arg6[%c116_601, %c0_602], %390 {strides = array<i32>} : memref<256x256xf32, #tpu.memory_space<vmem>>, vector<4x128xf32>,
    %c1_603 = arith.constant 1 : index
    %c0_604 = arith.constant 0 : index
    %c15_605 = arith.constant 15 : index
    %392 = vector.load %arg1[%c1_603, %c0_604, %c15_605] : memref<2x4x145xf32, #tpu.memory_space<vmem>>, vector<1x4x128xf32>
    %393 = vector.shape_cast %392 : vector<1x4x128xf32> to vector<4x128xf32>
    %c116_606 = arith.constant 116 : index
    %c128_607 = arith.constant 128 : index
    %394 = vector.load %arg6[%c116_606, %c128_607] : memref<256x256xf32, #tpu.memory_space<vmem>>, vector<4x128xf32>
    tpu.vector_store %arg6[%c116_606, %c128_607], %393 {strides = array<i32>} : memref<256x256xf32, #tpu.memory_space<vmem>>, vector<4x128xf32>,
    %c0_608 = arith.constant 0 : index
    %c0_609 = arith.constant 0 : index
    %c15_610 = arith.constant 15 : index
    %395 = vector.load %arg2[%c0_608, %c0_609, %c15_610] : memref<2x4x145xf32, #tpu.memory_space<vmem>>, vector<1x4x128xf32>
    %396 = vector.shape_cast %395 : vector<1x4x128xf32> to vector<4x128xf32>
    %c120_611 = arith.constant 120 : index
    %c0_612 = arith.constant 0 : index
    %397 = vector.load %arg6[%c120_611, %c0_612] : memref<256x256xf32, #tpu.memory_space<vmem>>, vector<4x128xf32>
    tpu.vector_store %arg6[%c120_611, %c0_612], %396 {strides = array<i32>} : memref<256x256xf32, #tpu.memory_space<vmem>>, vector<4x128xf32>,
    %c1_613 = arith.constant 1 : index
    %c0_614 = arith.constant 0 : index
    %c15_615 = arith.constant 15 : index
    %398 = vector.load %arg2[%c1_613, %c0_614, %c15_615] : memref<2x4x145xf32, #tpu.memory_space<vmem>>, vector<1x4x128xf32>
    %399 = vector.shape_cast %398 : vector<1x4x128xf32> to vector<4x128xf32>
    %c120_616 = arith.constant 120 : index
    %c128_617 = arith.constant 128 : index
    %400 = vector.load %arg6[%c120_616, %c128_617] : memref<256x256xf32, #tpu.memory_space<vmem>>, vector<4x128xf32>
    tpu.vector_store %arg6[%c120_616, %c128_617], %399 {strides = array<i32>} : memref<256x256xf32, #tpu.memory_space<vmem>>, vector<4x128xf32>,
    %c0_618 = arith.constant 0 : index
    %c0_619 = arith.constant 0 : index
    %c16_620 = arith.constant 16 : index
    %401 = vector.load %arg1[%c0_618, %c0_619, %c16_620] : memref<2x4x145xf32, #tpu.memory_space<vmem>>, vector<1x4x128xf32>
    %402 = vector.shape_cast %401 : vector<1x4x128xf32> to vector<4x128xf32>
    %c124_621 = arith.constant 124 : index
    %c0_622 = arith.constant 0 : index
    %403 = vector.load %arg6[%c124_621, %c0_622] : memref<256x256xf32, #tpu.memory_space<vmem>>, vector<4x128xf32>
    tpu.vector_store %arg6[%c124_621, %c0_622], %402 {strides = array<i32>} : memref<256x256xf32, #tpu.memory_space<vmem>>, vector<4x128xf32>,
    %c1_623 = arith.constant 1 : index
    %c0_624 = arith.constant 0 : index
    %c16_625 = arith.constant 16 : index
    %404 = vector.load %arg1[%c1_623, %c0_624, %c16_625] : memref<2x4x145xf32, #tpu.memory_space<vmem>>, vector<1x4x128xf32>
    %405 = vector.shape_cast %404 : vector<1x4x128xf32> to vector<4x128xf32>
    %c124_626 = arith.constant 124 : index
    %c128_627 = arith.constant 128 : index
    %406 = vector.load %arg6[%c124_626, %c128_627] : memref<256x256xf32, #tpu.memory_space<vmem>>, vector<4x128xf32>
    tpu.vector_store %arg6[%c124_626, %c128_627], %405 {strides = array<i32>} : memref<256x256xf32, #tpu.memory_space<vmem>>, vector<4x128xf32>,
    %c0_628 = arith.constant 0 : index
    %c0_629 = arith.constant 0 : index
    %c16_630 = arith.constant 16 : index
    %407 = vector.load %arg2[%c0_628, %c0_629, %c16_630] : memref<2x4x145xf32, #tpu.memory_space<vmem>>, vector<1x4x128xf32>
    %408 = vector.shape_cast %407 : vector<1x4x128xf32> to vector<4x128xf32>
    %c128_631 = arith.constant 128 : index
    %c0_632 = arith.constant 0 : index
    %409 = vector.load %arg6[%c128_631, %c0_632] : memref<256x256xf32, #tpu.memory_space<vmem>>, vector<4x128xf32>
    tpu.vector_store %arg6[%c128_631, %c0_632], %408 {strides = array<i32>} : memref<256x256xf32, #tpu.memory_space<vmem>>, vector<4x128xf32>,
    %c1_633 = arith.constant 1 : index
    %c0_634 = arith.constant 0 : index
    %c16_635 = arith.constant 16 : index
    %410 = vector.load %arg2[%c1_633, %c0_634, %c16_635] : memref<2x4x145xf32, #tpu.memory_space<vmem>>, vector<1x4x128xf32>
    %411 = vector.shape_cast %410 : vector<1x4x128xf32> to vector<4x128xf32>
    %c128_636 = arith.constant 128 : index
    %c128_637 = arith.constant 128 : index
    %412 = vector.load %arg6[%c128_636, %c128_637] : memref<256x256xf32, #tpu.memory_space<vmem>>, vector<4x128xf32>
    tpu.vector_store %arg6[%c128_636, %c128_637], %411 {strides = array<i32>} : memref<256x256xf32, #tpu.memory_space<vmem>>, vector<4x128xf32>,
    %c0_638 = arith.constant 0 : index
    %c0_639 = arith.constant 0 : index
    %c17_640 = arith.constant 17 : index
    %413 = vector.load %arg1[%c0_638, %c0_639, %c17_640] : memref<2x4x145xf32, #tpu.memory_space<vmem>>, vector<1x4x128xf32>
    %414 = vector.shape_cast %413 : vector<1x4x128xf32> to vector<4x128xf32>
    %c132_641 = arith.constant 132 : index
    %c0_642 = arith.constant 0 : index
    %415 = vector.load %arg6[%c132_641, %c0_642] : memref<256x256xf32, #tpu.memory_space<vmem>>, vector<4x128xf32>
    tpu.vector_store %arg6[%c132_641, %c0_642], %414 {strides = array<i32>} : memref<256x256xf32, #tpu.memory_space<vmem>>, vector<4x128xf32>,
    %c1_643 = arith.constant 1 : index
    %c0_644 = arith.constant 0 : index
    %c17_645 = arith.constant 17 : index
    %416 = vector.load %arg1[%c1_643, %c0_644, %c17_645] : memref<2x4x145xf32, #tpu.memory_space<vmem>>, vector<1x4x128xf32>
    %417 = vector.shape_cast %416 : vector<1x4x128xf32> to vector<4x128xf32>
    %c132_646 = arith.constant 132 : index
    %c128_647 = arith.constant 128 : index
    %418 = vector.load %arg6[%c132_646, %c128_647] : memref<256x256xf32, #tpu.memory_space<vmem>>, vector<4x128xf32>
    tpu.vector_store %arg6[%c132_646, %c128_647], %417 {strides = array<i32>} : memref<256x256xf32, #tpu.memory_space<vmem>>, vector<4x128xf32>,
    %c0_648 = arith.constant 0 : index
    %c0_649 = arith.constant 0 : index
    %c17_650 = arith.constant 17 : index
    %419 = vector.load %arg2[%c0_648, %c0_649, %c17_650] : memref<2x4x145xf32, #tpu.memory_space<vmem>>, vector<1x4x128xf32>
    %420 = vector.shape_cast %419 : vector<1x4x128xf32> to vector<4x128xf32>
    %c136_651 = arith.constant 136 : index
    %c0_652 = arith.constant 0 : index
    %421 = vector.load %arg6[%c136_651, %c0_652] : memref<256x256xf32, #tpu.memory_space<vmem>>, vector<4x128xf32>
    tpu.vector_store %arg6[%c136_651, %c0_652], %420 {strides = array<i32>} : memref<256x256xf32, #tpu.memory_space<vmem>>, vector<4x128xf32>,
    %c1_653 = arith.constant 1 : index
    %c0_654 = arith.constant 0 : index
    %c17_655 = arith.constant 17 : index
    %422 = vector.load %arg2[%c1_653, %c0_654, %c17_655] : memref<2x4x145xf32, #tpu.memory_space<vmem>>, vector<1x4x128xf32>
    %423 = vector.shape_cast %422 : vector<1x4x128xf32> to vector<4x128xf32>
    %c136_656 = arith.constant 136 : index
    %c128_657 = arith.constant 128 : index
    %424 = vector.load %arg6[%c136_656, %c128_657] : memref<256x256xf32, #tpu.memory_space<vmem>>, vector<4x128xf32>
    tpu.vector_store %arg6[%c136_656, %c128_657], %423 {strides = array<i32>} : memref<256x256xf32, #tpu.memory_space<vmem>>, vector<4x128xf32>,
    %c0_658 = arith.constant 0 : index
    %c0_659 = arith.constant 0 : index
    %425 = vector.load %arg6[%c0_658, %c0_659] : memref<256x256xf32, #tpu.memory_space<vmem>>, vector<256x256xf32>
    %cst_660 = arith.constant dense<0.000000e+00> : vector<32x256xf32>
    %426 = tpu.matmul %0, %425, %cst_660 {dimension_numbers = #tpu.dot_dimension_numbers<[1], [0], [0], [1], [0, 0, 1, 1], [], []>} : vector<32x256xf32>, vector<256x256xf32>, vector<32x256xf32> -> vector<32x256xf32>
    %427 = arith.maximumf %214, %426 : vector<32x256xf32>
    %c0_661 = arith.constant 0 : index
    %c0_662 = arith.constant 0 : index
    %428 = vector.load %arg4[%c0_661, %c0_662] : memref<32x1xf32, #tpu.memory_space<vmem>>, vector<32x1xf32>
    %429 = vector.broadcast %428 : vector<32x1xf32> to vector<32x256xf32>
    %430 = arith.addf %427, %429 : vector<32x256xf32>
    %cst_663 = arith.constant 0.000000e+00 : f32
    %431 = vector.broadcast %cst_663 : f32 to vector<32x256xf32>
    %432 = arith.maximumf %430, %431 : vector<32x256xf32>
    %433 = vector.extract_strided_slice %432 {offsets = [0, 0], sizes = [32, 128], strides = [1, 1]} : vector<32x256xf32> to vector<32x128xf32>
    %c0_664 = arith.constant 0 : index
    %c0_665 = arith.constant 0 : index
    %c0_666 = arith.constant 0 : index
    %434 = vector.load %arg5[%c0_664, %c0_665, %c0_666] : memref<2x32x128xf32, #tpu.memory_space<vmem>>, vector<1x32x128xf32>
    %435 = vector.shape_cast %434 : vector<1x32x128xf32> to vector<32x128xf32>
    %436 = vector.shape_cast %433 : vector<32x128xf32> to vector<1x32x128xf32>
    tpu.vector_store %arg5[%c0_664, %c0_665, %c0_666], %436 {strides = array<i32>} : memref<2x32x128xf32, #tpu.memory_space<vmem>>, vector<1x32x128xf32>,
    %437 = vector.extract_strided_slice %432 {offsets = [0, 128], sizes = [32, 128], strides = [1, 1]} : vector<32x256xf32> to vector<32x128xf32>
    %c1_667 = arith.constant 1 : index
    %c0_668 = arith.constant 0 : index
    %c0_669 = arith.constant 0 : index
    %438 = vector.load %arg5[%c1_667, %c0_668, %c0_669] : memref<2x32x128xf32, #tpu.memory_space<vmem>>, vector<1x32x128xf32>
    %439 = vector.shape_cast %438 : vector<1x32x128xf32> to vector<32x128xf32>
    %440 = vector.shape_cast %437 : vector<32x128xf32> to vector<1x32x128xf32>
    tpu.vector_store %arg5[%c1_667, %c0_668, %c0_669], %440 {strides = array<i32>} : memref<2x32x128xf32, #tpu.memory_space<vmem>>, vector<1x32x128xf32>,
    return
  }
  func.func @transform_0(%arg0: i32) -> (i32, i32, i32) {
    %c0_i32 = arith.constant 0 : i32
    %c0_i32_0 = arith.constant 0 : i32
    %c0_i32_1 = arith.constant 0 : i32
    return %arg0, %c0_i32, %c0_i32_0 : i32, i32, i32
  }
  func.func @transform_1(%arg0: i32) -> (i32, i32, i32) {
    %c0_i32 = arith.constant 0 : i32
    %c0_i32_0 = arith.constant 0 : i32
    %c0_i32_1 = arith.constant 0 : i32
    return %arg0, %c0_i32, %c0_i32_0 : i32, i32, i32
  }
  func.func @transform_2(%arg0: i32) -> (i32, i32) {
    %c0_i32 = arith.constant 0 : i32
    %c0_i32_0 = arith.constant 0 : i32
    %c0_i32_1 = arith.constant 0 : i32
    return %c0_i32, %c0_i32_0 : i32, i32
  }
  func.func @transform_3(%arg0: i32) -> (i32, i32) {
    %c0_i32 = arith.constant 0 : i32
    %c0_i32_0 = arith.constant 0 : i32
    %c0_i32_1 = arith.constant 0 : i32
    return %c0_i32, %c0_i32_0 : i32, i32
  }
  func.func @transform_4(%arg0: i32) -> (i32, i32, i32) {
    %c0_i32 = arith.constant 0 : i32
    %c0_i32_0 = arith.constant 0 : i32
    %c0_i32_1 = arith.constant 0 : i32
    return %arg0, %c0_i32, %c0_i32_0 : i32, i32, i32
  }
}

</mosaic_0001>

<llo_original>
// kernel: inception_forward.1
$region0: #{inception_forward.1}
  #allocation0 [shape = 'u32[]', space=smem, size = 0x4, offset = 0x4, fixed_abs, tag = 'smem constant byte address 0x4 - core index']
  #allocation1 [shape = 'u32[144,128]{1,0:T(1,128)}', space=vmem, size = 0x12000, scoped, tag = 'internal scratch']
  #allocation2 [shape = 'f32[256,256]{1,0:T(8,128)}', space=vmem, size = 0x40000, scoped, tag = 'scratch operand']
  %s0 = inlined_call_operand.vmem [shape: f32[8,4,145], index: 0, kind: input, shape index: {}]
  %s1 = inlined_call_operand.vmem [shape: f32[8,4,145], index: 1, kind: input, shape index: {}]
  %s2 = inlined_call_operand.vmem [shape: f32[32,256], index: 2, kind: input, shape index: {}]
  %s3 = inlined_call_operand.vmem [shape: f32[32,1], index: 3, kind: input, shape index: {}]
  %s4 = inlined_call_operand.hbm [shape: f32[8,32,128], index: 4, kind: output, shape index: {}]
  %s5 = sld [smem:[#allocation0]]
  $region49: #{inception_forward.1} parent=0
    _
  %s7 = ssub.s32 1, %s5
  %s8 = scalar_select 0, %s7, %s5
  $region1: #{inception_forward.1} parent=0
    #allocation3 [shape = 'u8[65536]{0}', space=vmem, size = 0x10000, scoped, tag = 'output window, operand 0']
    #allocation4 [shape = 's32[2]{0}', space=sflag, size = 0x8, scoped, tag = 'scoped memory for inception_forward.1']
    %9 = vsyncpa [#allocation4], 0
    %s10 = scalar_lea.sflag [#allocation4], 1
    %11 = vsyncpa %s10, 0
    loop: start=0, step=1, limit=6
    $region2: #{inception_forward.1} parent=1 // loop_pre_header
      _
    $region3: #{inception_forward.1} parent=1 // loop_header
      %s13 = sphi 0, %s17
      %p14 = scmp.ge.s32.totalorder %s13, 6
      %s23 = sphi 0, %s25
      %s26 = sphi 0, %s23
      %s27 = sphi 0, %s26
      %s43 = sphi 0, %s27
      %s49 = sphi 0, %s51
      %s52 = sphi 0, %s49
      %s53 = sphi 0, %s52
      %s69 = sphi 0, %s53
      %s73 = sphi 0, %s73
      %s75 = sphi 0, %s73
      %s76 = sphi 0, %s75
      %s90 = sphi 0, %s76
      %s94 = sphi 0, %s94
      %s96 = sphi 0, %s94
      %s97 = sphi 0, %s96
      %s111 = sphi 0, %s97
      %s117 = sphi 0, %s119
      %s120 = sphi 0, %s117
      %s121 = sphi 0, %s120
      %s137 = sphi 0, %s121
    $region4: #{inception_forward.1} parent=1 // loop_header_branch
      %16 = sbr.rel (%p14) target = $region8
    $region5: #{inception_forward.1} parent=1 // loop_body
      %s18 = ssub.s32 %s13, 1
      %s19 = ssub.s32 %s13, 2
      %s20 = sadd.s32 %s13, 1
      %s21 = ssub.s32 %s13, %s20
      %p22 = scmp.eq.s32.totalorder %s21, 0
      %s24 = sadd.s32 %s23, 1
      %s25 = scalar_select %p22, %s23, %s24
      %p28 = pneg %p22
      %p29 = scmp.eq.s32.totalorder %s13, 3
      %p30 = por %p28, %p29
      %p31 = scmp.ne.s32.totalorder %s23, %s26
      %p32 = scmp.eq.s32.totalorder %s13, 0
      %p33 = por %p31, %p32
      %p34 = scmp.ne.s32.totalorder %s23, %s26
      %p35 = scmp.eq.s32.totalorder %s18, 3
      %p36 = por %p34, %p35
      %p37 = scmp.ne.s32.totalorder %s26, %s27
      %p38 = scmp.eq.s32.totalorder %s18, 0
      %p39 = por %p37, %p38
      %p40 = scmp.ne.s32.totalorder %s26, %s27
      %p41 = scmp.eq.s32.totalorder %s19, 3
      %p42 = por %p40, %p41
      %p44 = scmp.ne.s32.totalorder %s27, %s43
      %p45 = scmp.eq.s32.totalorder %s19, 0
      %p46 = por %p44, %p45
      %s47 = ssub.s32 %s13, %s20
      %p48 = scmp.eq.s32.totalorder %s47, 0
      %s50 = sadd.s32 %s49, 1
      %s51 = scalar_select %p48, %s49, %s50
      %p54 = pneg %p48
      %p55 = scmp.eq.s32.totalorder %s13, 3
      %p56 = por %p54, %p55
      %p57 = scmp.ne.s32.totalorder %s49, %s52
      %p58 = scmp.eq.s32.totalorder %s13, 0
      %p59 = por %p57, %p58
      %p60 = scmp.ne.s32.totalorder %s49, %s52
      %p61 = scmp.eq.s32.totalorder %s18, 3
      %p62 = por %p60, %p61
      %p63 = scmp.ne.s32.totalorder %s52, %s53
      %p64 = scmp.eq.s32.totalorder %s18, 0
      %p65 = por %p63, %p64
      %p66 = scmp.ne.s32.totalorder %s52, %s53
      %p67 = scmp.eq.s32.totalorder %s19, 3
      %p68 = por %p66, %p67
      %p70 = scmp.ne.s32.totalorder %s53, %s69
      %p71 = scmp.eq.s32.totalorder %s19, 0
      %p72 = por %p70, %p71
      %s74 = sadd.s32 %s73, 1
      %p77 = scmp.eq.s32.totalorder %s13, 3
      %p78 = scmp.ne.s32.totalorder %s73, %s75
      %p79 = scmp.eq.s32.totalorder %s13, 0
      %p80 = por %p78, %p79
      %p81 = scmp.ne.s32.totalorder %s73, %s75
      %p82 = scmp.eq.s32.totalorder %s18, 3
      %p83 = por %p81, %p82
      %p84 = scmp.ne.s32.totalorder %s75, %s76
      %p85 = scmp.eq.s32.totalorder %s18, 0
      %p86 = por %p84, %p85
      %p87 = scmp.ne.s32.totalorder %s75, %s76
      %p88 = scmp.eq.s32.totalorder %s19, 3
      %p89 = por %p87, %p88
      %p91 = scmp.ne.s32.totalorder %s76, %s90
      %p92 = scmp.eq.s32.totalorder %s19, 0
      %p93 = por %p91, %p92
      %s95 = sadd.s32 %s94, 1
      %p98 = scmp.eq.s32.totalorder %s13, 3
      %p99 = scmp.ne.s32.totalorder %s94, %s96
      %p100 = scmp.eq.s32.totalorder %s13, 0
      %p101 = por %p99, %p100
      %p102 = scmp.ne.s32.totalorder %s94, %s96
      %p103 = scmp.eq.s32.totalorder %s18, 3
      %p104 = por %p102, %p103
      %p105 = scmp.ne.s32.totalorder %s96, %s97
      %p106 = scmp.eq.s32.totalorder %s18, 0
      %p107 = por %p105, %p106
      %p108 = scmp.ne.s32.totalorder %s96, %s97
      %p109 = scmp.eq.s32.totalorder %s19, 3
      %p110 = por %p108, %p109
      %p112 = scmp.ne.s32.totalorder %s97, %s111
      %p113 = scmp.eq.s32.totalorder %s19, 0
      %p114 = por %p112, %p113
      %s115 = ssub.s32 %s13, %s20
      %p116 = scmp.eq.s32.totalorder %s115, 0
      %s118 = sadd.s32 %s117, 1
      %s119 = scalar_select %p116, %s117, %s118
      %p122 = pneg %p116
      %p123 = scmp.eq.s32.totalorder %s13, 3
      %p124 = por %p122, %p123
      %p125 = scmp.ne.s32.totalorder %s117, %s120
      %p126 = scmp.eq.s32.totalorder %s13, 0
      %p127 = por %p125, %p126
      %p128 = scmp.ne.s32.totalorder %s117, %s120
      %p129 = scmp.eq.s32.totalorder %s18, 3
      %p130 = por %p128, %p129
      %p131 = scmp.ne.s32.totalorder %s120, %s121
      %p132 = scmp.eq.s32.totalorder %s18, 0
      %p133 = por %p131, %p132
      %p134 = scmp.ne.s32.totalorder %s120, %s121
      %p135 = scmp.eq.s32.totalorder %s19, 3
      %p136 = por %p134, %p135
      %p138 = scmp.ne.s32.totalorder %s121, %s137
      %p139 = scmp.eq.s32.totalorder %s19, 0
      %p140 = por %p138, %p139
      %p141 = scmp.le.s32.totalorder 1, %s13
      %p142 = scmp.lt.s32.totalorder %s13, 5
      %p143 = pnand %p141, %p142
      %p144 = pneg %p143
      // Predicated region
      $region9: #{inception_forward.1} parent=5 // pred_check
        _
      $region10: #{inception_forward.1} parent=5 // pred_check_branch
        %146 = sbr.rel (%p143) target = $region12
      $region11: #{inception_forward.1} parent=5 // pred_region
        %s147 = ssub.s32 %s13, 1
        // Predicated region
        $region13: #{inception_forward.1} parent=11 // pred_check
          %p148 = pneg %p86
        $region14: #{inception_forward.1} parent=11 // pred_check_branch
          %150 = sbr.rel (%p148) target = $region16
        $region15: #{inception_forward.1} parent=11 // pred_region
          _
        $region16: #{inception_forward.1} parent=11 // pred_fallthru
          _
        // Predicated region
        $region17: #{inception_forward.1} parent=11 // pred_check
          %p151 = pneg %p107
        $region18: #{inception_forward.1} parent=11 // pred_check_branch
          %153 = sbr.rel (%p151) target = $region20
        $region19: #{inception_forward.1} parent=11 // pred_region
          _
        $region20: #{inception_forward.1} parent=11 // pred_fallthru
          _
      $region12: #{inception_forward.1} parent=5 // pred_fallthru
        _
      %p154 = scmp.lt.s32.totalorder %s13, 4
      // Predicated region
      $region21: #{inception_forward.1} parent=5 // pred_check
        %p155 = pneg %p154
      $region22: #{inception_forward.1} parent=5 // pred_check_branch
        %157 = sbr.rel (%p155) target = $region24
      $region23: #{inception_forward.1} parent=5 // pred_region
        // Predicated region
        $region25: #{inception_forward.1} parent=23 // pred_check
          %p158 = pneg %p33
        $region26: #{inception_forward.1} parent=23 // pred_check_branch
          %160 = sbr.rel (%p158) target = $region28
        $region27: #{inception_forward.1} parent=23 // pred_region
          %s161 = smul.u32 2, %s13
          %p162 = scmp.lt.s32.totalorder %s161, 7
          %s163 = scalar_select %p162, %s161, 7
          %s164 = smul.addr %s163, 2
          %s165 = smul.addr %s164, 4
          %s166 = scalar_lea.vmem %s0, %s165
          %s167 = smul.u32 2, %s13
        $region28: #{inception_forward.1} parent=23 // pred_fallthru
          _
        // Predicated region
        $region29: #{inception_forward.1} parent=23 // pred_check
          %p168 = pneg %p59
        $region30: #{inception_forward.1} parent=23 // pred_check_branch
          %170 = sbr.rel (%p168) target = $region32
        $region31: #{inception_forward.1} parent=23 // pred_region
          %s171 = smul.u32 2, %s13
          %p172 = scmp.lt.s32.totalorder %s171, 7
          %s173 = scalar_select %p172, %s171, 7
          %s174 = smul.addr %s173, 2
          %s175 = smul.addr %s174, 4
          %s176 = scalar_lea.vmem %s1, %s175
          %s177 = smul.u32 2, %s13
        $region32: #{inception_forward.1} parent=23 // pred_fallthru
          _
      $region24: #{inception_forward.1} parent=5 // pred_fallthru
        _
      %p178 = scmp.le.s32.totalorder 1, %s13
      %p179 = scmp.lt.s32.totalorder %s13, 5
      %p180 = pnand %p178, %p179
      %p181 = pneg %p180
      // Predicated region
      $region33: #{inception_forward.1} parent=5 // pred_check
        _
      $region34: #{inception_forward.1} parent=5 // pred_check_branch
        %183 = sbr.rel (%p180) target = $region36
      $region35: #{inception_forward.1} parent=5 // pred_region
        %s184 = ssub.s32 %s13, 1
        %s185 = smul.u32 2, %s18
        %p186 = scmp.lt.s32.totalorder %s185, 7
        %s187 = scalar_select %p186, %s185, 7
        %s188 = smul.addr %s187, 2
        %s189 = smul.addr %s188, 4
        %s190 = scalar_lea.vmem %s0, %s189
        %p191 = pneg %p39
        %p192 = pneg %p36
        %s193 = smul.u32 2, %s18
        %p194 = scmp.lt.s32.totalorder %s193, 7
        %s195 = scalar_select %p194, %s193, 7
        %s196 = smul.addr %s195, 2
        %s197 = smul.addr %s196, 4
        %s198 = scalar_lea.vmem %s1, %s197
        %p199 = pneg %p65
        %p200 = pneg %p62
        %p201 = pneg %p86
        %p202 = pneg %p83
        %p203 = pneg %p107
        %p204 = pneg %p104
        %p205 = pneg %p133
        %p206 = pneg %p130
        %s207 = sand.u32 %s120, 1
        %s208 = scalar_lea.sflag [#allocation4], %s207
        %s209 = sand.u32 %s120, 1
        %s210 = smul.addr %s209, 64
        %s211 = scalar_lea.vmem [#allocation3], %s210
        %s212 = smul.u32 2, %s18
        %p213 = scmp.lt.s32.totalorder %s212, 7
        %s214 = scalar_select %p213, %s212, 7
        %s215 = smul.addr %s214, 2
        %s216 = smul.addr %s215, 4
        %s217 = scalar_lea.vmem %s0, %s216
        %s218 = smul.u32 2, %s18
        %s219 = smul.u32 2, %s18
        %p220 = scmp.lt.s32.totalorder %s219, 7
        %s221 = scalar_select %p220, %s219, 7
        %s222 = smul.addr %s221, 2
        %s223 = smul.addr %s222, 4
        %s224 = scalar_lea.vmem %s1, %s223
        %s225 = smul.u32 2, %s18
        %s226 = smul.u32 2, %s18
        %v227 = vld [vmem:[%s2] sm:$0xff]
        %v228 = vld [vmem:[%s2 + $0x8] sm:$0xff]
        %v229 = vld [vmem:[%s2 + $0x10] sm:$0xff]
        %v230 = vld [vmem:[%s2 + $0x18] sm:$0xff]
        %v231 = vld [vmem:[%s2 + $0x20] sm:$0xff]
        %v232 = vld [vmem:[%s2 + $0x28] sm:$0xff]
        %v233 = vld [vmem:[%s2 + $0x30] sm:$0xff]
        %v234 = vld [vmem:[%s2 + $0x38] sm:$0xff]
        %235 = vst [vmem:[#allocation2 + $0x110] sm:$0xf0] 0.0
        %236 = vst [vmem:[#allocation2 + $0x118] sm:$0xf0] 0.0
        %237 = vst [vmem:[#allocation2 + $0x120] sm:$0xff] 0.0
        %238 = vst [vmem:[#allocation2 + $0x128] sm:$0xff] 0.0
        %239 = vst [vmem:[#allocation2 + $0x130] sm:$0xff] 0.0
        %240 = vst [vmem:[#allocation2 + $0x138] sm:$0xff] 0.0
        %241 = vst [vmem:[#allocation2 + $0x140] sm:$0xff] 0.0
        %242 = vst [vmem:[#allocation2 + $0x148] sm:$0xff] 0.0
        %243 = vst [vmem:[#allocation2 + $0x150] sm:$0xff] 0.0
        %244 = vst [vmem:[#allocation2 + $0x158] sm:$0xff] 0.0
        %245 = vst [vmem:[#allocation2 + $0x160] sm:$0xff] 0.0
        %246 = vst [vmem:[#allocation2 + $0x168] sm:$0xff] 0.0
        %247 = vst [vmem:[#allocation2 + $0x170] sm:$0xff] 0.0
        %248 = vst [vmem:[#allocation2 + $0x178] sm:$0xff] 0.0
        %249 = vst [vmem:[#allocation2 + $0x180] sm:$0xff] 0.0
        %250 = vst [vmem:[#allocation2 + $0x188] sm:$0xff] 0.0
        %251 = vst [vmem:[#allocation2 + $0x190] sm:$0xff] 0.0
        %252 = vst [vmem:[#allocation2 + $0x198] sm:$0xff] 0.0
        %253 = vst [vmem:[#allocation2 + $0x1a0] sm:$0xff] 0.0
        %254 = vst [vmem:[#allocation2 + $0x1a8] sm:$0xff] 0.0
        %255 = vst [vmem:[#allocation2 + $0x1b0] sm:$0xff] 0.0
        %256 = vst [vmem:[#allocation2 + $0x1b8] sm:$0xff] 0.0
        %257 = vst [vmem:[#allocation2 + $0x1c0] sm:$0xff] 0.0
        %258 = vst [vmem:[#allocation2 + $0x1c8] sm:$0xff] 0.0
        %259 = vst [vmem:[#allocation2 + $0x1d0] sm:$0xff] 0.0
        %260 = vst [vmem:[#allocation2 + $0x1d8] sm:$0xff] 0.0
        %261 = vst [vmem:[#allocation2 + $0x1e0] sm:$0xff] 0.0
        %262 = vst [vmem:[#allocation2 + $0x1e8] sm:$0xff] 0.0
        %263 = vst [vmem:[#allocation2 + $0x1f0] sm:$0xff] 0.0
        %264 = vst [vmem:[#allocation2 + $0x1f8] sm:$0xff] 0.0
        %v265 = vld [vmem:[%s217] sm:$0xf]
        %266 = vst [vmem:[#allocation2] sm:$0xf] %v265
        %s267 = scalar_lea.vmem %s217, 8
        %v268 = vld [vmem:[%s267] sm:$0xf]
        %269 = vst [vmem:[#allocation2 + $0x8] sm:$0xf] %v268
        %v270 = vld [vmem:[%s224] sm:$0xf]
        %v272 = vcombine.low %v270, %v270
        %274 = vst [vmem:[#allocation2] sm:$0xf0] %v272
        %s275 = scalar_lea.vmem %s224, 8
        %v276 = vld [vmem:[%s275] sm:$0xf]
        %v278 = vcombine.low %v276, %v276
        %280 = vst [vmem:[#allocation2 + $0x8] sm:$0xf0] %v278
        %v281 = vld [vmem:[%s217] sm:$0xff]
        %v283 = vcombine.high %v281, %v281
        %284 = vrot.lane.b32.xlu0 %v281, 127
        %v285 = vpop.permute.xlu0 %284
        %286 = vrot.lane.b32.xlu0 %v283, 127
        %v287 = vpop.permute.xlu0 %286
        %vm288 = vcmask 1039360
        %v289 = vsel %vm288, %v285, %v287
        %291 = vst [vmem:[#allocation2 + $0x10] sm:$0xf] %v289
        %v292 = vld [vmem:[%s267] sm:$0xff]
        %v294 = vcombine.high %v292, %v292
        %295 = vrot.lane.b32.xlu0 %v292, 127
        %v296 = vpop.permute.xlu0 %295
        %297 = vrot.lane.b32.xlu0 %v294, 127
        %v298 = vpop.permute.xlu0 %297
        %v299 = vsel %vm288, %v296, %v298
        %301 = vst [vmem:[#allocation2 + $0x18] sm:$0xf] %v299
        %v302 = vld [vmem:[%s224] sm:$0xff]
        %v304 = vcombine.low %v302, %v302
        %305 = vrot.lane.b32.xlu0 %v304, 127
        %v306 = vpop.permute.xlu0 %305
        %307 = vrot.lane.b32.xlu0 %v302, 127
        %v308 = vpop.permute.xlu0 %307
        %v309 = vsel %vm288, %v306, %v308
        %311 = vst [vmem:[#allocation2 + $0x10] sm:$0xf0] %v309
        %v312 = vld [vmem:[%s275] sm:$0xff]
        %v314 = vcombine.low %v312, %v312
        %315 = vrot.lane.b32.xlu0 %v314, 127
        %v316 = vpop.permute.xlu0 %315
        %317 = vrot.lane.b32.xlu0 %v312, 127
        %v318 = vpop.permute.xlu0 %317
        %v319 = vsel %vm288, %v316, %v318
        %321 = vst [vmem:[#allocation2 + $0x18] sm:$0xf0] %v319
        %v322 = vld [vmem:[%s217] sm:$0xff]
        %v324 = vcombine.high %v322, %v322
        %325 = vrot.lane.b32.xlu0 %v322, 126
        %v326 = vpop.permute.xlu0 %325
        %327 = vrot.lane.b32.xlu0 %v324, 126
        %v328 = vpop.permute.xlu0 %327
        %vm329 = vcmask 1031168
        %v330 = vsel %vm329, %v326, %v328
        %332 = vst [vmem:[#allocation2 + $0x20] sm:$0xf] %v330
        %v333 = vld [vmem:[%s267] sm:$0xff]
        %v335 = vcombine.high %v333, %v333
        %336 = vrot.lane.b32.xlu0 %v333, 126
        %v337 = vpop.permute.xlu0 %336
        %338 = vrot.lane.b32.xlu0 %v335, 126
        %v339 = vpop.permute.xlu0 %338
        %v340 = vsel %vm329, %v337, %v339
        %342 = vst [vmem:[#allocation2 + $0x28] sm:$0xf] %v340
        %v343 = vld [vmem:[%s224] sm:$0xff]
        %v345 = vcombine.low %v343, %v343
        %346 = vrot.lane.b32.xlu0 %v345, 126
        %v347 = vpop.permute.xlu0 %346
        %348 = vrot.lane.b32.xlu0 %v343, 126
        %v349 = vpop.permute.xlu0 %348
        %v350 = vsel %vm329, %v347, %v349
        %352 = vst [vmem:[#allocation2 + $0x20] sm:$0xf0] %v350
        %v353 = vld [vmem:[%s275] sm:$0xff]
        %v355 = vcombine.low %v353, %v353
        %356 = vrot.lane.b32.xlu0 %v355, 126
        %v357 = vpop.permute.xlu0 %356
        %358 = vrot.lane.b32.xlu0 %v353, 126
        %v359 = vpop.permute.xlu0 %358
        %v360 = vsel %vm329, %v357, %v359
        %362 = vst [vmem:[#allocation2 + $0x28] sm:$0xf0] %v360
        %v363 = vld [vmem:[%s217] sm:$0xff]
        %v365 = vcombine.high %v363, %v363
        %366 = vrot.lane.b32.xlu0 %v363, 125
        %v367 = vpop.permute.xlu0 %366
        %368 = vrot.lane.b32.xlu0 %v365, 125
        %v369 = vpop.permute.xlu0 %368
        %vm370 = vcmask 1022976
        %v371 = vsel %vm370, %v367, %v369
        %373 = vst [vmem:[#allocation2 + $0x30] sm:$0xf] %v371
        %v374 = vld [vmem:[%s267] sm:$0xff]
        %v376 = vcombine.high %v374, %v374
        %377 = vrot.lane.b32.xlu0 %v374, 125
        %v378 = vpop.permute.xlu0 %377
        %379 = vrot.lane.b32.xlu0 %v376, 125
        %v380 = vpop.permute.xlu0 %379
        %v381 = vsel %vm370, %v378, %v380
        %383 = vst [vmem:[#allocation2 + $0x38] sm:$0xf] %v381
        %v384 = vld [vmem:[%s224] sm:$0xff]
        %v386 = vcombine.low %v384, %v384
        %387 = vrot.lane.b32.xlu0 %v386, 125
        %v388 = vpop.permute.xlu0 %387
        %389 = vrot.lane.b32.xlu0 %v384, 125
        %v390 = vpop.permute.xlu0 %389
        %v391 = vsel %vm370, %v388, %v390
        %393 = vst [vmem:[#allocation2 + $0x30] sm:$0xf0] %v391
        %v394 = vld [vmem:[%s275] sm:$0xff]
        %v396 = vcombine.low %v394, %v394
        %397 = vrot.lane.b32.xlu0 %v396, 125
        %v398 = vpop.permute.xlu0 %397
        %399 = vrot.lane.b32.xlu0 %v394, 125
        %v400 = vpop.permute.xlu0 %399
        %v401 = vsel %vm370, %v398, %v400
        %403 = vst [vmem:[#allocation2 + $0x38] sm:$0xf0] %v401
        %v404 = vld [vmem:[%s217] sm:$0xff]
        %v406 = vcombine.high %v404, %v404
        %407 = vrot.lane.b32.xlu0 %v404, 124
        %v408 = vpop.permute.xlu0 %407
        %409 = vrot.lane.b32.xlu0 %v406, 124
        %v410 = vpop.permute.xlu0 %409
        %vm411 = vcmask 1014784
        %v412 = vsel %vm411, %v408, %v410
        %414 = vst [vmem:[#allocation2 + $0x40] sm:$0xf] %v412
        %v415 = vld [vmem:[%s267] sm:$0xff]
        %v417 = vcombine.high %v415, %v415
        %418 = vrot.lane.b32.xlu0 %v415, 124
        %v419 = vpop.permute.xlu0 %418
        %420 = vrot.lane.b32.xlu0 %v417, 124
        %v421 = vpop.permute.xlu0 %420
        %v422 = vsel %vm411, %v419, %v421
        %424 = vst [vmem:[#allocation2 + $0x48] sm:$0xf] %v422
        %v425 = vld [vmem:[%s224] sm:$0xff]
        %v427 = vcombine.low %v425, %v425
        %428 = vrot.lane.b32.xlu0 %v427, 124
        %v429 = vpop.permute.xlu0 %428
        %430 = vrot.lane.b32.xlu0 %v425, 124
        %v431 = vpop.permute.xlu0 %430
        %v432 = vsel %vm411, %v429, %v431
        %434 = vst [vmem:[#allocation2 + $0x40] sm:$0xf0] %v432
        %v435 = vld [vmem:[%s275] sm:$0xff]
        %v437 = vcombine.low %v435, %v435
        %438 = vrot.lane.b32.xlu0 %v437, 124
        %v439 = vpop.permute.xlu0 %438
        %440 = vrot.lane.b32.xlu0 %v435, 124
        %v441 = vpop.permute.xlu0 %440
        %v442 = vsel %vm411, %v439, %v441
        %444 = vst [vmem:[#allocation2 + $0x48] sm:$0xf0] %v442
        %v445 = vld [vmem:[%s217] sm:$0xff]
        %v447 = vcombine.high %v445, %v445
        %448 = vrot.lane.b32.xlu0 %v445, 123
        %v449 = vpop.permute.xlu0 %448
        %450 = vrot.lane.b32.xlu0 %v447, 123
        %v451 = vpop.permute.xlu0 %450
        %vm452 = vcmask 1006592
        %v453 = vsel %vm452, %v449, %v451
        %455 = vst [vmem:[#allocation2 + $0x50] sm:$0xf] %v453
        %v456 = vld [vmem:[%s267] sm:$0xff]
        %v458 = vcombine.high %v456, %v456
        %459 = vrot.lane.b32.xlu0 %v456, 123
        %v460 = vpop.permute.xlu0 %459
        %461 = vrot.lane.b32.xlu0 %v458, 123
        %v462 = vpop.permute.xlu0 %461
        %v463 = vsel %vm452, %v460, %v462
        %465 = vst [vmem:[#allocation2 + $0x58] sm:$0xf] %v463
        %v466 = vld [vmem:[%s224] sm:$0xff]
        %v468 = vcombine.low %v466, %v466
        %469 = vrot.lane.b32.xlu0 %v468, 123
        %v470 = vpop.permute.xlu0 %469
        %471 = vrot.lane.b32.xlu0 %v466, 123
        %v472 = vpop.permute.xlu0 %471
        %v473 = vsel %vm452, %v470, %v472
        %475 = vst [vmem:[#allocation2 + $0x50] sm:$0xf0] %v473
        %v476 = vld [vmem:[%s275] sm:$0xff]
        %v478 = vcombine.low %v476, %v476
        %479 = vrot.lane.b32.xlu0 %v478, 123
        %v480 = vpop.permute.xlu0 %479
        %481 = vrot.lane.b32.xlu0 %v476, 123
        %v482 = vpop.permute.xlu0 %481
        %v483 = vsel %vm452, %v480, %v482
        %485 = vst [vmem:[#allocation2 + $0x58] sm:$0xf0] %v483
        %v486 = vld [vmem:[%s217] sm:$0xff]
        %v488 = vcombine.high %v486, %v486
        %489 = vrot.lane.b32.xlu0 %v486, 122
        %v490 = vpop.permute.xlu0 %489
        %491 = vrot.lane.b32.xlu0 %v488, 122
        %v492 = vpop.permute.xlu0 %491
        %vm493 = vcmask 998400
        %v494 = vsel %vm493, %v490, %v492
        %496 = vst [vmem:[#allocation2 + $0x60] sm:$0xf] %v494
        %v497 = vld [vmem:[%s267] sm:$0xff]
        %v499 = vcombine.high %v497, %v497
        %500 = vrot.lane.b32.xlu0 %v497, 122
        %v501 = vpop.permute.xlu0 %500
        %502 = vrot.lane.b32.xlu0 %v499, 122
        %v503 = vpop.permute.xlu0 %502
        %v504 = vsel %vm493, %v501, %v503
        %506 = vst [vmem:[#allocation2 + $0x68] sm:$0xf] %v504
        %v507 = vld [vmem:[%s224] sm:$0xff]
        %v509 = vcombine.low %v507, %v507
        %510 = vrot.lane.b32.xlu0 %v509, 122
        %v511 = vpop.permute.xlu0 %510
        %512 = vrot.lane.b32.xlu0 %v507, 122
        %v513 = vpop.permute.xlu0 %512
        %v514 = vsel %vm493, %v511, %v513
        %516 = vst [vmem:[#allocation2 + $0x60] sm:$0xf0] %v514
        %v517 = vld [vmem:[%s275] sm:$0xff]
        %v519 = vcombine.low %v517, %v517
        %520 = vrot.lane.b32.xlu0 %v519, 122
        %v521 = vpop.permute.xlu0 %520
        %522 = vrot.lane.b32.xlu0 %v517, 122
        %v523 = vpop.permute.xlu0 %522
        %v524 = vsel %vm493, %v521, %v523
        %526 = vst [vmem:[#allocation2 + $0x68] sm:$0xf0] %v524
        %v527 = vld [vmem:[%s217] sm:$0xff]
        %v529 = vcombine.high %v527, %v527
        %530 = vrot.lane.b32.xlu0 %v527, 121
        %v531 = vpop.permute.xlu0 %530
        %532 = vrot.lane.b32.xlu0 %v529, 121
        %v533 = vpop.permute.xlu0 %532
        %vm534 = vcmask 990208
        %v535 = vsel %vm534, %v531, %v533
        %537 = vst [vmem:[#allocation2 + $0x70] sm:$0xf] %v535
        %v538 = vld [vmem:[%s267] sm:$0xff]
        %v540 = vcombine.high %v538, %v538
        %541 = vrot.lane.b32.xlu0 %v538, 121
        %v542 = vpop.permute.xlu0 %541
        %543 = vrot.lane.b32.xlu0 %v540, 121
        %v544 = vpop.permute.xlu0 %543
        %v545 = vsel %vm534, %v542, %v544
        %547 = vst [vmem:[#allocation2 + $0x78] sm:$0xf] %v545
        %v548 = vld [vmem:[%s224] sm:$0xff]
        %v550 = vcombine.low %v548, %v548
        %551 = vrot.lane.b32.xlu0 %v550, 121
        %v552 = vpop.permute.xlu0 %551
        %553 = vrot.lane.b32.xlu0 %v548, 121
        %v554 = vpop.permute.xlu0 %553
        %v555 = vsel %vm534, %v552, %v554
        %557 = vst [vmem:[#allocation2 + $0x70] sm:$0xf0] %v555
        %v558 = vld [vmem:[%s275] sm:$0xff]
        %v560 = vcombine.low %v558, %v558
        %561 = vrot.lane.b32.xlu0 %v560, 121
        %v562 = vpop.permute.xlu0 %561
        %563 = vrot.lane.b32.xlu0 %v558, 121
        %v564 = vpop.permute.xlu0 %563
        %v565 = vsel %vm534, %v562, %v564
        %567 = vst [vmem:[#allocation2 + $0x78] sm:$0xf0] %v565
        %v568 = vld [vmem:[%s217] sm:$0xff]
        %v570 = vcombine.high %v568, %v568
        %571 = vrot.lane.b32.xlu0 %v568, 120
        %v572 = vpop.permute.xlu0 %571
        %573 = vrot.lane.b32.xlu0 %v570, 120
        %v574 = vpop.permute.xlu0 %573
        %vm575 = vcmask 982016
        %v576 = vsel %vm575, %v572, %v574
        %578 = vst [vmem:[#allocation2 + $0x80] sm:$0xf] %v576
        %v579 = vld [vmem:[%s267] sm:$0xff]
        %v581 = vcombine.high %v579, %v579
        %582 = vrot.lane.b32.xlu0 %v579, 120
        %v583 = vpop.permute.xlu0 %582
        %584 = vrot.lane.b32.xlu0 %v581, 120
        %v585 = vpop.permute.xlu0 %584
        %v586 = vsel %vm575, %v583, %v585
        %588 = vst [vmem:[#allocation2 + $0x88] sm:$0xf] %v586
        %v589 = vld [vmem:[%s224] sm:$0xff]
        %v591 = vcombine.low %v589, %v589
        %592 = vrot.lane.b32.xlu0 %v591, 120
        %v593 = vpop.permute.xlu0 %592
        %594 = vrot.lane.b32.xlu0 %v589, 120
        %v595 = vpop.permute.xlu0 %594
        %v596 = vsel %vm575, %v593, %v595
        %598 = vst [vmem:[#allocation2 + $0x80] sm:$0xf0] %v596
        %v599 = vld [vmem:[%s275] sm:$0xff]
        %v601 = vcombine.low %v599, %v599
        %602 = vrot.lane.b32.xlu0 %v601, 120
        %v603 = vpop.permute.xlu0 %602
        %604 = vrot.lane.b32.xlu0 %v599, 120
        %v605 = vpop.permute.xlu0 %604
        %v606 = vsel %vm575, %v603, %v605
        %608 = vst [vmem:[#allocation2 + $0x88] sm:$0xf0] %v606
        %v609 = vld [vmem:[%s217] sm:$0xff]
        %v611 = vcombine.high %v609, %v609
        %612 = vrot.lane.b32.xlu0 %v609, 119
        %v613 = vpop.permute.xlu0 %612
        %614 = vrot.lane.b32.xlu0 %v611, 119
        %v615 = vpop.permute.xlu0 %614
        %vm616 = vcmask 973824
        %v617 = vsel %vm616, %v613, %v615
        %619 = vst [vmem:[#allocation2 + $0x90] sm:$0xf] %v617
        %v620 = vld [vmem:[%s267] sm:$0xff]
        %v622 = vcombine.high %v620, %v620
        %623 = vrot.lane.b32.xlu0 %v620, 119
        %v624 = vpop.permute.xlu0 %623
        %625 = vrot.lane.b32.xlu0 %v622, 119
        %v626 = vpop.permute.xlu0 %625
        %v627 = vsel %vm616, %v624, %v626
        %629 = vst [vmem:[#allocation2 + $0x98] sm:$0xf] %v627
        %v630 = vld [vmem:[%s224] sm:$0xff]
        %v632 = vcombine.low %v630, %v630
        %633 = vrot.lane.b32.xlu0 %v632, 119
        %v634 = vpop.permute.xlu0 %633
        %635 = vrot.lane.b32.xlu0 %v630, 119
        %v636 = vpop.permute.xlu0 %635
        %v637 = vsel %vm616, %v634, %v636
        %639 = vst [vmem:[#allocation2 + $0x90] sm:$0xf0] %v637
        %v640 = vld [vmem:[%s275] sm:$0xff]
        %v642 = vcombine.low %v640, %v640
        %643 = vrot.lane.b32.xlu0 %v642, 119
        %v644 = vpop.permute.xlu0 %643
        %645 = vrot.lane.b32.xlu0 %v640, 119
        %v646 = vpop.permute.xlu0 %645
        %v647 = vsel %vm616, %v644, %v646
        %649 = vst [vmem:[#allocation2 + $0x98] sm:$0xf0] %v647
        %v650 = vld [vmem:[%s217] sm:$0xff]
        %v652 = vcombine.high %v650, %v650
        %653 = vrot.lane.b32.xlu0 %v650, 118
        %v654 = vpop.permute.xlu0 %653
        %655 = vrot.lane.b32.xlu0 %v652, 118
        %v656 = vpop.permute.xlu0 %655
        %vm657 = vcmask 965632
        %v658 = vsel %vm657, %v654, %v656
        %660 = vst [vmem:[#allocation2 + $0xa0] sm:$0xf] %v658
        %v661 = vld [vmem:[%s267] sm:$0xff]
        %v663 = vcombine.high %v661, %v661
        %664 = vrot.lane.b32.xlu0 %v661, 118
        %v665 = vpop.permute.xlu0 %664
        %666 = vrot.lane.b32.xlu0 %v663, 118
        %v667 = vpop.permute.xlu0 %666
        %v668 = vsel %vm657, %v665, %v667
        %670 = vst [vmem:[#allocation2 + $0xa8] sm:$0xf] %v668
        %v671 = vld [vmem:[%s224] sm:$0xff]
        %v673 = vcombine.low %v671, %v671
        %674 = vrot.lane.b32.xlu0 %v673, 118
        %v675 = vpop.permute.xlu0 %674
        %676 = vrot.lane.b32.xlu0 %v671, 118
        %v677 = vpop.permute.xlu0 %676
        %v678 = vsel %vm657, %v675, %v677
        %680 = vst [vmem:[#allocation2 + $0xa0] sm:$0xf0] %v678
        %v681 = vld [vmem:[%s275] sm:$0xff]
        %v683 = vcombine.low %v681, %v681
        %684 = vrot.lane.b32.xlu0 %v683, 118
        %v685 = vpop.permute.xlu0 %684
        %686 = vrot.lane.b32.xlu0 %v681, 118
        %v687 = vpop.permute.xlu0 %686
        %v688 = vsel %vm657, %v685, %v687
        %690 = vst [vmem:[#allocation2 + $0xa8] sm:$0xf0] %v688
        %v691 = vld [vmem:[%s217] sm:$0xff]
        %v693 = vcombine.high %v691, %v691
        %694 = vrot.lane.b32.xlu0 %v691, 117
        %v695 = vpop.permute.xlu0 %694
        %696 = vrot.lane.b32.xlu0 %v693, 117
        %v697 = vpop.permute.xlu0 %696
        %vm698 = vcmask 957440
        %v699 = vsel %vm698, %v695, %v697
        %701 = vst [vmem:[#allocation2 + $0xb0] sm:$0xf] %v699
        %v702 = vld [vmem:[%s267] sm:$0xff]
        %v704 = vcombine.high %v702, %v702
        %705 = vrot.lane.b32.xlu0 %v702, 117
        %v706 = vpop.permute.xlu0 %705
        %707 = vrot.lane.b32.xlu0 %v704, 117
        %v708 = vpop.permute.xlu0 %707
        %v709 = vsel %vm698, %v706, %v708
        %711 = vst [vmem:[#allocation2 + $0xb8] sm:$0xf] %v709
        %v712 = vld [vmem:[%s224] sm:$0xff]
        %v714 = vcombine.low %v712, %v712
        %715 = vrot.lane.b32.xlu0 %v714, 117
        %v716 = vpop.permute.xlu0 %715
        %717 = vrot.lane.b32.xlu0 %v712, 117
        %v718 = vpop.permute.xlu0 %717
        %v719 = vsel %vm698, %v716, %v718
        %721 = vst [vmem:[#allocation2 + $0xb0] sm:$0xf0] %v719
        %v722 = vld [vmem:[%s275] sm:$0xff]
        %v724 = vcombine.low %v722, %v722
        %725 = vrot.lane.b32.xlu0 %v724, 117
        %v726 = vpop.permute.xlu0 %725
        %727 = vrot.lane.b32.xlu0 %v722, 117
        %v728 = vpop.permute.xlu0 %727
        %v729 = vsel %vm698, %v726, %v728
        %731 = vst [vmem:[#allocation2 + $0xb8] sm:$0xf0] %v729
        %v732 = vld [vmem:[%s217] sm:$0xff]
        %v734 = vcombine.high %v732, %v732
        %735 = vrot.lane.b32.xlu0 %v732, 116
        %v736 = vpop.permute.xlu0 %735
        %737 = vrot.lane.b32.xlu0 %v734, 116
        %v738 = vpop.permute.xlu0 %737
        %vm739 = vcmask 949248
        %v740 = vsel %vm739, %v736, %v738
        %742 = vst [vmem:[#allocation2 + $0xc0] sm:$0xf] %v740
        %v743 = vld [vmem:[%s267] sm:$0xff]
        %v745 = vcombine.high %v743, %v743
        %746 = vrot.lane.b32.xlu0 %v743, 116
        %v747 = vpop.permute.xlu0 %746
        %748 = vrot.lane.b32.xlu0 %v745, 116
        %v749 = vpop.permute.xlu0 %748
        %v750 = vsel %vm739, %v747, %v749
        %752 = vst [vmem:[#allocation2 + $0xc8] sm:$0xf] %v750
        %v753 = vld [vmem:[%s224] sm:$0xff]
        %v755 = vcombine.low %v753, %v753
        %756 = vrot.lane.b32.xlu0 %v755, 116
        %v757 = vpop.permute.xlu0 %756
        %758 = vrot.lane.b32.xlu0 %v753, 116
        %v759 = vpop.permute.xlu0 %758
        %v760 = vsel %vm739, %v757, %v759
        %762 = vst [vmem:[#allocation2 + $0xc0] sm:$0xf0] %v760
        %v763 = vld [vmem:[%s275] sm:$0xff]
        %v765 = vcombine.low %v763, %v763
        %766 = vrot.lane.b32.xlu0 %v765, 116
        %v767 = vpop.permute.xlu0 %766
        %768 = vrot.lane.b32.xlu0 %v763, 116
        %v769 = vpop.permute.xlu0 %768
        %v770 = vsel %vm739, %v767, %v769
        %772 = vst [vmem:[#allocation2 + $0xc8] sm:$0xf0] %v770
        %v773 = vld [vmem:[%s217] sm:$0xff]
        %v775 = vcombine.high %v773, %v773
        %776 = vrot.lane.b32.xlu0 %v773, 115
        %v777 = vpop.permute.xlu0 %776
        %778 = vrot.lane.b32.xlu0 %v775, 115
        %v779 = vpop.permute.xlu0 %778
        %vm780 = vcmask 941056
        %v781 = vsel %vm780, %v777, %v779
        %783 = vst [vmem:[#allocation2 + $0xd0] sm:$0xf] %v781
        %v784 = vld [vmem:[%s267] sm:$0xff]
        %v786 = vcombine.high %v784, %v784
        %787 = vrot.lane.b32.xlu0 %v784, 115
        %v788 = vpop.permute.xlu0 %787
        %789 = vrot.lane.b32.xlu0 %v786, 115
        %v790 = vpop.permute.xlu0 %789
        %v791 = vsel %vm780, %v788, %v790
        %793 = vst [vmem:[#allocation2 + $0xd8] sm:$0xf] %v791
        %v794 = vld [vmem:[%s224] sm:$0xff]
        %v796 = vcombine.low %v794, %v794
        %797 = vrot.lane.b32.xlu0 %v796, 115
        %v798 = vpop.permute.xlu0 %797
        %799 = vrot.lane.b32.xlu0 %v794, 115
        %v800 = vpop.permute.xlu0 %799
        %v801 = vsel %vm780, %v798, %v800
        %803 = vst [vmem:[#allocation2 + $0xd0] sm:$0xf0] %v801
        %v804 = vld [vmem:[%s275] sm:$0xff]
        %v806 = vcombine.low %v804, %v804
        %807 = vrot.lane.b32.xlu0 %v806, 115
        %v808 = vpop.permute.xlu0 %807
        %809 = vrot.lane.b32.xlu0 %v804, 115
        %v810 = vpop.permute.xlu0 %809
        %v811 = vsel %vm780, %v808, %v810
        %813 = vst [vmem:[#allocation2 + $0xd8] sm:$0xf0] %v811
        %v814 = vld [vmem:[%s217] sm:$0xff]
        %v816 = vcombine.high %v814, %v814
        %817 = vrot.lane.b32.xlu0 %v814, 114
        %v818 = vpop.permute.xlu0 %817
        %819 = vrot.lane.b32.xlu0 %v816, 114
        %v820 = vpop.permute.xlu0 %819
        %vm821 = vcmask 932864
        %v822 = vsel %vm821, %v818, %v820
        %824 = vst [vmem:[#allocation2 + $0xe0] sm:$0xf] %v822
        %v825 = vld [vmem:[%s267] sm:$0xff]
        %v827 = vcombine.high %v825, %v825
        %828 = vrot.lane.b32.xlu0 %v825, 114
        %v829 = vpop.permute.xlu0 %828
        %830 = vrot.lane.b32.xlu0 %v827, 114
        %v831 = vpop.permute.xlu0 %830
        %v832 = vsel %vm821, %v829, %v831
        %834 = vst [vmem:[#allocation2 + $0xe8] sm:$0xf] %v832
        %v835 = vld [vmem:[%s224] sm:$0xff]
        %v837 = vcombine.low %v835, %v835
        %838 = vrot.lane.b32.xlu0 %v837, 114
        %v839 = vpop.permute.xlu0 %838
        %840 = vrot.lane.b32.xlu0 %v835, 114
        %v841 = vpop.permute.xlu0 %840
        %v842 = vsel %vm821, %v839, %v841
        %844 = vst [vmem:[#allocation2 + $0xe0] sm:$0xf0] %v842
        %v845 = vld [vmem:[%s275] sm:$0xff]
        %v847 = vcombine.low %v845, %v845
        %848 = vrot.lane.b32.xlu0 %v847, 114
        %v849 = vpop.permute.xlu0 %848
        %850 = vrot.lane.b32.xlu0 %v845, 114
        %v851 = vpop.permute.xlu0 %850
        %v852 = vsel %vm821, %v849, %v851
        %854 = vst [vmem:[#allocation2 + $0xe8] sm:$0xf0] %v852
        %v855 = vld [vmem:[%s217] sm:$0xff]
        %v857 = vcombine.high %v855, %v855
        %858 = vrot.lane.b32.xlu0 %v855, 113
        %v859 = vpop.permute.xlu0 %858
        %860 = vrot.lane.b32.xlu0 %v857, 113
        %v861 = vpop.permute.xlu0 %860
        %vm862 = vcmask 924672
        %v863 = vsel %vm862, %v859, %v861
        %865 = vst [vmem:[#allocation2 + $0xf0] sm:$0xf] %v863
        %v866 = vld [vmem:[%s267] sm:$0xff]
        %v868 = vcombine.high %v866, %v866
        %869 = vrot.lane.b32.xlu0 %v866, 113
        %v870 = vpop.permute.xlu0 %869
        %871 = vrot.lane.b32.xlu0 %v868, 113
        %v872 = vpop.permute.xlu0 %871
        %v873 = vsel %vm862, %v870, %v872
        %875 = vst [vmem:[#allocation2 + $0xf8] sm:$0xf] %v873
        %v876 = vld [vmem:[%s224] sm:$0xff]
        %v878 = vcombine.low %v876, %v876
        %879 = vrot.lane.b32.xlu0 %v878, 113
        %v880 = vpop.permute.xlu0 %879
        %881 = vrot.lane.b32.xlu0 %v876, 113
        %v882 = vpop.permute.xlu0 %881
        %v883 = vsel %vm862, %v880, %v882
        %885 = vst [vmem:[#allocation2 + $0xf0] sm:$0xf0] %v883
        %v886 = vld [vmem:[%s275] sm:$0xff]
        %v888 = vcombine.low %v886, %v886
        %889 = vrot.lane.b32.xlu0 %v888, 113
        %v890 = vpop.permute.xlu0 %889
        %891 = vrot.lane.b32.xlu0 %v886, 113
        %v892 = vpop.permute.xlu0 %891
        %v893 = vsel %vm862, %v890, %v892
        %895 = vst [vmem:[#allocation2 + $0xf8] sm:$0xf0] %v893
        %v896 = vld [vmem:[%s217] sm:$0xff]
        %v898 = vcombine.high %v896, %v896
        %899 = vrot.lane.b32.xlu0 %v896, 112
        %v900 = vpop.permute.xlu0 %899
        %901 = vrot.lane.b32.xlu0 %v898, 112
        %v902 = vpop.permute.xlu0 %901
        %vm903 = vcmask 916480
        %v904 = vsel %vm903, %v900, %v902
        %906 = vst [vmem:[#allocation2 + $0x100] sm:$0xf] %v904
        %v907 = vld [vmem:[%s267] sm:$0xff]
        %v909 = vcombine.high %v907, %v907
        %910 = vrot.lane.b32.xlu0 %v907, 112
        %v911 = vpop.permute.xlu0 %910
        %912 = vrot.lane.b32.xlu0 %v909, 112
        %v913 = vpop.permute.xlu0 %912
        %v914 = vsel %vm903, %v911, %v913
        %916 = vst [vmem:[#allocation2 + $0x108] sm:$0xf] %v914
        %v917 = vld [vmem:[%s224] sm:$0xff]
        %v919 = vcombine.low %v917, %v917
        %920 = vrot.lane.b32.xlu0 %v919, 112
        %v921 = vpop.permute.xlu0 %920
        %922 = vrot.lane.b32.xlu0 %v917, 112
        %v923 = vpop.permute.xlu0 %922
        %v924 = vsel %vm903, %v921, %v923
        %926 = vst [vmem:[#allocation2 + $0x100] sm:$0xf0] %v924
        %v927 = vld [vmem:[%s275] sm:$0xff]
        %v929 = vcombine.low %v927, %v927
        %930 = vrot.lane.b32.xlu0 %v929, 112
        %v931 = vpop.permute.xlu0 %930
        %932 = vrot.lane.b32.xlu0 %v927, 112
        %v933 = vpop.permute.xlu0 %932
        %v934 = vsel %vm903, %v931, %v933
        %936 = vst [vmem:[#allocation2 + $0x108] sm:$0xf0] %v934
        %v937 = vld [vmem:[%s217] sm:$0xff]
        %v939 = vcombine.high %v937, %v937
        %940 = vrot.lane.b32.xlu0 %v937, 111
        %v941 = vpop.permute.xlu0 %940
        %942 = vrot.lane.b32.xlu0 %v939, 111
        %v943 = vpop.permute.xlu0 %942
        %vm944 = vcmask 908288
        %v945 = vsel %vm944, %v941, %v943
        %947 = vst [vmem:[#allocation2 + $0x110] sm:$0xf] %v945
        %v948 = vld [vmem:[%s267] sm:$0xff]
        %v950 = vcombine.high %v948, %v948
        %951 = vrot.lane.b32.xlu0 %v948, 111
        %v952 = vpop.permute.xlu0 %951
        %953 = vrot.lane.b32.xlu0 %v950, 111
        %v954 = vpop.permute.xlu0 %953
        %v955 = vsel %vm944, %v952, %v954
        %957 = vst [vmem:[#allocation2 + $0x118] sm:$0xf] %v955
        %v958 = vld [vmem:[#allocation2] sm:$0xff]
        %v959 = vld [vmem:[#allocation2 + $0x8] sm:$0xff]
        %v960 = vld [vmem:[#allocation2 + $0x10] sm:$0xff]
        %v961 = vld [vmem:[#allocation2 + $0x18] sm:$0xff]
        %v962 = vld [vmem:[#allocation2 + $0x20] sm:$0xff]
        %v963 = vld [vmem:[#allocation2 + $0x28] sm:$0xff]
        %v964 = vld [vmem:[#allocation2 + $0x30] sm:$0xff]
        %v965 = vld [vmem:[#allocation2 + $0x38] sm:$0xff]
        %v966 = vld [vmem:[#allocation2 + $0x40] sm:$0xff]
        %v967 = vld [vmem:[#allocation2 + $0x48] sm:$0xff]
        %v968 = vld [vmem:[#allocation2 + $0x50] sm:$0xff]
        %v969 = vld [vmem:[#allocation2 + $0x58] sm:$0xff]
        %v970 = vld [vmem:[#allocation2 + $0x60] sm:$0xff]
        %v971 = vld [vmem:[#allocation2 + $0x68] sm:$0xff]
        %v972 = vld [vmem:[#allocation2 + $0x70] sm:$0xff]
        %v973 = vld [vmem:[#allocation2 + $0x78] sm:$0xff]
        %v974 = vld [vmem:[#allocation2 + $0x80] sm:$0xff]
        %v975 = vld [vmem:[#allocation2 + $0x88] sm:$0xff]
        %v976 = vld [vmem:[#allocation2 + $0x90] sm:$0xff]
        %v977 = vld [vmem:[#allocation2 + $0x98] sm:$0xff]
        %v978 = vld [vmem:[#allocation2 + $0xa0] sm:$0xff]
        %v979 = vld [vmem:[#allocation2 + $0xa8] sm:$0xff]
        %v980 = vld [vmem:[#allocation2 + $0xb0] sm:$0xff]
        %v981 = vld [vmem:[#allocation2 + $0xb8] sm:$0xff]
        %v982 = vld [vmem:[#allocation2 + $0xc0] sm:$0xff]
        %v983 = vld [vmem:[#allocation2 + $0xc8] sm:$0xff]
        %v984 = vld [vmem:[#allocation2 + $0xd0] sm:$0xff]
        %v985 = vld [vmem:[#allocation2 + $0xd8] sm:$0xff]
        %v986 = vld [vmem:[#allocation2 + $0xe0] sm:$0xff]
        %v987 = vld [vmem:[#allocation2 + $0xe8] sm:$0xff]
        %v988 = vld [vmem:[#allocation2 + $0xf0] sm:$0xff]
        %v989 = vld [vmem:[#allocation2 + $0xf8] sm:$0xff]
        %v990 = vld [vmem:[#allocation2 + $0x100] sm:$0xff]
        %v991 = vld [vmem:[#allocation2 + $0x108] sm:$0xff]
        %v992 = vld [vmem:[#allocation2 + $0x110] sm:$0xff]
        %v993 = vld [vmem:[#allocation2 + $0x118] sm:$0xff]
        %v994 = vld [vmem:[#allocation2 + $0x120] sm:$0xff]
        %v995 = vld [vmem:[#allocation2 + $0x128] sm:$0xff]
        %v996 = vld [vmem:[#allocation2 + $0x130] sm:$0xff]
        %v997 = vld [vmem:[#allocation2 + $0x138] sm:$0xff]
        %v998 = vld [vmem:[#allocation2 + $0x140] sm:$0xff]
        %v999 = vld [vmem:[#allocation2 + $0x148] sm:$0xff]
        %v1000 = vld [vmem:[#allocation2 + $0x150] sm:$0xff]
        %v1001 = vld [vmem:[#allocation2 + $0x158] sm:$0xff]
        %v1002 = vld [vmem:[#allocation2 + $0x160] sm:$0xff]
        %v1003 = vld [vmem:[#allocation2 + $0x168] sm:$0xff]
        %v1004 = vld [vmem:[#allocation2 + $0x170] sm:$0xff]
        %v1005 = vld [vmem:[#allocation2 + $0x178] sm:$0xff]
        %v1006 = vld [vmem:[#allocation2 + $0x180] sm:$0xff]
        %v1007 = vld [vmem:[#allocation2 + $0x188] sm:$0xff]
        %v1008 = vld [vmem:[#allocation2 + $0x190] sm:$0xff]
        %v1009 = vld [vmem:[#allocation2 + $0x198] sm:$0xff]
        %v1010 = vld [vmem:[#allocation2 + $0x1a0] sm:$0xff]
        %v1011 = vld [vmem:[#allocation2 + $0x1a8] sm:$0xff]
        %v1012 = vld [vmem:[#allocation2 + $0x1b0] sm:$0xff]
        %v1013 = vld [vmem:[#allocation2 + $0x1b8] sm:$0xff]
        %v1014 = vld [vmem:[#allocation2 + $0x1c0] sm:$0xff]
        %v1015 = vld [vmem:[#allocation2 + $0x1c8] sm:$0xff]
        %v1016 = vld [vmem:[#allocation2 + $0x1d0] sm:$0xff]
        %v1017 = vld [vmem:[#allocation2 + $0x1d8] sm:$0xff]
        %v1018 = vld [vmem:[#allocation2 + $0x1e0] sm:$0xff]
        %v1019 = vld [vmem:[#allocation2 + $0x1e8] sm:$0xff]
        %v1020 = vld [vmem:[#allocation2 + $0x1f0] sm:$0xff]
        %v1021 = vld [vmem:[#allocation2 + $0x1f8] sm:$0xff]
        %1022 = vmatprep.subr.mxu0 %v959
        %1023 = vmatpush1.msra.mxu0 %v958
        %1024 = vmatprep.subr.mxu0 %v961
        %1025 = vmatpush1.msra.mxu0 %v960
        %1026 = vmatprep.subr.mxu0 %v963
        %1027 = vmatpush1.msra.mxu0 %v962
        %1028 = vmatprep.subr.mxu0 %v965
        %1029 = vmatpush1.msra.mxu0 %v964
        %1030 = vmatprep.subr.mxu0 %v967
        %1031 = vmatpush1.msra.mxu0 %v966
        %1032 = vmatprep.subr.mxu0 %v969
        %1033 = vmatpush1.msra.mxu0 %v968
        %1034 = vmatprep.subr.mxu0 %v971
        %1035 = vmatpush1.msra.mxu0 %v970
        %1036 = vmatprep.subr.mxu0 %v973
        %1037 = vmatpush1.msra.mxu0 %v972
        %1038 = vmatprep.subr.mxu0 %v975
        %1039 = vmatpush1.msra.mxu0 %v974
        %1040 = vmatprep.subr.mxu0 %v977
        %1041 = vmatpush1.msra.mxu0 %v976
        %1042 = vmatprep.subr.mxu0 %v979
        %1043 = vmatpush1.msra.mxu0 %v978
        %1044 = vmatprep.subr.mxu0 %v981
        %1045 = vmatpush1.msra.mxu0 %v980
        %1046 = vmatprep.subr.mxu0 %v983
        %1047 = vmatpush1.msra.mxu0 %v982
        %1048 = vmatprep.subr.mxu0 %v985
        %1049 = vmatpush1.msra.mxu0 %v984
        %1050 = vmatprep.subr.mxu0 %v987
        %1051 = vmatpush1.msra.mxu0 %v986
        %1052 = vmatprep.subr.mxu0 %v989
        %1053 = vmatpush1.msra.mxu0 %v988
        %1054 = vmatprep.subr.mxu0 %v991
        %1055 = vmatpush1.msra.mxu0 %v990
        %1056 = vmatprep.subr.mxu0 %v993
        %1057 = vmatpush1.msra.mxu0 %v992
        %1058 = vmatprep.subr.mxu0 %v995
        %1059 = vmatpush1.msra.mxu0 %v994
        %1060 = vmatprep.subr.mxu0 %v997
        %1061 = vmatpush1.msra.mxu0 %v996
        %1062 = vmatprep.subr.mxu0 %v999
        %1063 = vmatpush1.msra.mxu0 %v998
        %1064 = vmatprep.subr.mxu0 %v1001
        %1065 = vmatpush1.msra.mxu0 %v1000
        %1066 = vmatprep.subr.mxu0 %v1003
        %1067 = vmatpush1.msra.mxu0 %v1002
        %1068 = vmatprep.subr.mxu0 %v1005
        %1069 = vmatpush1.msra.mxu0 %v1004
        %1070 = vmatprep.subr.mxu0 %v1007
        %1071 = vmatpush1.msra.mxu0 %v1006
        %1072 = vmatprep.subr.mxu0 %v1009
        %1073 = vmatpush1.msra.mxu0 %v1008
        %1074 = vmatprep.subr.mxu0 %v1011
        %1075 = vmatpush1.msra.mxu0 %v1010
        %1076 = vmatprep.subr.mxu0 %v1013
        %1077 = vmatpush1.msra.mxu0 %v1012
        %1078 = vmatprep.subr.mxu0 %v1015
        %1079 = vmatpush1.msra.mxu0 %v1014
        %1080 = vmatprep.subr.mxu0 %v1017
        %1081 = vmatpush1.msra.mxu0 %v1016
        %1082 = vmatprep.subr.mxu0 %v1019
        %1083 = vmatpush1.msra.mxu0 %v1018
        %1084 = vmatprep.subr.mxu0 %v1021
        %1085 = vmatpush1.msra.mxu0 %v1020
        %1086 = vmatprep.mubr.f32.mxu0 %v228
        %1087 = vmatmul.mubr.f32.gmra.mrb[0].mxu0 %v227
        %v1088 = vpop.f32.mrb[0].mxu0
        %v1089 = vadd.f32 0.0, %v1088
        %v1090 = vpop.f32.mrb[0].mxu0
        %v1091 = vadd.f32 0.0, %v1090
        %1092 = vmatprep.mubr.f32.mxu0 %v230
        %1093 = vmatmul.mubr.f32.gmra.mrb[0].mxu0 %v229
        %v1094 = vpop.f32.mrb[0].mxu0
        %v1095 = vadd.f32 0.0, %v1094
        %v1096 = vpop.f32.mrb[0].mxu0
        %v1097 = vadd.f32 0.0, %v1096
        %1098 = vmatprep.mubr.f32.mxu0 %v232
        %1099 = vmatmul.mubr.f32.gmra.mrb[0].mxu0 %v231
        %v1100 = vpop.f32.mrb[0].mxu0
        %v1101 = vadd.f32 0.0, %v1100
        %v1102 = vpop.f32.mrb[0].mxu0
        %v1103 = vadd.f32 0.0, %v1102
        %1104 = vmatprep.mubr.f32.mxu0 %v234
        %1105 = vmatmul.mubr.f32.gmra.mrb[0].mxu0 %v233
        %v1106 = vpop.f32.mrb[0].mxu0
        %v1107 = vadd.f32 0.0, %v1106
        %v1108 = vpop.f32.mrb[0].mxu0
        %v1109 = vadd.f32 0.0, %v1108
        %1110 = vdwg.mxu0
        %v1111 = vld [vmem:[%s224] sm:$0xf]
        %1112 = vst [vmem:[#allocation2] sm:$0xf] %v1111
        %v1113 = vld [vmem:[%s275] sm:$0xf]
        %1114 = vst [vmem:[#allocation2 + $0x8] sm:$0xf] %v1113
        %v1115 = vld [vmem:[%s217] sm:$0xff]
        %v1117 = vcombine.low %v1115, %v1115
        %1118 = vrot.lane.b32.xlu0 %v1117, 127
        %v1119 = vpop.permute.xlu0 %1118
        %1120 = vrot.lane.b32.xlu0 %v1115, 127
        %v1121 = vpop.permute.xlu0 %1120
        %v1122 = vsel %vm288, %v1119, %v1121
        %1124 = vst [vmem:[#allocation2] sm:$0xf0] %v1122
        %v1125 = vld [vmem:[%s267] sm:$0xff]
        %v1127 = vcombine.low %v1125, %v1125
        %1128 = vrot.lane.b32.xlu0 %v1127, 127
        %v1129 = vpop.permute.xlu0 %1128
        %1130 = vrot.lane.b32.xlu0 %v1125, 127
        %v1131 = vpop.permute.xlu0 %1130
        %v1132 = vsel %vm288, %v1129, %v1131
        %1134 = vst [vmem:[#allocation2 + $0x8] sm:$0xf0] %v1132
        %v1135 = vld [vmem:[%s224] sm:$0xff]
        %v1137 = vcombine.high %v1135, %v1135
        %1138 = vrot.lane.b32.xlu0 %v1135, 127
        %v1139 = vpop.permute.xlu0 %1138
        %1140 = vrot.lane.b32.xlu0 %v1137, 127
        %v1141 = vpop.permute.xlu0 %1140
        %v1142 = vsel %vm288, %v1139, %v1141
        %1144 = vst [vmem:[#allocation2 + $0x10] sm:$0xf] %v1142
        %v1145 = vld [vmem:[%s275] sm:$0xff]
        %v1147 = vcombine.high %v1145, %v1145
        %1148 = vrot.lane.b32.xlu0 %v1145, 127
        %v1149 = vpop.permute.xlu0 %1148
        %1150 = vrot.lane.b32.xlu0 %v1147, 127
        %v1151 = vpop.permute.xlu0 %1150
        %v1152 = vsel %vm288, %v1149, %v1151
        %1154 = vst [vmem:[#allocation2 + $0x18] sm:$0xf] %v1152
        %v1155 = vld [vmem:[%s217] sm:$0xff]
        %v1157 = vcombine.low %v1155, %v1155
        %1158 = vrot.lane.b32.xlu0 %v1157, 126
        %v1159 = vpop.permute.xlu0 %1158
        %1160 = vrot.lane.b32.xlu0 %v1155, 126
        %v1161 = vpop.permute.xlu0 %1160
        %v1162 = vsel %vm329, %v1159, %v1161
        %1164 = vst [vmem:[#allocation2 + $0x10] sm:$0xf0] %v1162
        %v1165 = vld [vmem:[%s267] sm:$0xff]
        %v1167 = vcombine.low %v1165, %v1165
        %1168 = vrot.lane.b32.xlu0 %v1167, 126
        %v1169 = vpop.permute.xlu0 %1168
        %1170 = vrot.lane.b32.xlu0 %v1165, 126
        %v1171 = vpop.permute.xlu0 %1170
        %v1172 = vsel %vm329, %v1169, %v1171
        %1174 = vst [vmem:[#allocation2 + $0x18] sm:$0xf0] %v1172
        %v1175 = vld [vmem:[%s224] sm:$0xff]
        %v1177 = vcombine.high %v1175, %v1175
        %1178 = vrot.lane.b32.xlu0 %v1175, 126
        %v1179 = vpop.permute.xlu0 %1178
        %1180 = vrot.lane.b32.xlu0 %v1177, 126
        %v1181 = vpop.permute.xlu0 %1180
        %v1182 = vsel %vm329, %v1179, %v1181
        %1184 = vst [vmem:[#allocation2 + $0x20] sm:$0xf] %v1182
        %v1185 = vld [vmem:[%s275] sm:$0xff]
        %v1187 = vcombine.high %v1185, %v1185
        %1188 = vrot.lane.b32.xlu0 %v1185, 126
        %v1189 = vpop.permute.xlu0 %1188
        %1190 = vrot.lane.b32.xlu0 %v1187, 126
        %v1191 = vpop.permute.xlu0 %1190
        %v1192 = vsel %vm329, %v1189, %v1191
        %1194 = vst [vmem:[#allocation2 + $0x28] sm:$0xf] %v1192
        %v1195 = vld [vmem:[%s217] sm:$0xff]
        %v1197 = vcombine.low %v1195, %v1195
        %1198 = vrot.lane.b32.xlu0 %v1197, 125
        %v1199 = vpop.permute.xlu0 %1198
        %1200 = vrot.lane.b32.xlu0 %v1195, 125
        %v1201 = vpop.permute.xlu0 %1200
        %v1202 = vsel %vm370, %v1199, %v1201
        %1204 = vst [vmem:[#allocation2 + $0x20] sm:$0xf0] %v1202
        %v1205 = vld [vmem:[%s267] sm:$0xff]
        %v1207 = vcombine.low %v1205, %v1205
        %1208 = vrot.lane.b32.xlu0 %v1207, 125
        %v1209 = vpop.permute.xlu0 %1208
        %1210 = vrot.lane.b32.xlu0 %v1205, 125
        %v1211 = vpop.permute.xlu0 %1210
        %v1212 = vsel %vm370, %v1209, %v1211
        %1214 = vst [vmem:[#allocation2 + $0x28] sm:$0xf0] %v1212
        %v1215 = vld [vmem:[%s224] sm:$0xff]
        %v1217 = vcombine.high %v1215, %v1215
        %1218 = vrot.lane.b32.xlu0 %v1215, 125
        %v1219 = vpop.permute.xlu0 %1218
        %1220 = vrot.lane.b32.xlu0 %v1217, 125
        %v1221 = vpop.permute.xlu0 %1220
        %v1222 = vsel %vm370, %v1219, %v1221
        %1224 = vst [vmem:[#allocation2 + $0x30] sm:$0xf] %v1222
        %v1225 = vld [vmem:[%s275] sm:$0xff]
        %v1227 = vcombine.high %v1225, %v1225
        %1228 = vrot.lane.b32.xlu0 %v1225, 125
        %v1229 = vpop.permute.xlu0 %1228
        %1230 = vrot.lane.b32.xlu0 %v1227, 125
        %v1231 = vpop.permute.xlu0 %1230
        %v1232 = vsel %vm370, %v1229, %v1231
        %1234 = vst [vmem:[#allocation2 + $0x38] sm:$0xf] %v1232
        %v1235 = vld [vmem:[%s217] sm:$0xff]
        %v1237 = vcombine.low %v1235, %v1235
        %1238 = vrot.lane.b32.xlu0 %v1237, 124
        %v1239 = vpop.permute.xlu0 %1238
        %1240 = vrot.lane.b32.xlu0 %v1235, 124
        %v1241 = vpop.permute.xlu0 %1240
        %v1242 = vsel %vm411, %v1239, %v1241
        %1244 = vst [vmem:[#allocation2 + $0x30] sm:$0xf0] %v1242
        %v1245 = vld [vmem:[%s267] sm:$0xff]
        %v1247 = vcombine.low %v1245, %v1245
        %1248 = vrot.lane.b32.xlu0 %v1247, 124
        %v1249 = vpop.permute.xlu0 %1248
        %1250 = vrot.lane.b32.xlu0 %v1245, 124
        %v1251 = vpop.permute.xlu0 %1250
        %v1252 = vsel %vm411, %v1249, %v1251
        %1254 = vst [vmem:[#allocation2 + $0x38] sm:$0xf0] %v1252
        %v1255 = vld [vmem:[%s224] sm:$0xff]
        %v1257 = vcombine.high %v1255, %v1255
        %1258 = vrot.lane.b32.xlu0 %v1255, 124
        %v1259 = vpop.permute.xlu0 %1258
        %1260 = vrot.lane.b32.xlu0 %v1257, 124
        %v1261 = vpop.permute.xlu0 %1260
        %v1262 = vsel %vm411, %v1259, %v1261
        %1264 = vst [vmem:[#allocation2 + $0x40] sm:$0xf] %v1262
        %v1265 = vld [vmem:[%s275] sm:$0xff]
        %v1267 = vcombine.high %v1265, %v1265
        %1268 = vrot.lane.b32.xlu0 %v1265, 124
        %v1269 = vpop.permute.xlu0 %1268
        %1270 = vrot.lane.b32.xlu0 %v1267, 124
        %v1271 = vpop.permute.xlu0 %1270
        %v1272 = vsel %vm411, %v1269, %v1271
        %1274 = vst [vmem:[#allocation2 + $0x48] sm:$0xf] %v1272
        %v1275 = vld [vmem:[%s217] sm:$0xff]
        %v1277 = vcombine.low %v1275, %v1275
        %1278 = vrot.lane.b32.xlu0 %v1277, 123
        %v1279 = vpop.permute.xlu0 %1278
        %1280 = vrot.lane.b32.xlu0 %v1275, 123
        %v1281 = vpop.permute.xlu0 %1280
        %v1282 = vsel %vm452, %v1279, %v1281
        %1284 = vst [vmem:[#allocation2 + $0x40] sm:$0xf0] %v1282
        %v1285 = vld [vmem:[%s267] sm:$0xff]
        %v1287 = vcombine.low %v1285, %v1285
        %1288 = vrot.lane.b32.xlu0 %v1287, 123
        %v1289 = vpop.permute.xlu0 %1288
        %1290 = vrot.lane.b32.xlu0 %v1285, 123
        %v1291 = vpop.permute.xlu0 %1290
        %v1292 = vsel %vm452, %v1289, %v1291
        %1294 = vst [vmem:[#allocation2 + $0x48] sm:$0xf0] %v1292
        %v1295 = vld [vmem:[%s224] sm:$0xff]
        %v1297 = vcombine.high %v1295, %v1295
        %1298 = vrot.lane.b32.xlu0 %v1295, 123
        %v1299 = vpop.permute.xlu0 %1298
        %1300 = vrot.lane.b32.xlu0 %v1297, 123
        %v1301 = vpop.permute.xlu0 %1300
        %v1302 = vsel %vm452, %v1299, %v1301
        %1304 = vst [vmem:[#allocation2 + $0x50] sm:$0xf] %v1302
        %v1305 = vld [vmem:[%s275] sm:$0xff]
        %v1307 = vcombine.high %v1305, %v1305
        %1308 = vrot.lane.b32.xlu0 %v1305, 123
        %v1309 = vpop.permute.xlu0 %1308
        %1310 = vrot.lane.b32.xlu0 %v1307, 123
        %v1311 = vpop.permute.xlu0 %1310
        %v1312 = vsel %vm452, %v1309, %v1311
        %1314 = vst [vmem:[#allocation2 + $0x58] sm:$0xf] %v1312
        %v1315 = vld [vmem:[%s217] sm:$0xff]
        %v1317 = vcombine.low %v1315, %v1315
        %1318 = vrot.lane.b32.xlu0 %v1317, 122
        %v1319 = vpop.permute.xlu0 %1318
        %1320 = vrot.lane.b32.xlu0 %v1315, 122
        %v1321 = vpop.permute.xlu0 %1320
        %v1322 = vsel %vm493, %v1319, %v1321
        %1324 = vst [vmem:[#allocation2 + $0x50] sm:$0xf0] %v1322
        %v1325 = vld [vmem:[%s267] sm:$0xff]
        %v1327 = vcombine.low %v1325, %v1325
        %1328 = vrot.lane.b32.xlu0 %v1327, 122
        %v1329 = vpop.permute.xlu0 %1328
        %1330 = vrot.lane.b32.xlu0 %v1325, 122
        %v1331 = vpop.permute.xlu0 %1330
        %v1332 = vsel %vm493, %v1329, %v1331
        %1334 = vst [vmem:[#allocation2 + $0x58] sm:$0xf0] %v1332
        %v1335 = vld [vmem:[%s224] sm:$0xff]
        %v1337 = vcombine.high %v1335, %v1335
        %1338 = vrot.lane.b32.xlu0 %v1335, 122
        %v1339 = vpop.permute.xlu0 %1338
        %1340 = vrot.lane.b32.xlu0 %v1337, 122
        %v1341 = vpop.permute.xlu0 %1340
        %v1342 = vsel %vm493, %v1339, %v1341
        %1344 = vst [vmem:[#allocation2 + $0x60] sm:$0xf] %v1342
        %v1345 = vld [vmem:[%s275] sm:$0xff]
        %v1347 = vcombine.high %v1345, %v1345
        %1348 = vrot.lane.b32.xlu0 %v1345, 122
        %v1349 = vpop.permute.xlu0 %1348
        %1350 = vrot.lane.b32.xlu0 %v1347, 122
        %v1351 = vpop.permute.xlu0 %1350
        %v1352 = vsel %vm493, %v1349, %v1351
        %1354 = vst [vmem:[#allocation2 + $0x68] sm:$0xf] %v1352
        %v1355 = vld [vmem:[%s217] sm:$0xff]
        %v1357 = vcombine.low %v1355, %v1355
        %1358 = vrot.lane.b32.xlu0 %v1357, 121
        %v1359 = vpop.permute.xlu0 %1358
        %1360 = vrot.lane.b32.xlu0 %v1355, 121
        %v1361 = vpop.permute.xlu0 %1360
        %v1362 = vsel %vm534, %v1359, %v1361
        %1364 = vst [vmem:[#allocation2 + $0x60] sm:$0xf0] %v1362
        %v1365 = vld [vmem:[%s267] sm:$0xff]
        %v1367 = vcombine.low %v1365, %v1365
        %1368 = vrot.lane.b32.xlu0 %v1367, 121
        %v1369 = vpop.permute.xlu0 %1368
        %1370 = vrot.lane.b32.xlu0 %v1365, 121
        %v1371 = vpop.permute.xlu0 %1370
        %v1372 = vsel %vm534, %v1369, %v1371
        %1374 = vst [vmem:[#allocation2 + $0x68] sm:$0xf0] %v1372
        %v1375 = vld [vmem:[%s224] sm:$0xff]
        %v1377 = vcombine.high %v1375, %v1375
        %1378 = vrot.lane.b32.xlu0 %v1375, 121
        %v1379 = vpop.permute.xlu0 %1378
        %1380 = vrot.lane.b32.xlu0 %v1377, 121
        %v1381 = vpop.permute.xlu0 %1380
        %v1382 = vsel %vm534, %v1379, %v1381
        %1384 = vst [vmem:[#allocation2 + $0x70] sm:$0xf] %v1382
        %v1385 = vld [vmem:[%s275] sm:$0xff]
        %v1387 = vcombine.high %v1385, %v1385
        %1388 = vrot.lane.b32.xlu0 %v1385, 121
        %v1389 = vpop.permute.xlu0 %1388
        %1390 = vrot.lane.b32.xlu0 %v1387, 121
        %v1391 = vpop.permute.xlu0 %1390
        %v1392 = vsel %vm534, %v1389, %v1391
        %1394 = vst [vmem:[#allocation2 + $0x78] sm:$0xf] %v1392
        %v1395 = vld [vmem:[%s217] sm:$0xff]
        %v1397 = vcombine.low %v1395, %v1395
        %1398 = vrot.lane.b32.xlu0 %v1397, 120
        %v1399 = vpop.permute.xlu0 %1398
        %1400 = vrot.lane.b32.xlu0 %v1395, 120
        %v1401 = vpop.permute.xlu0 %1400
        %v1402 = vsel %vm575, %v1399, %v1401
        %1404 = vst [vmem:[#allocation2 + $0x70] sm:$0xf0] %v1402
        %v1405 = vld [vmem:[%s267] sm:$0xff]
        %v1407 = vcombine.low %v1405, %v1405
        %1408 = vrot.lane.b32.xlu0 %v1407, 120
        %v1409 = vpop.permute.xlu0 %1408
        %1410 = vrot.lane.b32.xlu0 %v1405, 120
        %v1411 = vpop.permute.xlu0 %1410
        %v1412 = vsel %vm575, %v1409, %v1411
        %1414 = vst [vmem:[#allocation2 + $0x78] sm:$0xf0] %v1412
        %v1415 = vld [vmem:[%s224] sm:$0xff]
        %v1417 = vcombine.high %v1415, %v1415
        %1418 = vrot.lane.b32.xlu0 %v1415, 120
        %v1419 = vpop.permute.xlu0 %1418
        %1420 = vrot.lane.b32.xlu0 %v1417, 120
        %v1421 = vpop.permute.xlu0 %1420
        %v1422 = vsel %vm575, %v1419, %v1421
        %1424 = vst [vmem:[#allocation2 + $0x80] sm:$0xf] %v1422
        %v1425 = vld [vmem:[%s275] sm:$0xff]
        %v1427 = vcombine.high %v1425, %v1425
        %1428 = vrot.lane.b32.xlu0 %v1425, 120
        %v1429 = vpop.permute.xlu0 %1428
        %1430 = vrot.lane.b32.xlu0 %v1427, 120
        %v1431 = vpop.permute.xlu0 %1430
        %v1432 = vsel %vm575, %v1429, %v1431
        %1434 = vst [vmem:[#allocation2 + $0x88] sm:$0xf] %v1432
        %v1435 = vld [vmem:[%s217] sm:$0xff]
        %v1437 = vcombine.low %v1435, %v1435
        %1438 = vrot.lane.b32.xlu0 %v1437, 119
        %v1439 = vpop.permute.xlu0 %1438
        %1440 = vrot.lane.b32.xlu0 %v1435, 119
        %v1441 = vpop.permute.xlu0 %1440
        %v1442 = vsel %vm616, %v1439, %v1441
        %1444 = vst [vmem:[#allocation2 + $0x80] sm:$0xf0] %v1442
        %v1445 = vld [vmem:[%s267] sm:$0xff]
        %v1447 = vcombine.low %v1445, %v1445
        %1448 = vrot.lane.b32.xlu0 %v1447, 119
        %v1449 = vpop.permute.xlu0 %1448
        %1450 = vrot.lane.b32.xlu0 %v1445, 119
        %v1451 = vpop.permute.xlu0 %1450
        %v1452 = vsel %vm616, %v1449, %v1451
        %1454 = vst [vmem:[#allocation2 + $0x88] sm:$0xf0] %v1452
        %v1455 = vld [vmem:[%s224] sm:$0xff]
        %v1457 = vcombine.high %v1455, %v1455
        %1458 = vrot.lane.b32.xlu0 %v1455, 119
        %v1459 = vpop.permute.xlu0 %1458
        %1460 = vrot.lane.b32.xlu0 %v1457, 119
        %v1461 = vpop.permute.xlu0 %1460
        %v1462 = vsel %vm616, %v1459, %v1461
        %1464 = vst [vmem:[#allocation2 + $0x90] sm:$0xf] %v1462
        %v1465 = vld [vmem:[%s275] sm:$0xff]
        %v1467 = vcombine.high %v1465, %v1465
        %1468 = vrot.lane.b32.xlu0 %v1465, 119
        %v1469 = vpop.permute.xlu0 %1468
        %1470 = vrot.lane.b32.xlu0 %v1467, 119
        %v1471 = vpop.permute.xlu0 %1470
        %v1472 = vsel %vm616, %v1469, %v1471
        %1474 = vst [vmem:[#allocation2 + $0x98] sm:$0xf] %v1472
        %v1475 = vld [vmem:[%s217] sm:$0xff]
        %v1477 = vcombine.low %v1475, %v1475
        %1478 = vrot.lane.b32.xlu0 %v1477, 118
        %v1479 = vpop.permute.xlu0 %1478
        %1480 = vrot.lane.b32.xlu0 %v1475, 118
        %v1481 = vpop.permute.xlu0 %1480
        %v1482 = vsel %vm657, %v1479, %v1481
        %1484 = vst [vmem:[#allocation2 + $0x90] sm:$0xf0] %v1482
        %v1485 = vld [vmem:[%s267] sm:$0xff]
        %v1487 = vcombine.low %v1485, %v1485
        %1488 = vrot.lane.b32.xlu0 %v1487, 118
        %v1489 = vpop.permute.xlu0 %1488
        %1490 = vrot.lane.b32.xlu0 %v1485, 118
        %v1491 = vpop.permute.xlu0 %1490
        %v1492 = vsel %vm657, %v1489, %v1491
        %1494 = vst [vmem:[#allocation2 + $0x98] sm:$0xf0] %v1492
        %v1495 = vld [vmem:[%s224] sm:$0xff]
        %v1497 = vcombine.high %v1495, %v1495
        %1498 = vrot.lane.b32.xlu0 %v1495, 118
        %v1499 = vpop.permute.xlu0 %1498
        %1500 = vrot.lane.b32.xlu0 %v1497, 118
        %v1501 = vpop.permute.xlu0 %1500
        %v1502 = vsel %vm657, %v1499, %v1501
        %1504 = vst [vmem:[#allocation2 + $0xa0] sm:$0xf] %v1502
        %v1505 = vld [vmem:[%s275] sm:$0xff]
        %v1507 = vcombine.high %v1505, %v1505
        %1508 = vrot.lane.b32.xlu0 %v1505, 118
        %v1509 = vpop.permute.xlu0 %1508
        %1510 = vrot.lane.b32.xlu0 %v1507, 118
        %v1511 = vpop.permute.xlu0 %1510
        %v1512 = vsel %vm657, %v1509, %v1511
        %1514 = vst [vmem:[#allocation2 + $0xa8] sm:$0xf] %v1512
        %v1515 = vld [vmem:[%s217] sm:$0xff]
        %v1517 = vcombine.low %v1515, %v1515
        %1518 = vrot.lane.b32.xlu0 %v1517, 117
        %v1519 = vpop.permute.xlu0 %1518
        %1520 = vrot.lane.b32.xlu0 %v1515, 117
        %v1521 = vpop.permute.xlu0 %1520
        %v1522 = vsel %vm698, %v1519, %v1521
        %1524 = vst [vmem:[#allocation2 + $0xa0] sm:$0xf0] %v1522
        %v1525 = vld [vmem:[%s267] sm:$0xff]
        %v1527 = vcombine.low %v1525, %v1525
        %1528 = vrot.lane.b32.xlu0 %v1527, 117
        %v1529 = vpop.permute.xlu0 %1528
        %1530 = vrot.lane.b32.xlu0 %v1525, 117
        %v1531 = vpop.permute.xlu0 %1530
        %v1532 = vsel %vm698, %v1529, %v1531
        %1534 = vst [vmem:[#allocation2 + $0xa8] sm:$0xf0] %v1532
        %v1535 = vld [vmem:[%s224] sm:$0xff]
        %v1537 = vcombine.high %v1535, %v1535
        %1538 = vrot.lane.b32.xlu0 %v1535, 117
        %v1539 = vpop.permute.xlu0 %1538
        %1540 = vrot.lane.b32.xlu0 %v1537, 117
        %v1541 = vpop.permute.xlu0 %1540
        %v1542 = vsel %vm698, %v1539, %v1541
        %1544 = vst [vmem:[#allocation2 + $0xb0] sm:$0xf] %v1542
        %v1545 = vld [vmem:[%s275] sm:$0xff]
        %v1547 = vcombine.high %v1545, %v1545
        %1548 = vrot.lane.b32.xlu0 %v1545, 117
        %v1549 = vpop.permute.xlu0 %1548
        %1550 = vrot.lane.b32.xlu0 %v1547, 117
        %v1551 = vpop.permute.xlu0 %1550
        %v1552 = vsel %vm698, %v1549, %v1551
        %1554 = vst [vmem:[#allocation2 + $0xb8] sm:$0xf] %v1552
        %v1555 = vld [vmem:[%s217] sm:$0xff]
        %v1557 = vcombine.low %v1555, %v1555
        %1558 = vrot.lane.b32.xlu0 %v1557, 116
        %v1559 = vpop.permute.xlu0 %1558
        %1560 = vrot.lane.b32.xlu0 %v1555, 116
        %v1561 = vpop.permute.xlu0 %1560
        %v1562 = vsel %vm739, %v1559, %v1561
        %1564 = vst [vmem:[#allocation2 + $0xb0] sm:$0xf0] %v1562
        %v1565 = vld [vmem:[%s267] sm:$0xff]
        %v1567 = vcombine.low %v1565, %v1565
        %1568 = vrot.lane.b32.xlu0 %v1567, 116
        %v1569 = vpop.permute.xlu0 %1568
        %1570 = vrot.lane.b32.xlu0 %v1565, 116
        %v1571 = vpop.permute.xlu0 %1570
        %v1572 = vsel %vm739, %v1569, %v1571
        %1574 = vst [vmem:[#allocation2 + $0xb8] sm:$0xf0] %v1572
        %v1575 = vld [vmem:[%s224] sm:$0xff]
        %v1577 = vcombine.high %v1575, %v1575
        %1578 = vrot.lane.b32.xlu0 %v1575, 116
        %v1579 = vpop.permute.xlu0 %1578
        %1580 = vrot.lane.b32.xlu0 %v1577, 116
        %v1581 = vpop.permute.xlu0 %1580
        %v1582 = vsel %vm739, %v1579, %v1581
        %1584 = vst [vmem:[#allocation2 + $0xc0] sm:$0xf] %v1582
        %v1585 = vld [vmem:[%s275] sm:$0xff]
        %v1587 = vcombine.high %v1585, %v1585
        %1588 = vrot.lane.b32.xlu0 %v1585, 116
        %v1589 = vpop.permute.xlu0 %1588
        %1590 = vrot.lane.b32.xlu0 %v1587, 116
        %v1591 = vpop.permute.xlu0 %1590
        %v1592 = vsel %vm739, %v1589, %v1591
        %1594 = vst [vmem:[#allocation2 + $0xc8] sm:$0xf] %v1592
        %v1595 = vld [vmem:[%s217] sm:$0xff]
        %v1597 = vcombine.low %v1595, %v1595
        %1598 = vrot.lane.b32.xlu0 %v1597, 115
        %v1599 = vpop.permute.xlu0 %1598
        %1600 = vrot.lane.b32.xlu0 %v1595, 115
        %v1601 = vpop.permute.xlu0 %1600
        %v1602 = vsel %vm780, %v1599, %v1601
        %1604 = vst [vmem:[#allocation2 + $0xc0] sm:$0xf0] %v1602
        %v1605 = vld [vmem:[%s267] sm:$0xff]
        %v1607 = vcombine.low %v1605, %v1605
        %1608 = vrot.lane.b32.xlu0 %v1607, 115
        %v1609 = vpop.permute.xlu0 %1608
        %1610 = vrot.lane.b32.xlu0 %v1605, 115
        %v1611 = vpop.permute.xlu0 %1610
        %v1612 = vsel %vm780, %v1609, %v1611
        %1614 = vst [vmem:[#allocation2 + $0xc8] sm:$0xf0] %v1612
        %v1615 = vld [vmem:[%s224] sm:$0xff]
        %v1617 = vcombine.high %v1615, %v1615
        %1618 = vrot.lane.b32.xlu0 %v1615, 115
        %v1619 = vpop.permute.xlu0 %1618
        %1620 = vrot.lane.b32.xlu0 %v1617, 115
        %v1621 = vpop.permute.xlu0 %1620
        %v1622 = vsel %vm780, %v1619, %v1621
        %1624 = vst [vmem:[#allocation2 + $0xd0] sm:$0xf] %v1622
        %v1625 = vld [vmem:[%s275] sm:$0xff]
        %v1627 = vcombine.high %v1625, %v1625
        %1628 = vrot.lane.b32.xlu0 %v1625, 115
        %v1629 = vpop.permute.xlu0 %1628
        %1630 = vrot.lane.b32.xlu0 %v1627, 115
        %v1631 = vpop.permute.xlu0 %1630
        %v1632 = vsel %vm780, %v1629, %v1631
        %1634 = vst [vmem:[#allocation2 + $0xd8] sm:$0xf] %v1632
        %v1635 = vld [vmem:[%s217] sm:$0xff]
        %v1637 = vcombine.low %v1635, %v1635
        %1638 = vrot.lane.b32.xlu0 %v1637, 114
        %v1639 = vpop.permute.xlu0 %1638
        %1640 = vrot.lane.b32.xlu0 %v1635, 114
        %v1641 = vpop.permute.xlu0 %1640
        %v1642 = vsel %vm821, %v1639, %v1641
        %1644 = vst [vmem:[#allocation2 + $0xd0] sm:$0xf0] %v1642
        %v1645 = vld [vmem:[%s267] sm:$0xff]
        %v1647 = vcombine.low %v1645, %v1645
        %1648 = vrot.lane.b32.xlu0 %v1647, 114
        %v1649 = vpop.permute.xlu0 %1648
        %1650 = vrot.lane.b32.xlu0 %v1645, 114
        %v1651 = vpop.permute.xlu0 %1650
        %v1652 = vsel %vm821, %v1649, %v1651
        %1654 = vst [vmem:[#allocation2 + $0xd8] sm:$0xf0] %v1652
        %v1655 = vld [vmem:[%s224] sm:$0xff]
        %v1657 = vcombine.high %v1655, %v1655
        %1658 = vrot.lane.b32.xlu0 %v1655, 114
        %v1659 = vpop.permute.xlu0 %1658
        %1660 = vrot.lane.b32.xlu0 %v1657, 114
        %v1661 = vpop.permute.xlu0 %1660
        %v1662 = vsel %vm821, %v1659, %v1661
        %1664 = vst [vmem:[#allocation2 + $0xe0] sm:$0xf] %v1662
        %v1665 = vld [vmem:[%s275] sm:$0xff]
        %v1667 = vcombine.high %v1665, %v1665
        %1668 = vrot.lane.b32.xlu0 %v1665, 114
        %v1669 = vpop.permute.xlu0 %1668
        %1670 = vrot.lane.b32.xlu0 %v1667, 114
        %v1671 = vpop.permute.xlu0 %1670
        %v1672 = vsel %vm821, %v1669, %v1671
        %1674 = vst [vmem:[#allocation2 + $0xe8] sm:$0xf] %v1672
        %v1675 = vld [vmem:[%s217] sm:$0xff]
        %v1677 = vcombine.low %v1675, %v1675
        %1678 = vrot.lane.b32.xlu0 %v1677, 113
        %v1679 = vpop.permute.xlu0 %1678
        %1680 = vrot.lane.b32.xlu0 %v1675, 113
        %v1681 = vpop.permute.xlu0 %1680
        %v1682 = vsel %vm862, %v1679, %v1681
        %1684 = vst [vmem:[#allocation2 + $0xe0] sm:$0xf0] %v1682
        %v1685 = vld [vmem:[%s267] sm:$0xff]
        %v1687 = vcombine.low %v1685, %v1685
        %1688 = vrot.lane.b32.xlu0 %v1687, 113
        %v1689 = vpop.permute.xlu0 %1688
        %1690 = vrot.lane.b32.xlu0 %v1685, 113
        %v1691 = vpop.permute.xlu0 %1690
        %v1692 = vsel %vm862, %v1689, %v1691
        %1694 = vst [vmem:[#allocation2 + $0xe8] sm:$0xf0] %v1692
        %v1695 = vld [vmem:[%s224] sm:$0xff]
        %v1697 = vcombine.high %v1695, %v1695
        %1698 = vrot.lane.b32.xlu0 %v1695, 113
        %v1699 = vpop.permute.xlu0 %1698
        %1700 = vrot.lane.b32.xlu0 %v1697, 113
        %v1701 = vpop.permute.xlu0 %1700
        %v1702 = vsel %vm862, %v1699, %v1701
        %1704 = vst [vmem:[#allocation2 + $0xf0] sm:$0xf] %v1702
        %v1705 = vld [vmem:[%s275] sm:$0xff]
        %v1707 = vcombine.high %v1705, %v1705
        %1708 = vrot.lane.b32.xlu0 %v1705, 113
        %v1709 = vpop.permute.xlu0 %1708
        %1710 = vrot.lane.b32.xlu0 %v1707, 113
        %v1711 = vpop.permute.xlu0 %1710
        %v1712 = vsel %vm862, %v1709, %v1711
        %1714 = vst [vmem:[#allocation2 + $0xf8] sm:$0xf] %v1712
        %v1715 = vld [vmem:[%s217] sm:$0xff]
        %v1717 = vcombine.low %v1715, %v1715
        %1718 = vrot.lane.b32.xlu0 %v1717, 112
        %v1719 = vpop.permute.xlu0 %1718
        %1720 = vrot.lane.b32.xlu0 %v1715, 112
        %v1721 = vpop.permute.xlu0 %1720
        %v1722 = vsel %vm903, %v1719, %v1721
        %1724 = vst [vmem:[#allocation2 + $0xf0] sm:$0xf0] %v1722
        %v1725 = vld [vmem:[%s267] sm:$0xff]
        %v1727 = vcombine.low %v1725, %v1725
        %1728 = vrot.lane.b32.xlu0 %v1727, 112
        %v1729 = vpop.permute.xlu0 %1728
        %1730 = vrot.lane.b32.xlu0 %v1725, 112
        %v1731 = vpop.permute.xlu0 %1730
        %v1732 = vsel %vm903, %v1729, %v1731
        %1734 = vst [vmem:[#allocation2 + $0xf8] sm:$0xf0] %v1732
        %v1735 = vld [vmem:[%s224] sm:$0xff]
        %v1737 = vcombine.high %v1735, %v1735
        %1738 = vrot.lane.b32.xlu0 %v1735, 112
        %v1739 = vpop.permute.xlu0 %1738
        %1740 = vrot.lane.b32.xlu0 %v1737, 112
        %v1741 = vpop.permute.xlu0 %1740
        %v1742 = vsel %vm903, %v1739, %v1741
        %1744 = vst [vmem:[#allocation2 + $0x100] sm:$0xf] %v1742
        %v1745 = vld [vmem:[%s275] sm:$0xff]
        %v1747 = vcombine.high %v1745, %v1745
        %1748 = vrot.lane.b32.xlu0 %v1745, 112
        %v1749 = vpop.permute.xlu0 %1748
        %1750 = vrot.lane.b32.xlu0 %v1747, 112
        %v1751 = vpop.permute.xlu0 %1750
        %v1752 = vsel %vm903, %v1749, %v1751
        %1754 = vst [vmem:[#allocation2 + $0x108] sm:$0xf] %v1752
        %v1755 = vld [vmem:[%s217] sm:$0xff]
        %v1757 = vcombine.low %v1755, %v1755
        %1758 = vrot.lane.b32.xlu0 %v1757, 111
        %v1759 = vpop.permute.xlu0 %1758
        %1760 = vrot.lane.b32.xlu0 %v1755, 111
        %v1761 = vpop.permute.xlu0 %1760
        %v1762 = vsel %vm944, %v1759, %v1761
        %1764 = vst [vmem:[#allocation2 + $0x100] sm:$0xf0] %v1762
        %v1765 = vld [vmem:[%s267] sm:$0xff]
        %v1767 = vcombine.low %v1765, %v1765
        %1768 = vrot.lane.b32.xlu0 %v1767, 111
        %v1769 = vpop.permute.xlu0 %1768
        %1770 = vrot.lane.b32.xlu0 %v1765, 111
        %v1771 = vpop.permute.xlu0 %1770
        %v1772 = vsel %vm944, %v1769, %v1771
        %1774 = vst [vmem:[#allocation2 + $0x108] sm:$0xf0] %v1772
        %v1775 = vld [vmem:[%s224] sm:$0xff]
        %v1777 = vcombine.high %v1775, %v1775
        %1778 = vrot.lane.b32.xlu0 %v1775, 111
        %v1779 = vpop.permute.xlu0 %1778
        %1780 = vrot.lane.b32.xlu0 %v1777, 111
        %v1781 = vpop.permute.xlu0 %1780
        %v1782 = vsel %vm944, %v1779, %v1781
        %1784 = vst [vmem:[#allocation2 + $0x110] sm:$0xf] %v1782
        %v1785 = vld [vmem:[%s275] sm:$0xff]
        %v1787 = vcombine.high %v1785, %v1785
        %1788 = vrot.lane.b32.xlu0 %v1785, 111
        %v1789 = vpop.permute.xlu0 %1788
        %1790 = vrot.lane.b32.xlu0 %v1787, 111
        %v1791 = vpop.permute.xlu0 %1790
        %v1792 = vsel %vm944, %v1789, %v1791
        %1794 = vst [vmem:[#allocation2 + $0x118] sm:$0xf] %v1792
        %v1795 = vld [vmem:[#allocation2] sm:$0xff]
        %v1796 = vld [vmem:[#allocation2 + $0x8] sm:$0xff]
        %v1797 = vld [vmem:[#allocation2 + $0x10] sm:$0xff]
        %v1798 = vld [vmem:[#allocation2 + $0x18] sm:$0xff]
        %v1799 = vld [vmem:[#allocation2 + $0x20] sm:$0xff]
        %v1800 = vld [vmem:[#allocation2 + $0x28] sm:$0xff]
        %v1801 = vld [vmem:[#allocation2 + $0x30] sm:$0xff]
        %v1802 = vld [vmem:[#allocation2 + $0x38] sm:$0xff]
        %v1803 = vld [vmem:[#allocation2 + $0x40] sm:$0xff]
        %v1804 = vld [vmem:[#allocation2 + $0x48] sm:$0xff]
        %v1805 = vld [vmem:[#allocation2 + $0x50] sm:$0xff]
        %v1806 = vld [vmem:[#allocation2 + $0x58] sm:$0xff]
        %v1807 = vld [vmem:[#allocation2 + $0x60] sm:$0xff]
        %v1808 = vld [vmem:[#allocation2 + $0x68] sm:$0xff]
        %v1809 = vld [vmem:[#allocation2 + $0x70] sm:$0xff]
        %v1810 = vld [vmem:[#allocation2 + $0x78] sm:$0xff]
        %v1811 = vld [vmem:[#allocation2 + $0x80] sm:$0xff]
        %v1812 = vld [vmem:[#allocation2 + $0x88] sm:$0xff]
        %v1813 = vld [vmem:[#allocation2 + $0x90] sm:$0xff]
        %v1814 = vld [vmem:[#allocation2 + $0x98] sm:$0xff]
        %v1815 = vld [vmem:[#allocation2 + $0xa0] sm:$0xff]
        %v1816 = vld [vmem:[#allocation2 + $0xa8] sm:$0xff]
        %v1817 = vld [vmem:[#allocation2 + $0xb0] sm:$0xff]
        %v1818 = vld [vmem:[#allocation2 + $0xb8] sm:$0xff]
        %v1819 = vld [vmem:[#allocation2 + $0xc0] sm:$0xff]
        %v1820 = vld [vmem:[#allocation2 + $0xc8] sm:$0xff]
        %v1821 = vld [vmem:[#allocation2 + $0xd0] sm:$0xff]
        %v1822 = vld [vmem:[#allocation2 + $0xd8] sm:$0xff]
        %v1823 = vld [vmem:[#allocation2 + $0xe0] sm:$0xff]
        %v1824 = vld [vmem:[#allocation2 + $0xe8] sm:$0xff]
        %v1825 = vld [vmem:[#allocation2 + $0xf0] sm:$0xff]
        %v1826 = vld [vmem:[#allocation2 + $0xf8] sm:$0xff]
        %v1827 = vld [vmem:[#allocation2 + $0x100] sm:$0xff]
        %v1828 = vld [vmem:[#allocation2 + $0x108] sm:$0xff]
        %v1829 = vld [vmem:[#allocation2 + $0x110] sm:$0xff]
        %v1830 = vld [vmem:[#allocation2 + $0x118] sm:$0xff]
        %v1831 = vld [vmem:[#allocation2 + $0x120] sm:$0xff]
        %v1832 = vld [vmem:[#allocation2 + $0x128] sm:$0xff]
        %v1833 = vld [vmem:[#allocation2 + $0x130] sm:$0xff]
        %v1834 = vld [vmem:[#allocation2 + $0x138] sm:$0xff]
        %v1835 = vld [vmem:[#allocation2 + $0x140] sm:$0xff]
        %v1836 = vld [vmem:[#allocation2 + $0x148] sm:$0xff]
        %v1837 = vld [vmem:[#allocation2 + $0x150] sm:$0xff]
        %v1838 = vld [vmem:[#allocation2 + $0x158] sm:$0xff]
        %v1839 = vld [vmem:[#allocation2 + $0x160] sm:$0xff]
        %v1840 = vld [vmem:[#allocation2 + $0x168] sm:$0xff]
        %v1841 = vld [vmem:[#allocation2 + $0x170] sm:$0xff]
        %v1842 = vld [vmem:[#allocation2 + $0x178] sm:$0xff]
        %v1843 = vld [vmem:[#allocation2 + $0x180] sm:$0xff]
        %v1844 = vld [vmem:[#allocation2 + $0x188] sm:$0xff]
        %v1845 = vld [vmem:[#allocation2 + $0x190] sm:$0xff]
        %v1846 = vld [vmem:[#allocation2 + $0x198] sm:$0xff]
        %v1847 = vld [vmem:[#allocation2 + $0x1a0] sm:$0xff]
        %v1848 = vld [vmem:[#allocation2 + $0x1a8] sm:$0xff]
        %v1849 = vld [vmem:[#allocation2 + $0x1b0] sm:$0xff]
        %v1850 = vld [vmem:[#allocation2 + $0x1b8] sm:$0xff]
        %v1851 = vld [vmem:[#allocation2 + $0x1c0] sm:$0xff]
        %v1852 = vld [vmem:[#allocation2 + $0x1c8] sm:$0xff]
        %v1853 = vld [vmem:[#allocation2 + $0x1d0] sm:$0xff]
        %v1854 = vld [vmem:[#allocation2 + $0x1d8] sm:$0xff]
        %v1855 = vld [vmem:[#allocation2 + $0x1e0] sm:$0xff]
        %v1856 = vld [vmem:[#allocation2 + $0x1e8] sm:$0xff]
        %v1857 = vld [vmem:[#allocation2 + $0x1f0] sm:$0xff]
        %v1858 = vld [vmem:[#allocation2 + $0x1f8] sm:$0xff]
        %1859 = vmatprep.subr.mxu0 %v1796
        %1860 = vmatpush1.msra.mxu0 %v1795
        %1861 = vmatprep.subr.mxu0 %v1798
        %1862 = vmatpush1.msra.mxu0 %v1797
        %1863 = vmatprep.subr.mxu0 %v1800
        %1864 = vmatpush1.msra.mxu0 %v1799
        %1865 = vmatprep.subr.mxu0 %v1802
        %1866 = vmatpush1.msra.mxu0 %v1801
        %1867 = vmatprep.subr.mxu0 %v1804
        %1868 = vmatpush1.msra.mxu0 %v1803
        %1869 = vmatprep.subr.mxu0 %v1806
        %1870 = vmatpush1.msra.mxu0 %v1805
        %1871 = vmatprep.subr.mxu0 %v1808
        %1872 = vmatpush1.msra.mxu0 %v1807
        %1873 = vmatprep.subr.mxu0 %v1810
        %1874 = vmatpush1.msra.mxu0 %v1809
        %1875 = vmatprep.subr.mxu0 %v1812
        %1876 = vmatpush1.msra.mxu0 %v1811
        %1877 = vmatprep.subr.mxu0 %v1814
        %1878 = vmatpush1.msra.mxu0 %v1813
        %1879 = vmatprep.subr.mxu0 %v1816
        %1880 = vmatpush1.msra.mxu0 %v1815
        %1881 = vmatprep.subr.mxu0 %v1818
        %1882 = vmatpush1.msra.mxu0 %v1817
        %1883 = vmatprep.subr.mxu0 %v1820
        %1884 = vmatpush1.msra.mxu0 %v1819
        %1885 = vmatprep.subr.mxu0 %v1822
        %1886 = vmatpush1.msra.mxu0 %v1821
        %1887 = vmatprep.subr.mxu0 %v1824
        %1888 = vmatpush1.msra.mxu0 %v1823
        %1889 = vmatprep.subr.mxu0 %v1826
        %1890 = vmatpush1.msra.mxu0 %v1825
        %1891 = vmatprep.subr.mxu0 %v1828
        %1892 = vmatpush1.msra.mxu0 %v1827
        %1893 = vmatprep.subr.mxu0 %v1830
        %1894 = vmatpush1.msra.mxu0 %v1829
        %1895 = vmatprep.subr.mxu0 %v1832
        %1896 = vmatpush1.msra.mxu0 %v1831
        %1897 = vmatprep.subr.mxu0 %v1834
        %1898 = vmatpush1.msra.mxu0 %v1833
        %1899 = vmatprep.subr.mxu0 %v1836
        %1900 = vmatpush1.msra.mxu0 %v1835
        %1901 = vmatprep.subr.mxu0 %v1838
        %1902 = vmatpush1.msra.mxu0 %v1837
        %1903 = vmatprep.subr.mxu0 %v1840
        %1904 = vmatpush1.msra.mxu0 %v1839
        %1905 = vmatprep.subr.mxu0 %v1842
        %1906 = vmatpush1.msra.mxu0 %v1841
        %1907 = vmatprep.subr.mxu0 %v1844
        %1908 = vmatpush1.msra.mxu0 %v1843
        %1909 = vmatprep.subr.mxu0 %v1846
        %1910 = vmatpush1.msra.mxu0 %v1845
        %1911 = vmatprep.subr.mxu0 %v1848
        %1912 = vmatpush1.msra.mxu0 %v1847
        %1913 = vmatprep.subr.mxu0 %v1850
        %1914 = vmatpush1.msra.mxu0 %v1849
        %1915 = vmatprep.subr.mxu0 %v1852
        %1916 = vmatpush1.msra.mxu0 %v1851
        %1917 = vmatprep.subr.mxu0 %v1854
        %1918 = vmatpush1.msra.mxu0 %v1853
        %1919 = vmatprep.subr.mxu0 %v1856
        %1920 = vmatpush1.msra.mxu0 %v1855
        %1921 = vmatprep.subr.mxu0 %v1858
        %1922 = vmatpush1.msra.mxu0 %v1857
        %1923 = vmatprep.mubr.f32.mxu0 %v228
        %1924 = vmatmul.mubr.f32.gmra.mrb[0].mxu0 %v227
        %v1925 = vpop.f32.mrb[0].mxu0
        %v1926 = vadd.f32 0.0, %v1925
        %v1927 = vpop.f32.mrb[0].mxu0
        %v1928 = vadd.f32 0.0, %v1927
        %1929 = vmatprep.mubr.f32.mxu0 %v230
        %1930 = vmatmul.mubr.f32.gmra.mrb[0].mxu0 %v229
        %v1931 = vpop.f32.mrb[0].mxu0
        %v1932 = vadd.f32 0.0, %v1931
        %v1933 = vpop.f32.mrb[0].mxu0
        %v1934 = vadd.f32 0.0, %v1933
        %1935 = vmatprep.mubr.f32.mxu0 %v232
        %1936 = vmatmul.mubr.f32.gmra.mrb[0].mxu0 %v231
        %v1937 = vpop.f32.mrb[0].mxu0
        %v1938 = vadd.f32 0.0, %v1937
        %v1939 = vpop.f32.mrb[0].mxu0
        %v1940 = vadd.f32 0.0, %v1939
        %1941 = vmatprep.mubr.f32.mxu0 %v234
        %1942 = vmatmul.mubr.f32.gmra.mrb[0].mxu0 %v233
        %v1943 = vpop.f32.mrb[0].mxu0
        %v1944 = vadd.f32 0.0, %v1943
        %v1945 = vpop.f32.mrb[0].mxu0
        %v1946 = vadd.f32 0.0, %v1945
        %1947 = vdwg.mxu0
        %v1948 = vmax.f32 %v1089, %v1926
        %v1949 = vmax.f32 %v1091, %v1928
        %v1950 = vmax.f32 %v1095, %v1932
        %v1951 = vmax.f32 %v1097, %v1934
        %v1952 = vmax.f32 %v1101, %v1938
        %v1953 = vmax.f32 %v1103, %v1940
        %v1954 = vmax.f32 %v1107, %v1944
        %v1955 = vmax.f32 %v1109, %v1946
        %v1956 = vld [vmem:[%s3] sm:$0xff]
        %v1957 = vld [vmem:[%s3 + $0x8] sm:$0xff]
        %v1958 = vld [vmem:[%s3 + $0x10] sm:$0xff]
        %v1959 = vld [vmem:[%s3 + $0x18] sm:$0xff]
        %1961 = vset.pattern.permute.xlu0 0
        %1962 = vperm.xlu0 %1961, %v1956
        %v1963 = vpop.permute.xlu0 %1962
        %1966 = vset.pattern.permute.xlu0 0
        %1967 = vperm.xlu0 %1966, %v1957
        %v1968 = vpop.permute.xlu0 %1967
        %1971 = vset.pattern.permute.xlu0 0
        %1972 = vperm.xlu0 %1971, %v1958
        %v1973 = vpop.permute.xlu0 %1972
        %1976 = vset.pattern.permute.xlu0 0
        %1977 = vperm.xlu0 %1976, %v1959
        %v1978 = vpop.permute.xlu0 %1977
        %v1980 = vadd.f32 %v1948, %v1963
        %v1981 = vadd.f32 %v1949, %v1963
        %v1982 = vadd.f32 %v1950, %v1968
        %v1983 = vadd.f32 %v1951, %v1968
        %v1984 = vadd.f32 %v1952, %v1973
        %v1985 = vadd.f32 %v1953, %v1973
        %v1986 = vadd.f32 %v1954, %v1978
        %v1987 = vadd.f32 %v1955, %v1978
        %v1988 = vmax.f32 %v1980, 0.0
        %v1989 = vmax.f32 %v1981, 0.0
        %v1990 = vmax.f32 %v1982, 0.0
        %v1991 = vmax.f32 %v1983, 0.0
        %v1992 = vmax.f32 %v1984, 0.0
        %v1993 = vmax.f32 %v1985, 0.0
        %v1994 = vmax.f32 %v1986, 0.0
        %v1995 = vmax.f32 %v1987, 0.0
        %1996 = vst [vmem:[%s211] sm:$0xff] %v1988
        %1997 = vst [vmem:[%s211 + $0x8] sm:$0xff] %v1990
        %1998 = vst [vmem:[%s211 + $0x10] sm:$0xff] %v1992
        %1999 = vst [vmem:[%s211 + $0x18] sm:$0xff] %v1994
        %s2000 = scalar_lea.vmem %s211, 32 [#allocation3]
        %2001 = vst [vmem:[%s2000] sm:$0xff] %v1989
        %2002 = vst [vmem:[%s2000 + $0x8] sm:$0xff] %v1991
        %2003 = vst [vmem:[%s2000 + $0x10] sm:$0xff] %v1993
        %2004 = vst [vmem:[%s2000 + $0x18] sm:$0xff] %v1995
        %s2005 = sand.u32 %s120, 1
        %s2006 = scalar_lea.sflag [#allocation4], %s2005
        %s2007 = sand.u32 %s120, 1
        %s2008 = smul.addr %s2007, 64
        %s2009 = scalar_lea.vmem [#allocation3], %s2008
        // Predicated region
        $region37: #{inception_forward.1} parent=35 // pred_check
          %p2010 = pneg %p130
        $region38: #{inception_forward.1} parent=35 // pred_check_branch
          %2012 = sbr.rel (%p2010) target = $region40
        $region39: #{inception_forward.1} parent=35 // pred_region
          %s2013 = smul.u32 2, %s18
          %s2015 = ssub.s32 1024, 1024
          %2016 = vsyncadd %s2006, %s2015
          %s2017 = smul.addr %s2013, 4
          %s2018 = smul.addr %s2017, 128
          %s2019 = scalar_lea.hbm %s4, %s2018
          %s2020 = sshll.u32 %s2009, 4
          %s2021 = int_to_ptr.vmem [resolvable:$true] %s2020
          %2026 = dma.vmem_to_hbm [thread:$0]  %s2021, 1024, %s2019, %s2006, 128, 128, 8
        $region40: #{inception_forward.1} parent=35 // pred_fallthru
          _
      $region36: #{inception_forward.1} parent=5 // pred_fallthru
        _
      %p2027 = scmp.le.s32.totalorder 2, %s13
      // Predicated region
      $region41: #{inception_forward.1} parent=5 // pred_check
        %p2028 = pneg %p2027
      $region42: #{inception_forward.1} parent=5 // pred_check_branch
        %2030 = sbr.rel (%p2028) target = $region44
      $region43: #{inception_forward.1} parent=5 // pred_region
        %s2031 = ssub.s32 %s13, 2
        // Predicated region
        $region45: #{inception_forward.1} parent=43 // pred_check
          %p2032 = pneg %p136
        $region46: #{inception_forward.1} parent=43 // pred_check_branch
          %2034 = sbr.rel (%p2032) target = $region48
        $region47: #{inception_forward.1} parent=43 // pred_region
          %s2035 = sand.u32 %s121, 1
          %s2036 = scalar_lea.sflag [#allocation4], %s2035
          %s2037 = sand.u32 %s121, 1
          %s2038 = smul.addr %s2037, 64
          %s2039 = scalar_lea.vmem [#allocation3], %s2038
          %2040 = dma.done %s2036, 1024
        $region48: #{inception_forward.1} parent=43 // pred_fallthru
          _
      $region44: #{inception_forward.1} parent=5 // pred_fallthru
        _
    $region6: #{inception_forward.1} parent=1 // loop_footer
      %s17 = sadd.s32 1, %s13
    $region7: #{inception_forward.1} parent=1 // loop_footer_branch
      %12 = sbr.rel target = $region3
    $region8: #{inception_forward.1} parent=1 // loop_exit
      _
    %2041 = vsyncpa [#allocation4], 1
    %s2042 = scalar_lea.sflag [#allocation4], 1
    %2043 = vsyncpa %s2042, 1

</llo_original>
